<compile_context>
chip_gen: v7x
topology: tpu7x:2x2x1
jax: 0.10.0
libtpu: 0.0.40
codegen_flags: <defaults>
</compile_context>

<pallas_src>
import jax
import jax.numpy as jnp
from jax import lax
from jax.experimental import pallas as pl
from jax.experimental.pallas import tpu as pltpu

# ---- small problem sizes consistent with the module (C=2, 7x7 convs, reduction=16) ----
B, C, H, W = 2, 2, 16, 16
K = 7
PAD = (K - 1) // 2                 # 3
HP = H + 2 * PAD                   # 22 padded rows
WP = W + 2 * PAD                   # 22 padded cols per batch image
ACCW = B * WP                      # 44 : batch folded into the lane dimension
LWB = ACCW + (K - 1)               # 50 : one channel's padded lane width (3-lane margins)
PBW = C * LWB                      # 100: both channels folded into lanes (one 128-lane tile)
FOLDW = PBW - (K - 1)              # 94 : channel-folded shifted-slab / weight-vector width
TOTAL = C * H * W                  # 512 ("total_size")
REDUCTION = 16
F_OUT = TOTAL // REDUCTION         # 32
EPS = 1e-5
NACC = 4                           # independent f32 accumulator chains per output channel

# deterministic stand-ins for the dataset statistics used by CSI_reshape
TRAIN_MEAN_REAL, TRAIN_STD_REAL = 0.1, 1.2
TRAIN_MEAN_IMAG, TRAIN_STD_IMAG = -0.05, 0.9


# --------------------------- fused kernel ---------------------------

def _conv_bn_lrelu(pbuf_ref, wv_ref, sc_ref, sh_ref):
    """Channel-folded 7x7 conv (stride 1, no bias) + folded eval-mode BN + LeakyReLU(0.3).

    pbuf_ref : (HP, PBW) zero-padded input; channel ci occupies lanes [ci*LWB, (ci+1)*LWB),
               batch b / padded column j sits at lane ci*LWB + PAD + b*WP + j.
    wv_ref   : (C*K*K, FOLDW) per-tap lane-broadcast weights; row co*K*K + dy*K + dx has
               lanes [0:ACCW] = w[co,0,dy,dx], lanes [LWB:LWB+ACCW] = w[co,1,dy,dx], rest 0.
    Returns  : C arrays (H, ACCW); lane L = b*WP + jj holds the conv output at padded-frame
               column jj (valid output columns are jj in [PAD, PAD+W)).
    """
    acc = [[jnp.zeros((H, FOLDW), jnp.float32) for _ in range(NACC)]
           for _ in range(C)]
    for dy in range(K):
        slab = pbuf_ref[dy:dy + H, :]                     # (H, PBW), loaded once per dy
        for dx in range(K):
            xs = slab[:, dx:dx + FOLDW]                   # (H, FOLDW): one lane shift, both channels
            t = dy * K + dx
            a = t % NACC                                  # round-robin -> 4 parallel add chains
            for co in range(C):
                wv = wv_ref[co * K * K + t: co * K * K + t + 1, :]   # (1, FOLDW)
                acc[co][a] = acc[co][a] + wv * xs         # one vector MAC covers both channels
    outs = []
    for co in range(C):
        s = (acc[co][0] + acc[co][1]) + (acc[co][2] + acc[co][3])
        y = s[:, 0:ACCW] + s[:, LWB:LWB + ACCW]           # fold the two channel halves
        y = y * sc_ref[co] + sh_ref[co]                   # folded BatchNorm (eval mode)
        outs.append(jnp.where(y >= 0.0, y, 0.3 * y))      # LeakyReLU(0.3)
    return outs


def task2_encoder_kernel(xr_ref, xi_ref, wv1_ref, wv2_ref,
                         sc1_ref, sh1_ref, sc2_ref, sh2_ref,
                         bfc_ref, wfc_hbm_ref,
                         o_ref,
                         pbuf_ref, fcin_ref, wfc_vmem_ref, wsem):
    # kick off the FC-weight HBM->VMEM copy now; it overlaps with both conv blocks
    wcopy = pltpu.make_async_copy(wfc_hbm_ref, wfc_vmem_ref, wsem)
    wcopy.start()

    # zero the single padded conv buffer (scratch is uninitialized)
    pbuf_ref[...] = jnp.zeros((HP, PBW), jnp.float32)

    # ---- CSI_reshape normalization, written straight into conv-1's padded interior windows
    for b in range(B):
        lo0 = PAD + b * WP + PAD                          # channel-0 interior lanes for batch b
        lo1 = LWB + lo0                                   # channel-1 interior lanes for batch b
        pbuf_ref[PAD:PAD + H, lo0:lo0 + W] = \
            (xr_ref[b] - TRAIN_MEAN_REAL) * (1.0 / TRAIN_STD_REAL)
        pbuf_ref[PAD:PAD + H, lo1:lo1 + W] = \
            (xi_ref[b] - TRAIN_MEAN_IMAG) * (1.0 / TRAIN_STD_IMAG)

    # ---- conv block 1
    act1 = _conv_bn_lrelu(pbuf_ref, wv1_ref, sc1_ref, sh1_ref)

    # ---- re-pad for conv block 2 by reusing pbuf: only the valid interior (16,16) windows
    # are overwritten; every other lane/row of pbuf is still zero from the initial fill
    # (the conv-1 input only ever lived in these same windows), so no mask and no second
    # buffer are needed, and conv-1's garbage halo columns are never copied.
    for c in range(C):
        for b in range(B):
            src = b * WP + PAD
            dst = c * LWB + PAD + b * WP + PAD
            pbuf_ref[PAD:PAD + H, dst:dst + W] = act1[c][:, src:src + W]

    # ---- conv block 2
    act2 = _conv_bn_lrelu(pbuf_ref, wv2_ref, sc2_ref, sh2_ref)

    # ---- flatten in PyTorch .view(B, -1) order: feature index = c*H*W + y*W + x.
    # Kept as per-row stores (see header comment) to guarantee clean lowering.
    for c in range(C):
        base = c * H * W
        for b in range(B):
            src = b * WP + PAD
            for y in range(H):
                fcin_ref[b:b + 1, base + y * W: base + (y + 1) * W] = \
                    act2[c][y:y + 1, src:src + W]

    # ---- encoder_fc on the MXU (un-padded (512,32) weight) + Sigmoid on the EUP
    wcopy.wait()
    logits = jnp.dot(fcin_ref[...], wfc_vmem_ref[...],
                     preferred_element_type=jnp.float32) + bfc_ref[...]
    o_ref[...] = pl.reciprocal(1.0 + jnp.exp(-logits), approx=True)


# --------------------------- wrapper ---------------------------

_VMEM = pl.BlockSpec(memory_space=pltpu.MemorySpace.VMEM)
_SMEM = pl.BlockSpec(memory_space=pltpu.MemorySpace.SMEM)
_ANY = pl.BlockSpec(memory_space=pl.ANY)


@jax.jit
def task2_encoder_forward(x_complex, params):
    xr = jnp.real(x_complex).astype(jnp.float32)
    xi = jnp.imag(x_complex).astype(jnp.float32)
    return pl.pallas_call(
        task2_encoder_kernel,
        out_shape=jax.ShapeDtypeStruct((B, F_OUT), jnp.float32),
        in_specs=[_VMEM, _VMEM,                 # xr, xi
                  _VMEM, _VMEM,                 # folded conv-weight vectors (98, 94) x2
                  _SMEM, _SMEM, _SMEM, _SMEM,   # folded BN scale/shift x2
                  _VMEM,                        # FC bias (1, 32)
                  _ANY],                        # FC weight (512, 32): stays in HBM, manual DMA
        out_specs=_VMEM,
        scratch_shapes=[
            pltpu.VMEM((HP, PBW), jnp.float32),       # shared padded conv input buffer
            pltpu.VMEM((B, TOTAL), jnp.float32),      # flattened FC input
            pltpu.VMEM((TOTAL, F_OUT), jnp.float32),  # FC-weight landing buffer
            pltpu.SemaphoreType.DMA,                  # FC-weight DMA completion
        ],
    )(xr, xi,
      params["wv1"], params["wv2"],
      params["sc1"], params["sh1"], params["sc2"], params["sh2"],
      params["bfc_row"], params["wfc_t"])


# --------------------------- deterministic parameter init ---------------------------

def init_params(key):
    keys = jax.random.split(key, 6)

    def conv_w(k):
        fan_in = C * K * K
        return jax.random.normal(k, (C, C, K, K), jnp.float32) / jnp.sqrt(float(fan_in))

    def bn_affine(k):
        # BatchNorm in eval mode: y = (x - mean)/sqrt(var+eps)*gamma + beta, folded into
        # a per-channel scale/shift.
        # TODO(synk): PyTorch training-mode batch statistics are not reproduced.
        k1, k2, k3, k4 = jax.random.split(k, 4)
        gamma = 1.0 + 0.1 * jax.random.normal(k1, (C,), jnp.float32)
        beta = 0.1 * jax.random.normal(k2, (C,), jnp.float32)
        mean = 0.1 * jax.random.normal(k3, (C,), jnp.float32)
        var = 1.0 + 0.1 * jax.random.uniform(k4, (C,), jnp.float32)
        scale = gamma / jnp.sqrt(var + EPS)
        shift = beta - mean * scale
        return scale, shift

    def fold_conv_w(w):
        # Per-tap lane-broadcast weight vectors for the channel-folded conv MAC:
        # row co*K*K + dy*K + dx: lanes [0:ACCW] = w[co,0,dy,dx],
        # lanes [LWB:LWB+ACCW] = w[co,1,dy,dx], remaining lanes zero.
        wt = w.reshape(C, C, K * K)                          # (co, ci, tap)
        wv = jnp.zeros((C, K * K, FOLDW), jnp.float32)
        wv = wv.at[:, :, 0:ACCW].set(
            jnp.broadcast_to(wt[:, 0, :, None], (C, K * K, ACCW)))
        wv = wv.at[:, :, LWB:LWB + ACCW].set(
            jnp.broadcast_to(wt[:, 1, :, None], (C, K * K, ACCW)))
        return wv.reshape(C * K * K, FOLDW)

    w1 = conv_w(keys[0]); sc1, sh1 = bn_affine(keys[1])
    w2 = conv_w(keys[2]); sc2, sh2 = bn_affine(keys[3])
    wfc = jax.random.normal(keys[4], (F_OUT, TOTAL), jnp.float32) / jnp.sqrt(float(TOTAL))
    bfc = 0.01 * jax.random.normal(keys[5], (F_OUT,), jnp.float32)

    return {
        "w1_oihw": w1, "wv1": fold_conv_w(w1), "sc1": sc1, "sh1": sh1,
        "w2_oihw": w2, "wv2": fold_conv_w(w2), "sc2": sc2, "sh2": sh2,
        "wfc": wfc, "bfc": bfc,
        "wfc_t": jnp.asarray(wfc.T),          # (TOTAL, F_OUT): kernel computes x @ W^T
        "bfc_row": bfc[None, :],              # (1, F_OUT)
    }


# --------------------------- pure-JAX reference (sanity check) ---------------------------

def reference_forward(x_complex, p):
    xr = (jnp.real(x_complex) - TRAIN_MEAN_REAL) / TRAIN_STD_REAL
    xi = (jnp.imag(x_complex) - TRAIN_MEAN_IMAG) / TRAIN_STD_IMAG
    h = jnp.stack([xr, xi], axis=1).astype(jnp.float32)

    def block(h, w, sc, sh):
        y = lax.conv_general_dilated(
            h, w, window_strides=(1, 1), padding=[(PAD, PAD), (PAD, PAD)],
            dimension_numbers=("NCHW", "OIHW", "NCHW"),
            precision=lax.Precision.HIGHEST)
        y = y * sc[None, :, None, None] + sh[None, :, None, None]
        return jnp.where(y >= 0.0, y, 0.3 * y)

    h = block(h, p["w1_oihw"], p["sc1"], p["sh1"])
    h = block(h, p["w2_oihw"], p["sc2"], p["sh2"])
    flat = h.reshape(B, TOTAL)
    return jax.nn.sigmoid(flat @ p["wfc"].T + p["bfc"][None, :])


if __name__ == "__main__":
    key = jax.random.PRNGKey(0)
    kx, kp = jax.random.split(key)
    kr, ki = jax.random.split(kx)
    # the module's forward takes a complex CSI tensor y of shape (B, H, W)
    x = (jax.random.normal(kr, (B, H, W), jnp.float32)
         + 1j * jax.random.normal(ki, (B, H, W), jnp.float32)).astype(jnp.complex64)
    params = init_params(kp)

    out = jax.block_until_ready(task2_encoder_forward(x, params))
    assert out.shape == (B, F_OUT) and out.dtype == jnp.float32

    ref = jax.block_until_ready(reference_forward(x, params))
    if not bool(jnp.allclose(out, ref, atol=2e-3, rtol=2e-3)):
        raise AssertionError("Pallas kernel output does not match JAX reference")

    print("KERNEL_OK")
</pallas_src>

<mosaic_0001>
module attributes {stable_mosaic.version = 11 : i64} {
  func.func @task2_encoder_kernel(%arg0: memref<2x16x16xf32, #tpu.memory_space<vmem>>, %arg1: memref<2x16x16xf32, #tpu.memory_space<vmem>>, %arg2: memref<98x94xf32, #tpu.memory_space<vmem>>, %arg3: memref<98x94xf32, #tpu.memory_space<vmem>>, %arg4: memref<2xf32, #tpu.memory_space<smem>>, %arg5: memref<2xf32, #tpu.memory_space<smem>>, %arg6: memref<2xf32, #tpu.memory_space<smem>>, %arg7: memref<2xf32, #tpu.memory_space<smem>>, %arg8: memref<1x32xf32, #tpu.memory_space<vmem>>, %arg9: memref<512x32xf32, #tpu.memory_space<any>>, %arg10: memref<2x32xf32, #tpu.memory_space<vmem>>, %arg11: memref<22x100xf32, #tpu.memory_space<vmem>>, %arg12: memref<2x512xf32, #tpu.memory_space<vmem>>, %arg13: memref<512x32xf32, #tpu.memory_space<vmem>>, %arg14: memref<!tpu.dma_semaphore, #tpu.memory_space<semaphore_mem>>) attributes {dimension_semantics = [], scalar_prefetch = 0 : i64, scratch_operands = 4 : i64, tpu.core_type = #tpu.core_type<tc>} {
    tpu.enqueue_dma source(%arg9 : memref<512x32xf32, #tpu.memory_space<any>>) target(%arg13 : memref<512x32xf32, #tpu.memory_space<vmem>>) target_semaphore(%arg14 : memref<!tpu.dma_semaphore, #tpu.memory_space<semaphore_mem>>)
    %cst = arith.constant 0.000000e+00 : f32
    %0 = vector.broadcast %cst : f32 to vector<22x100xf32>
    %c0 = arith.constant 0 : index
    %c0_0 = arith.constant 0 : index
    %1 = vector.load %arg11[%c0, %c0_0] : memref<22x100xf32, #tpu.memory_space<vmem>>, vector<22x100xf32>
    tpu.vector_store %arg11[%c0, %c0_0], %0 {strides = array<i32>} : memref<22x100xf32, #tpu.memory_space<vmem>>, vector<22x100xf32>,
    %c0_1 = arith.constant 0 : index
    %c0_2 = arith.constant 0 : index
    %c0_3 = arith.constant 0 : index
    %2 = vector.load %arg0[%c0_1, %c0_2, %c0_3] : memref<2x16x16xf32, #tpu.memory_space<vmem>>, vector<1x16x16xf32>
    %3 = vector.shape_cast %2 : vector<1x16x16xf32> to vector<16x16xf32>
    %cst_4 = arith.constant 1.000000e-01 : f32
    %4 = vector.broadcast %cst_4 : f32 to vector<16x16xf32>
    %5 = arith.subf %3, %4 : vector<16x16xf32>
    %cst_5 = arith.constant 0.833333313 : f32
    %6 = vector.broadcast %cst_5 : f32 to vector<16x16xf32>
    %7 = arith.mulf %5, %6 : vector<16x16xf32>
    %c3 = arith.constant 3 : index
    %c6 = arith.constant 6 : index
    %8 = vector.load %arg11[%c3, %c6] : memref<22x100xf32, #tpu.memory_space<vmem>>, vector<16x16xf32>
    tpu.vector_store %arg11[%c3, %c6], %7 {strides = array<i32>} : memref<22x100xf32, #tpu.memory_space<vmem>>, vector<16x16xf32>,
    %c0_6 = arith.constant 0 : index
    %c0_7 = arith.constant 0 : index
    %c0_8 = arith.constant 0 : index
    %9 = vector.load %arg1[%c0_6, %c0_7, %c0_8] : memref<2x16x16xf32, #tpu.memory_space<vmem>>, vector<1x16x16xf32>
    %10 = vector.shape_cast %9 : vector<1x16x16xf32> to vector<16x16xf32>
    %cst_9 = arith.constant -5.000000e-02 : f32
    %11 = vector.broadcast %cst_9 : f32 to vector<16x16xf32>
    %12 = arith.subf %10, %11 : vector<16x16xf32>
    %cst_10 = arith.constant 1.11111116 : f32
    %13 = vector.broadcast %cst_10 : f32 to vector<16x16xf32>
    %14 = arith.mulf %12, %13 : vector<16x16xf32>
    %c3_11 = arith.constant 3 : index
    %c56 = arith.constant 56 : index
    %15 = vector.load %arg11[%c3_11, %c56] : memref<22x100xf32, #tpu.memory_space<vmem>>, vector<16x16xf32>
    tpu.vector_store %arg11[%c3_11, %c56], %14 {strides = array<i32>} : memref<22x100xf32, #tpu.memory_space<vmem>>, vector<16x16xf32>,
    %c1 = arith.constant 1 : index
    %c0_12 = arith.constant 0 : index
    %c0_13 = arith.constant 0 : index
    %16 = vector.load %arg0[%c1, %c0_12, %c0_13] : memref<2x16x16xf32, #tpu.memory_space<vmem>>, vector<1x16x16xf32>
    %17 = vector.shape_cast %16 : vector<1x16x16xf32> to vector<16x16xf32>
    %cst_14 = arith.constant 1.000000e-01 : f32
    %18 = vector.broadcast %cst_14 : f32 to vector<16x16xf32>
    %19 = arith.subf %17, %18 : vector<16x16xf32>
    %cst_15 = arith.constant 0.833333313 : f32
    %20 = vector.broadcast %cst_15 : f32 to vector<16x16xf32>
    %21 = arith.mulf %19, %20 : vector<16x16xf32>
    %c3_16 = arith.constant 3 : index
    %c28 = arith.constant 28 : index
    %22 = vector.load %arg11[%c3_16, %c28] : memref<22x100xf32, #tpu.memory_space<vmem>>, vector<16x16xf32>
    tpu.vector_store %arg11[%c3_16, %c28], %21 {strides = array<i32>} : memref<22x100xf32, #tpu.memory_space<vmem>>, vector<16x16xf32>,
    %c1_17 = arith.constant 1 : index
    %c0_18 = arith.constant 0 : index
    %c0_19 = arith.constant 0 : index
    %23 = vector.load %arg1[%c1_17, %c0_18, %c0_19] : memref<2x16x16xf32, #tpu.memory_space<vmem>>, vector<1x16x16xf32>
    %24 = vector.shape_cast %23 : vector<1x16x16xf32> to vector<16x16xf32>
    %cst_20 = arith.constant -5.000000e-02 : f32
    %25 = vector.broadcast %cst_20 : f32 to vector<16x16xf32>
    %26 = arith.subf %24, %25 : vector<16x16xf32>
    %cst_21 = arith.constant 1.11111116 : f32
    %27 = vector.broadcast %cst_21 : f32 to vector<16x16xf32>
    %28 = arith.mulf %26, %27 : vector<16x16xf32>
    %c3_22 = arith.constant 3 : index
    %c78 = arith.constant 78 : index
    %29 = vector.load %arg11[%c3_22, %c78] : memref<22x100xf32, #tpu.memory_space<vmem>>, vector<16x16xf32>
    tpu.vector_store %arg11[%c3_22, %c78], %28 {strides = array<i32>} : memref<22x100xf32, #tpu.memory_space<vmem>>, vector<16x16xf32>,
    %cst_23 = arith.constant 0.000000e+00 : f32
    %30 = vector.broadcast %cst_23 : f32 to vector<16x94xf32>
    %cst_24 = arith.constant 0.000000e+00 : f32
    %31 = vector.broadcast %cst_24 : f32 to vector<16x94xf32>
    %cst_25 = arith.constant 0.000000e+00 : f32
    %32 = vector.broadcast %cst_25 : f32 to vector<16x94xf32>
    %cst_26 = arith.constant 0.000000e+00 : f32
    %33 = vector.broadcast %cst_26 : f32 to vector<16x94xf32>
    %cst_27 = arith.constant 0.000000e+00 : f32
    %34 = vector.broadcast %cst_27 : f32 to vector<16x94xf32>
    %cst_28 = arith.constant 0.000000e+00 : f32
    %35 = vector.broadcast %cst_28 : f32 to vector<16x94xf32>
    %cst_29 = arith.constant 0.000000e+00 : f32
    %36 = vector.broadcast %cst_29 : f32 to vector<16x94xf32>
    %cst_30 = arith.constant 0.000000e+00 : f32
    %37 = vector.broadcast %cst_30 : f32 to vector<16x94xf32>
    %c0_31 = arith.constant 0 : index
    %c0_32 = arith.constant 0 : index
    %38 = vector.load %arg11[%c0_31, %c0_32] : memref<22x100xf32, #tpu.memory_space<vmem>>, vector<16x100xf32>
    %39 = vector.extract_strided_slice %38 {offsets = [0, 0], sizes = [16, 94], strides = [1, 1]} : vector<16x100xf32> to vector<16x94xf32>
    %c0_33 = arith.constant 0 : index
    %c0_34 = arith.constant 0 : index
    %40 = vector.load %arg2[%c0_33, %c0_34] : memref<98x94xf32, #tpu.memory_space<vmem>>, vector<1x94xf32>
    %41 = vector.broadcast %40 : vector<1x94xf32> to vector<16x94xf32>
    %42 = arith.mulf %41, %39 : vector<16x94xf32>
    %43 = arith.addf %30, %42 : vector<16x94xf32>
    %c49 = arith.constant 49 : index
    %c0_35 = arith.constant 0 : index
    %44 = vector.load %arg2[%c49, %c0_35] : memref<98x94xf32, #tpu.memory_space<vmem>>, vector<1x94xf32>
    %45 = vector.broadcast %44 : vector<1x94xf32> to vector<16x94xf32>
    %46 = arith.mulf %45, %39 : vector<16x94xf32>
    %47 = arith.addf %34, %46 : vector<16x94xf32>
    %48 = vector.extract_strided_slice %38 {offsets = [0, 1], sizes = [16, 94], strides = [1, 1]} : vector<16x100xf32> to vector<16x94xf32>
    %c1_36 = arith.constant 1 : index
    %c0_37 = arith.constant 0 : index
    %49 = vector.load %arg2[%c1_36, %c0_37] : memref<98x94xf32, #tpu.memory_space<vmem>>, vector<1x94xf32>
    %50 = vector.broadcast %49 : vector<1x94xf32> to vector<16x94xf32>
    %51 = arith.mulf %50, %48 : vector<16x94xf32>
    %52 = arith.addf %31, %51 : vector<16x94xf32>
    %c50 = arith.constant 50 : index
    %c0_38 = arith.constant 0 : index
    %53 = vector.load %arg2[%c50, %c0_38] : memref<98x94xf32, #tpu.memory_space<vmem>>, vector<1x94xf32>
    %54 = vector.broadcast %53 : vector<1x94xf32> to vector<16x94xf32>
    %55 = arith.mulf %54, %48 : vector<16x94xf32>
    %56 = arith.addf %35, %55 : vector<16x94xf32>
    %57 = vector.extract_strided_slice %38 {offsets = [0, 2], sizes = [16, 94], strides = [1, 1]} : vector<16x100xf32> to vector<16x94xf32>
    %c2 = arith.constant 2 : index
    %c0_39 = arith.constant 0 : index
    %58 = vector.load %arg2[%c2, %c0_39] : memref<98x94xf32, #tpu.memory_space<vmem>>, vector<1x94xf32>
    %59 = vector.broadcast %58 : vector<1x94xf32> to vector<16x94xf32>
    %60 = arith.mulf %59, %57 : vector<16x94xf32>
    %61 = arith.addf %32, %60 : vector<16x94xf32>
    %c51 = arith.constant 51 : index
    %c0_40 = arith.constant 0 : index
    %62 = vector.load %arg2[%c51, %c0_40] : memref<98x94xf32, #tpu.memory_space<vmem>>, vector<1x94xf32>
    %63 = vector.broadcast %62 : vector<1x94xf32> to vector<16x94xf32>
    %64 = arith.mulf %63, %57 : vector<16x94xf32>
    %65 = arith.addf %36, %64 : vector<16x94xf32>
    %66 = vector.extract_strided_slice %38 {offsets = [0, 3], sizes = [16, 94], strides = [1, 1]} : vector<16x100xf32> to vector<16x94xf32>
    %c3_41 = arith.constant 3 : index
    %c0_42 = arith.constant 0 : index
    %67 = vector.load %arg2[%c3_41, %c0_42] : memref<98x94xf32, #tpu.memory_space<vmem>>, vector<1x94xf32>
    %68 = vector.broadcast %67 : vector<1x94xf32> to vector<16x94xf32>
    %69 = arith.mulf %68, %66 : vector<16x94xf32>
    %70 = arith.addf %33, %69 : vector<16x94xf32>
    %c52 = arith.constant 52 : index
    %c0_43 = arith.constant 0 : index
    %71 = vector.load %arg2[%c52, %c0_43] : memref<98x94xf32, #tpu.memory_space<vmem>>, vector<1x94xf32>
    %72 = vector.broadcast %71 : vector<1x94xf32> to vector<16x94xf32>
    %73 = arith.mulf %72, %66 : vector<16x94xf32>
    %74 = arith.addf %37, %73 : vector<16x94xf32>
    %75 = vector.extract_strided_slice %38 {offsets = [0, 4], sizes = [16, 94], strides = [1, 1]} : vector<16x100xf32> to vector<16x94xf32>
    %c4 = arith.constant 4 : index
    %c0_44 = arith.constant 0 : index
    %76 = vector.load %arg2[%c4, %c0_44] : memref<98x94xf32, #tpu.memory_space<vmem>>, vector<1x94xf32>
    %77 = vector.broadcast %76 : vector<1x94xf32> to vector<16x94xf32>
    %78 = arith.mulf %77, %75 : vector<16x94xf32>
    %79 = arith.addf %43, %78 : vector<16x94xf32>
    %c53 = arith.constant 53 : index
    %c0_45 = arith.constant 0 : index
    %80 = vector.load %arg2[%c53, %c0_45] : memref<98x94xf32, #tpu.memory_space<vmem>>, vector<1x94xf32>
    %81 = vector.broadcast %80 : vector<1x94xf32> to vector<16x94xf32>
    %82 = arith.mulf %81, %75 : vector<16x94xf32>
    %83 = arith.addf %47, %82 : vector<16x94xf32>
    %84 = vector.extract_strided_slice %38 {offsets = [0, 5], sizes = [16, 94], strides = [1, 1]} : vector<16x100xf32> to vector<16x94xf32>
    %c5 = arith.constant 5 : index
    %c0_46 = arith.constant 0 : index
    %85 = vector.load %arg2[%c5, %c0_46] : memref<98x94xf32, #tpu.memory_space<vmem>>, vector<1x94xf32>
    %86 = vector.broadcast %85 : vector<1x94xf32> to vector<16x94xf32>
    %87 = arith.mulf %86, %84 : vector<16x94xf32>
    %88 = arith.addf %52, %87 : vector<16x94xf32>
    %c54 = arith.constant 54 : index
    %c0_47 = arith.constant 0 : index
    %89 = vector.load %arg2[%c54, %c0_47] : memref<98x94xf32, #tpu.memory_space<vmem>>, vector<1x94xf32>
    %90 = vector.broadcast %89 : vector<1x94xf32> to vector<16x94xf32>
    %91 = arith.mulf %90, %84 : vector<16x94xf32>
    %92 = arith.addf %56, %91 : vector<16x94xf32>
    %93 = vector.extract_strided_slice %38 {offsets = [0, 6], sizes = [16, 94], strides = [1, 1]} : vector<16x100xf32> to vector<16x94xf32>
    %c6_48 = arith.constant 6 : index
    %c0_49 = arith.constant 0 : index
    %94 = vector.load %arg2[%c6_48, %c0_49] : memref<98x94xf32, #tpu.memory_space<vmem>>, vector<1x94xf32>
    %95 = vector.broadcast %94 : vector<1x94xf32> to vector<16x94xf32>
    %96 = arith.mulf %95, %93 : vector<16x94xf32>
    %97 = arith.addf %61, %96 : vector<16x94xf32>
    %c55 = arith.constant 55 : index
    %c0_50 = arith.constant 0 : index
    %98 = vector.load %arg2[%c55, %c0_50] : memref<98x94xf32, #tpu.memory_space<vmem>>, vector<1x94xf32>
    %99 = vector.broadcast %98 : vector<1x94xf32> to vector<16x94xf32>
    %100 = arith.mulf %99, %93 : vector<16x94xf32>
    %101 = arith.addf %65, %100 : vector<16x94xf32>
    %c1_51 = arith.constant 1 : index
    %c0_52 = arith.constant 0 : index
    %102 = vector.load %arg11[%c1_51, %c0_52] : memref<22x100xf32, #tpu.memory_space<vmem>>, vector<16x100xf32>
    %103 = vector.extract_strided_slice %102 {offsets = [0, 0], sizes = [16, 94], strides = [1, 1]} : vector<16x100xf32> to vector<16x94xf32>
    %c7 = arith.constant 7 : index
    %c0_53 = arith.constant 0 : index
    %104 = vector.load %arg2[%c7, %c0_53] : memref<98x94xf32, #tpu.memory_space<vmem>>, vector<1x94xf32>
    %105 = vector.broadcast %104 : vector<1x94xf32> to vector<16x94xf32>
    %106 = arith.mulf %105, %103 : vector<16x94xf32>
    %107 = arith.addf %70, %106 : vector<16x94xf32>
    %c56_54 = arith.constant 56 : index
    %c0_55 = arith.constant 0 : index
    %108 = vector.load %arg2[%c56_54, %c0_55] : memref<98x94xf32, #tpu.memory_space<vmem>>, vector<1x94xf32>
    %109 = vector.broadcast %108 : vector<1x94xf32> to vector<16x94xf32>
    %110 = arith.mulf %109, %103 : vector<16x94xf32>
    %111 = arith.addf %74, %110 : vector<16x94xf32>
    %112 = vector.extract_strided_slice %102 {offsets = [0, 1], sizes = [16, 94], strides = [1, 1]} : vector<16x100xf32> to vector<16x94xf32>
    %c8 = arith.constant 8 : index
    %c0_56 = arith.constant 0 : index
    %113 = vector.load %arg2[%c8, %c0_56] : memref<98x94xf32, #tpu.memory_space<vmem>>, vector<1x94xf32>
    %114 = vector.broadcast %113 : vector<1x94xf32> to vector<16x94xf32>
    %115 = arith.mulf %114, %112 : vector<16x94xf32>
    %116 = arith.addf %79, %115 : vector<16x94xf32>
    %c57 = arith.constant 57 : index
    %c0_57 = arith.constant 0 : index
    %117 = vector.load %arg2[%c57, %c0_57] : memref<98x94xf32, #tpu.memory_space<vmem>>, vector<1x94xf32>
    %118 = vector.broadcast %117 : vector<1x94xf32> to vector<16x94xf32>
    %119 = arith.mulf %118, %112 : vector<16x94xf32>
    %120 = arith.addf %83, %119 : vector<16x94xf32>
    %121 = vector.extract_strided_slice %102 {offsets = [0, 2], sizes = [16, 94], strides = [1, 1]} : vector<16x100xf32> to vector<16x94xf32>
    %c9 = arith.constant 9 : index
    %c0_58 = arith.constant 0 : index
    %122 = vector.load %arg2[%c9, %c0_58] : memref<98x94xf32, #tpu.memory_space<vmem>>, vector<1x94xf32>
    %123 = vector.broadcast %122 : vector<1x94xf32> to vector<16x94xf32>
    %124 = arith.mulf %123, %121 : vector<16x94xf32>
    %125 = arith.addf %88, %124 : vector<16x94xf32>
    %c58 = arith.constant 58 : index
    %c0_59 = arith.constant 0 : index
    %126 = vector.load %arg2[%c58, %c0_59] : memref<98x94xf32, #tpu.memory_space<vmem>>, vector<1x94xf32>
    %127 = vector.broadcast %126 : vector<1x94xf32> to vector<16x94xf32>
    %128 = arith.mulf %127, %121 : vector<16x94xf32>
    %129 = arith.addf %92, %128 : vector<16x94xf32>
    %130 = vector.extract_strided_slice %102 {offsets = [0, 3], sizes = [16, 94], strides = [1, 1]} : vector<16x100xf32> to vector<16x94xf32>
    %c10 = arith.constant 10 : index
    %c0_60 = arith.constant 0 : index
    %131 = vector.load %arg2[%c10, %c0_60] : memref<98x94xf32, #tpu.memory_space<vmem>>, vector<1x94xf32>
    %132 = vector.broadcast %131 : vector<1x94xf32> to vector<16x94xf32>
    %133 = arith.mulf %132, %130 : vector<16x94xf32>
    %134 = arith.addf %97, %133 : vector<16x94xf32>
    %c59 = arith.constant 59 : index
    %c0_61 = arith.constant 0 : index
    %135 = vector.load %arg2[%c59, %c0_61] : memref<98x94xf32, #tpu.memory_space<vmem>>, vector<1x94xf32>
    %136 = vector.broadcast %135 : vector<1x94xf32> to vector<16x94xf32>
    %137 = arith.mulf %136, %130 : vector<16x94xf32>
    %138 = arith.addf %101, %137 : vector<16x94xf32>
    %139 = vector.extract_strided_slice %102 {offsets = [0, 4], sizes = [16, 94], strides = [1, 1]} : vector<16x100xf32> to vector<16x94xf32>
    %c11 = arith.constant 11 : index
    %c0_62 = arith.constant 0 : index
    %140 = vector.load %arg2[%c11, %c0_62] : memref<98x94xf32, #tpu.memory_space<vmem>>, vector<1x94xf32>
    %141 = vector.broadcast %140 : vector<1x94xf32> to vector<16x94xf32>
    %142 = arith.mulf %141, %139 : vector<16x94xf32>
    %143 = arith.addf %107, %142 : vector<16x94xf32>
    %c60 = arith.constant 60 : index
    %c0_63 = arith.constant 0 : index
    %144 = vector.load %arg2[%c60, %c0_63] : memref<98x94xf32, #tpu.memory_space<vmem>>, vector<1x94xf32>
    %145 = vector.broadcast %144 : vector<1x94xf32> to vector<16x94xf32>
    %146 = arith.mulf %145, %139 : vector<16x94xf32>
    %147 = arith.addf %111, %146 : vector<16x94xf32>
    %148 = vector.extract_strided_slice %102 {offsets = [0, 5], sizes = [16, 94], strides = [1, 1]} : vector<16x100xf32> to vector<16x94xf32>
    %c12 = arith.constant 12 : index
    %c0_64 = arith.constant 0 : index
    %149 = vector.load %arg2[%c12, %c0_64] : memref<98x94xf32, #tpu.memory_space<vmem>>, vector<1x94xf32>
    %150 = vector.broadcast %149 : vector<1x94xf32> to vector<16x94xf32>
    %151 = arith.mulf %150, %148 : vector<16x94xf32>
    %152 = arith.addf %116, %151 : vector<16x94xf32>
    %c61 = arith.constant 61 : index
    %c0_65 = arith.constant 0 : index
    %153 = vector.load %arg2[%c61, %c0_65] : memref<98x94xf32, #tpu.memory_space<vmem>>, vector<1x94xf32>
    %154 = vector.broadcast %153 : vector<1x94xf32> to vector<16x94xf32>
    %155 = arith.mulf %154, %148 : vector<16x94xf32>
    %156 = arith.addf %120, %155 : vector<16x94xf32>
    %157 = vector.extract_strided_slice %102 {offsets = [0, 6], sizes = [16, 94], strides = [1, 1]} : vector<16x100xf32> to vector<16x94xf32>
    %c13 = arith.constant 13 : index
    %c0_66 = arith.constant 0 : index
    %158 = vector.load %arg2[%c13, %c0_66] : memref<98x94xf32, #tpu.memory_space<vmem>>, vector<1x94xf32>
    %159 = vector.broadcast %158 : vector<1x94xf32> to vector<16x94xf32>
    %160 = arith.mulf %159, %157 : vector<16x94xf32>
    %161 = arith.addf %125, %160 : vector<16x94xf32>
    %c62 = arith.constant 62 : index
    %c0_67 = arith.constant 0 : index
    %162 = vector.load %arg2[%c62, %c0_67] : memref<98x94xf32, #tpu.memory_space<vmem>>, vector<1x94xf32>
    %163 = vector.broadcast %162 : vector<1x94xf32> to vector<16x94xf32>
    %164 = arith.mulf %163, %157 : vector<16x94xf32>
    %165 = arith.addf %129, %164 : vector<16x94xf32>
    %c2_68 = arith.constant 2 : index
    %c0_69 = arith.constant 0 : index
    %166 = vector.load %arg11[%c2_68, %c0_69] : memref<22x100xf32, #tpu.memory_space<vmem>>, vector<16x100xf32>
    %167 = vector.extract_strided_slice %166 {offsets = [0, 0], sizes = [16, 94], strides = [1, 1]} : vector<16x100xf32> to vector<16x94xf32>
    %c14 = arith.constant 14 : index
    %c0_70 = arith.constant 0 : index
    %168 = vector.load %arg2[%c14, %c0_70] : memref<98x94xf32, #tpu.memory_space<vmem>>, vector<1x94xf32>
    %169 = vector.broadcast %168 : vector<1x94xf32> to vector<16x94xf32>
    %170 = arith.mulf %169, %167 : vector<16x94xf32>
    %171 = arith.addf %134, %170 : vector<16x94xf32>
    %c63 = arith.constant 63 : index
    %c0_71 = arith.constant 0 : index
    %172 = vector.load %arg2[%c63, %c0_71] : memref<98x94xf32, #tpu.memory_space<vmem>>, vector<1x94xf32>
    %173 = vector.broadcast %172 : vector<1x94xf32> to vector<16x94xf32>
    %174 = arith.mulf %173, %167 : vector<16x94xf32>
    %175 = arith.addf %138, %174 : vector<16x94xf32>
    %176 = vector.extract_strided_slice %166 {offsets = [0, 1], sizes = [16, 94], strides = [1, 1]} : vector<16x100xf32> to vector<16x94xf32>
    %c15 = arith.constant 15 : index
    %c0_72 = arith.constant 0 : index
    %177 = vector.load %arg2[%c15, %c0_72] : memref<98x94xf32, #tpu.memory_space<vmem>>, vector<1x94xf32>
    %178 = vector.broadcast %177 : vector<1x94xf32> to vector<16x94xf32>
    %179 = arith.mulf %178, %176 : vector<16x94xf32>
    %180 = arith.addf %143, %179 : vector<16x94xf32>
    %c64 = arith.constant 64 : index
    %c0_73 = arith.constant 0 : index
    %181 = vector.load %arg2[%c64, %c0_73] : memref<98x94xf32, #tpu.memory_space<vmem>>, vector<1x94xf32>
    %182 = vector.broadcast %181 : vector<1x94xf32> to vector<16x94xf32>
    %183 = arith.mulf %182, %176 : vector<16x94xf32>
    %184 = arith.addf %147, %183 : vector<16x94xf32>
    %185 = vector.extract_strided_slice %166 {offsets = [0, 2], sizes = [16, 94], strides = [1, 1]} : vector<16x100xf32> to vector<16x94xf32>
    %c16 = arith.constant 16 : index
    %c0_74 = arith.constant 0 : index
    %186 = vector.load %arg2[%c16, %c0_74] : memref<98x94xf32, #tpu.memory_space<vmem>>, vector<1x94xf32>
    %187 = vector.broadcast %186 : vector<1x94xf32> to vector<16x94xf32>
    %188 = arith.mulf %187, %185 : vector<16x94xf32>
    %189 = arith.addf %152, %188 : vector<16x94xf32>
    %c65 = arith.constant 65 : index
    %c0_75 = arith.constant 0 : index
    %190 = vector.load %arg2[%c65, %c0_75] : memref<98x94xf32, #tpu.memory_space<vmem>>, vector<1x94xf32>
    %191 = vector.broadcast %190 : vector<1x94xf32> to vector<16x94xf32>
    %192 = arith.mulf %191, %185 : vector<16x94xf32>
    %193 = arith.addf %156, %192 : vector<16x94xf32>
    %194 = vector.extract_strided_slice %166 {offsets = [0, 3], sizes = [16, 94], strides = [1, 1]} : vector<16x100xf32> to vector<16x94xf32>
    %c17 = arith.constant 17 : index
    %c0_76 = arith.constant 0 : index
    %195 = vector.load %arg2[%c17, %c0_76] : memref<98x94xf32, #tpu.memory_space<vmem>>, vector<1x94xf32>
    %196 = vector.broadcast %195 : vector<1x94xf32> to vector<16x94xf32>
    %197 = arith.mulf %196, %194 : vector<16x94xf32>
    %198 = arith.addf %161, %197 : vector<16x94xf32>
    %c66 = arith.constant 66 : index
    %c0_77 = arith.constant 0 : index
    %199 = vector.load %arg2[%c66, %c0_77] : memref<98x94xf32, #tpu.memory_space<vmem>>, vector<1x94xf32>
    %200 = vector.broadcast %199 : vector<1x94xf32> to vector<16x94xf32>
    %201 = arith.mulf %200, %194 : vector<16x94xf32>
    %202 = arith.addf %165, %201 : vector<16x94xf32>
    %203 = vector.extract_strided_slice %166 {offsets = [0, 4], sizes = [16, 94], strides = [1, 1]} : vector<16x100xf32> to vector<16x94xf32>
    %c18 = arith.constant 18 : index
    %c0_78 = arith.constant 0 : index
    %204 = vector.load %arg2[%c18, %c0_78] : memref<98x94xf32, #tpu.memory_space<vmem>>, vector<1x94xf32>
    %205 = vector.broadcast %204 : vector<1x94xf32> to vector<16x94xf32>
    %206 = arith.mulf %205, %203 : vector<16x94xf32>
    %207 = arith.addf %171, %206 : vector<16x94xf32>
    %c67 = arith.constant 67 : index
    %c0_79 = arith.constant 0 : index
    %208 = vector.load %arg2[%c67, %c0_79] : memref<98x94xf32, #tpu.memory_space<vmem>>, vector<1x94xf32>
    %209 = vector.broadcast %208 : vector<1x94xf32> to vector<16x94xf32>
    %210 = arith.mulf %209, %203 : vector<16x94xf32>
    %211 = arith.addf %175, %210 : vector<16x94xf32>
    %212 = vector.extract_strided_slice %166 {offsets = [0, 5], sizes = [16, 94], strides = [1, 1]} : vector<16x100xf32> to vector<16x94xf32>
    %c19 = arith.constant 19 : index
    %c0_80 = arith.constant 0 : index
    %213 = vector.load %arg2[%c19, %c0_80] : memref<98x94xf32, #tpu.memory_space<vmem>>, vector<1x94xf32>
    %214 = vector.broadcast %213 : vector<1x94xf32> to vector<16x94xf32>
    %215 = arith.mulf %214, %212 : vector<16x94xf32>
    %216 = arith.addf %180, %215 : vector<16x94xf32>
    %c68 = arith.constant 68 : index
    %c0_81 = arith.constant 0 : index
    %217 = vector.load %arg2[%c68, %c0_81] : memref<98x94xf32, #tpu.memory_space<vmem>>, vector<1x94xf32>
    %218 = vector.broadcast %217 : vector<1x94xf32> to vector<16x94xf32>
    %219 = arith.mulf %218, %212 : vector<16x94xf32>
    %220 = arith.addf %184, %219 : vector<16x94xf32>
    %221 = vector.extract_strided_slice %166 {offsets = [0, 6], sizes = [16, 94], strides = [1, 1]} : vector<16x100xf32> to vector<16x94xf32>
    %c20 = arith.constant 20 : index
    %c0_82 = arith.constant 0 : index
    %222 = vector.load %arg2[%c20, %c0_82] : memref<98x94xf32, #tpu.memory_space<vmem>>, vector<1x94xf32>
    %223 = vector.broadcast %222 : vector<1x94xf32> to vector<16x94xf32>
    %224 = arith.mulf %223, %221 : vector<16x94xf32>
    %225 = arith.addf %189, %224 : vector<16x94xf32>
    %c69 = arith.constant 69 : index
    %c0_83 = arith.constant 0 : index
    %226 = vector.load %arg2[%c69, %c0_83] : memref<98x94xf32, #tpu.memory_space<vmem>>, vector<1x94xf32>
    %227 = vector.broadcast %226 : vector<1x94xf32> to vector<16x94xf32>
    %228 = arith.mulf %227, %221 : vector<16x94xf32>
    %229 = arith.addf %193, %228 : vector<16x94xf32>
    %c3_84 = arith.constant 3 : index
    %c0_85 = arith.constant 0 : index
    %230 = vector.load %arg11[%c3_84, %c0_85] : memref<22x100xf32, #tpu.memory_space<vmem>>, vector<16x100xf32>
    %231 = vector.extract_strided_slice %230 {offsets = [0, 0], sizes = [16, 94], strides = [1, 1]} : vector<16x100xf32> to vector<16x94xf32>
    %c21 = arith.constant 21 : index
    %c0_86 = arith.constant 0 : index
    %232 = vector.load %arg2[%c21, %c0_86] : memref<98x94xf32, #tpu.memory_space<vmem>>, vector<1x94xf32>
    %233 = vector.broadcast %232 : vector<1x94xf32> to vector<16x94xf32>
    %234 = arith.mulf %233, %231 : vector<16x94xf32>
    %235 = arith.addf %198, %234 : vector<16x94xf32>
    %c70 = arith.constant 70 : index
    %c0_87 = arith.constant 0 : index
    %236 = vector.load %arg2[%c70, %c0_87] : memref<98x94xf32, #tpu.memory_space<vmem>>, vector<1x94xf32>
    %237 = vector.broadcast %236 : vector<1x94xf32> to vector<16x94xf32>
    %238 = arith.mulf %237, %231 : vector<16x94xf32>
    %239 = arith.addf %202, %238 : vector<16x94xf32>
    %240 = vector.extract_strided_slice %230 {offsets = [0, 1], sizes = [16, 94], strides = [1, 1]} : vector<16x100xf32> to vector<16x94xf32>
    %c22 = arith.constant 22 : index
    %c0_88 = arith.constant 0 : index
    %241 = vector.load %arg2[%c22, %c0_88] : memref<98x94xf32, #tpu.memory_space<vmem>>, vector<1x94xf32>
    %242 = vector.broadcast %241 : vector<1x94xf32> to vector<16x94xf32>
    %243 = arith.mulf %242, %240 : vector<16x94xf32>
    %244 = arith.addf %207, %243 : vector<16x94xf32>
    %c71 = arith.constant 71 : index
    %c0_89 = arith.constant 0 : index
    %245 = vector.load %arg2[%c71, %c0_89] : memref<98x94xf32, #tpu.memory_space<vmem>>, vector<1x94xf32>
    %246 = vector.broadcast %245 : vector<1x94xf32> to vector<16x94xf32>
    %247 = arith.mulf %246, %240 : vector<16x94xf32>
    %248 = arith.addf %211, %247 : vector<16x94xf32>
    %249 = vector.extract_strided_slice %230 {offsets = [0, 2], sizes = [16, 94], strides = [1, 1]} : vector<16x100xf32> to vector<16x94xf32>
    %c23 = arith.constant 23 : index
    %c0_90 = arith.constant 0 : index
    %250 = vector.load %arg2[%c23, %c0_90] : memref<98x94xf32, #tpu.memory_space<vmem>>, vector<1x94xf32>
    %251 = vector.broadcast %250 : vector<1x94xf32> to vector<16x94xf32>
    %252 = arith.mulf %251, %249 : vector<16x94xf32>
    %253 = arith.addf %216, %252 : vector<16x94xf32>
    %c72 = arith.constant 72 : index
    %c0_91 = arith.constant 0 : index
    %254 = vector.load %arg2[%c72, %c0_91] : memref<98x94xf32, #tpu.memory_space<vmem>>, vector<1x94xf32>
    %255 = vector.broadcast %254 : vector<1x94xf32> to vector<16x94xf32>
    %256 = arith.mulf %255, %249 : vector<16x94xf32>
    %257 = arith.addf %220, %256 : vector<16x94xf32>
    %258 = vector.extract_strided_slice %230 {offsets = [0, 3], sizes = [16, 94], strides = [1, 1]} : vector<16x100xf32> to vector<16x94xf32>
    %c24 = arith.constant 24 : index
    %c0_92 = arith.constant 0 : index
    %259 = vector.load %arg2[%c24, %c0_92] : memref<98x94xf32, #tpu.memory_space<vmem>>, vector<1x94xf32>
    %260 = vector.broadcast %259 : vector<1x94xf32> to vector<16x94xf32>
    %261 = arith.mulf %260, %258 : vector<16x94xf32>
    %262 = arith.addf %225, %261 : vector<16x94xf32>
    %c73 = arith.constant 73 : index
    %c0_93 = arith.constant 0 : index
    %263 = vector.load %arg2[%c73, %c0_93] : memref<98x94xf32, #tpu.memory_space<vmem>>, vector<1x94xf32>
    %264 = vector.broadcast %263 : vector<1x94xf32> to vector<16x94xf32>
    %265 = arith.mulf %264, %258 : vector<16x94xf32>
    %266 = arith.addf %229, %265 : vector<16x94xf32>
    %267 = vector.extract_strided_slice %230 {offsets = [0, 4], sizes = [16, 94], strides = [1, 1]} : vector<16x100xf32> to vector<16x94xf32>
    %c25 = arith.constant 25 : index
    %c0_94 = arith.constant 0 : index
    %268 = vector.load %arg2[%c25, %c0_94] : memref<98x94xf32, #tpu.memory_space<vmem>>, vector<1x94xf32>
    %269 = vector.broadcast %268 : vector<1x94xf32> to vector<16x94xf32>
    %270 = arith.mulf %269, %267 : vector<16x94xf32>
    %271 = arith.addf %235, %270 : vector<16x94xf32>
    %c74 = arith.constant 74 : index
    %c0_95 = arith.constant 0 : index
    %272 = vector.load %arg2[%c74, %c0_95] : memref<98x94xf32, #tpu.memory_space<vmem>>, vector<1x94xf32>
    %273 = vector.broadcast %272 : vector<1x94xf32> to vector<16x94xf32>
    %274 = arith.mulf %273, %267 : vector<16x94xf32>
    %275 = arith.addf %239, %274 : vector<16x94xf32>
    %276 = vector.extract_strided_slice %230 {offsets = [0, 5], sizes = [16, 94], strides = [1, 1]} : vector<16x100xf32> to vector<16x94xf32>
    %c26 = arith.constant 26 : index
    %c0_96 = arith.constant 0 : index
    %277 = vector.load %arg2[%c26, %c0_96] : memref<98x94xf32, #tpu.memory_space<vmem>>, vector<1x94xf32>
    %278 = vector.broadcast %277 : vector<1x94xf32> to vector<16x94xf32>
    %279 = arith.mulf %278, %276 : vector<16x94xf32>
    %280 = arith.addf %244, %279 : vector<16x94xf32>
    %c75 = arith.constant 75 : index
    %c0_97 = arith.constant 0 : index
    %281 = vector.load %arg2[%c75, %c0_97] : memref<98x94xf32, #tpu.memory_space<vmem>>, vector<1x94xf32>
    %282 = vector.broadcast %281 : vector<1x94xf32> to vector<16x94xf32>
    %283 = arith.mulf %282, %276 : vector<16x94xf32>
    %284 = arith.addf %248, %283 : vector<16x94xf32>
    %285 = vector.extract_strided_slice %230 {offsets = [0, 6], sizes = [16, 94], strides = [1, 1]} : vector<16x100xf32> to vector<16x94xf32>
    %c27 = arith.constant 27 : index
    %c0_98 = arith.constant 0 : index
    %286 = vector.load %arg2[%c27, %c0_98] : memref<98x94xf32, #tpu.memory_space<vmem>>, vector<1x94xf32>
    %287 = vector.broadcast %286 : vector<1x94xf32> to vector<16x94xf32>
    %288 = arith.mulf %287, %285 : vector<16x94xf32>
    %289 = arith.addf %253, %288 : vector<16x94xf32>
    %c76 = arith.constant 76 : index
    %c0_99 = arith.constant 0 : index
    %290 = vector.load %arg2[%c76, %c0_99] : memref<98x94xf32, #tpu.memory_space<vmem>>, vector<1x94xf32>
    %291 = vector.broadcast %290 : vector<1x94xf32> to vector<16x94xf32>
    %292 = arith.mulf %291, %285 : vector<16x94xf32>
    %293 = arith.addf %257, %292 : vector<16x94xf32>
    %c4_100 = arith.constant 4 : index
    %c0_101 = arith.constant 0 : index
    %294 = vector.load %arg11[%c4_100, %c0_101] : memref<22x100xf32, #tpu.memory_space<vmem>>, vector<16x100xf32>
    %295 = vector.extract_strided_slice %294 {offsets = [0, 0], sizes = [16, 94], strides = [1, 1]} : vector<16x100xf32> to vector<16x94xf32>
    %c28_102 = arith.constant 28 : index
    %c0_103 = arith.constant 0 : index
    %296 = vector.load %arg2[%c28_102, %c0_103] : memref<98x94xf32, #tpu.memory_space<vmem>>, vector<1x94xf32>
    %297 = vector.broadcast %296 : vector<1x94xf32> to vector<16x94xf32>
    %298 = arith.mulf %297, %295 : vector<16x94xf32>
    %299 = arith.addf %262, %298 : vector<16x94xf32>
    %c77 = arith.constant 77 : index
    %c0_104 = arith.constant 0 : index
    %300 = vector.load %arg2[%c77, %c0_104] : memref<98x94xf32, #tpu.memory_space<vmem>>, vector<1x94xf32>
    %301 = vector.broadcast %300 : vector<1x94xf32> to vector<16x94xf32>
    %302 = arith.mulf %301, %295 : vector<16x94xf32>
    %303 = arith.addf %266, %302 : vector<16x94xf32>
    %304 = vector.extract_strided_slice %294 {offsets = [0, 1], sizes = [16, 94], strides = [1, 1]} : vector<16x100xf32> to vector<16x94xf32>
    %c29 = arith.constant 29 : index
    %c0_105 = arith.constant 0 : index
    %305 = vector.load %arg2[%c29, %c0_105] : memref<98x94xf32, #tpu.memory_space<vmem>>, vector<1x94xf32>
    %306 = vector.broadcast %305 : vector<1x94xf32> to vector<16x94xf32>
    %307 = arith.mulf %306, %304 : vector<16x94xf32>
    %308 = arith.addf %271, %307 : vector<16x94xf32>
    %c78_106 = arith.constant 78 : index
    %c0_107 = arith.constant 0 : index
    %309 = vector.load %arg2[%c78_106, %c0_107] : memref<98x94xf32, #tpu.memory_space<vmem>>, vector<1x94xf32>
    %310 = vector.broadcast %309 : vector<1x94xf32> to vector<16x94xf32>
    %311 = arith.mulf %310, %304 : vector<16x94xf32>
    %312 = arith.addf %275, %311 : vector<16x94xf32>
    %313 = vector.extract_strided_slice %294 {offsets = [0, 2], sizes = [16, 94], strides = [1, 1]} : vector<16x100xf32> to vector<16x94xf32>
    %c30 = arith.constant 30 : index
    %c0_108 = arith.constant 0 : index
    %314 = vector.load %arg2[%c30, %c0_108] : memref<98x94xf32, #tpu.memory_space<vmem>>, vector<1x94xf32>
    %315 = vector.broadcast %314 : vector<1x94xf32> to vector<16x94xf32>
    %316 = arith.mulf %315, %313 : vector<16x94xf32>
    %317 = arith.addf %280, %316 : vector<16x94xf32>
    %c79 = arith.constant 79 : index
    %c0_109 = arith.constant 0 : index
    %318 = vector.load %arg2[%c79, %c0_109] : memref<98x94xf32, #tpu.memory_space<vmem>>, vector<1x94xf32>
    %319 = vector.broadcast %318 : vector<1x94xf32> to vector<16x94xf32>
    %320 = arith.mulf %319, %313 : vector<16x94xf32>
    %321 = arith.addf %284, %320 : vector<16x94xf32>
    %322 = vector.extract_strided_slice %294 {offsets = [0, 3], sizes = [16, 94], strides = [1, 1]} : vector<16x100xf32> to vector<16x94xf32>
    %c31 = arith.constant 31 : index
    %c0_110 = arith.constant 0 : index
    %323 = vector.load %arg2[%c31, %c0_110] : memref<98x94xf32, #tpu.memory_space<vmem>>, vector<1x94xf32>
    %324 = vector.broadcast %323 : vector<1x94xf32> to vector<16x94xf32>
    %325 = arith.mulf %324, %322 : vector<16x94xf32>
    %326 = arith.addf %289, %325 : vector<16x94xf32>
    %c80 = arith.constant 80 : index
    %c0_111 = arith.constant 0 : index
    %327 = vector.load %arg2[%c80, %c0_111] : memref<98x94xf32, #tpu.memory_space<vmem>>, vector<1x94xf32>
    %328 = vector.broadcast %327 : vector<1x94xf32> to vector<16x94xf32>
    %329 = arith.mulf %328, %322 : vector<16x94xf32>
    %330 = arith.addf %293, %329 : vector<16x94xf32>
    %331 = vector.extract_strided_slice %294 {offsets = [0, 4], sizes = [16, 94], strides = [1, 1]} : vector<16x100xf32> to vector<16x94xf32>
    %c32 = arith.constant 32 : index
    %c0_112 = arith.constant 0 : index
    %332 = vector.load %arg2[%c32, %c0_112] : memref<98x94xf32, #tpu.memory_space<vmem>>, vector<1x94xf32>
    %333 = vector.broadcast %332 : vector<1x94xf32> to vector<16x94xf32>
    %334 = arith.mulf %333, %331 : vector<16x94xf32>
    %335 = arith.addf %299, %334 : vector<16x94xf32>
    %c81 = arith.constant 81 : index
    %c0_113 = arith.constant 0 : index
    %336 = vector.load %arg2[%c81, %c0_113] : memref<98x94xf32, #tpu.memory_space<vmem>>, vector<1x94xf32>
    %337 = vector.broadcast %336 : vector<1x94xf32> to vector<16x94xf32>
    %338 = arith.mulf %337, %331 : vector<16x94xf32>
    %339 = arith.addf %303, %338 : vector<16x94xf32>
    %340 = vector.extract_strided_slice %294 {offsets = [0, 5], sizes = [16, 94], strides = [1, 1]} : vector<16x100xf32> to vector<16x94xf32>
    %c33 = arith.constant 33 : index
    %c0_114 = arith.constant 0 : index
    %341 = vector.load %arg2[%c33, %c0_114] : memref<98x94xf32, #tpu.memory_space<vmem>>, vector<1x94xf32>
    %342 = vector.broadcast %341 : vector<1x94xf32> to vector<16x94xf32>
    %343 = arith.mulf %342, %340 : vector<16x94xf32>
    %344 = arith.addf %308, %343 : vector<16x94xf32>
    %c82 = arith.constant 82 : index
    %c0_115 = arith.constant 0 : index
    %345 = vector.load %arg2[%c82, %c0_115] : memref<98x94xf32, #tpu.memory_space<vmem>>, vector<1x94xf32>
    %346 = vector.broadcast %345 : vector<1x94xf32> to vector<16x94xf32>
    %347 = arith.mulf %346, %340 : vector<16x94xf32>
    %348 = arith.addf %312, %347 : vector<16x94xf32>
    %349 = vector.extract_strided_slice %294 {offsets = [0, 6], sizes = [16, 94], strides = [1, 1]} : vector<16x100xf32> to vector<16x94xf32>
    %c34 = arith.constant 34 : index
    %c0_116 = arith.constant 0 : index
    %350 = vector.load %arg2[%c34, %c0_116] : memref<98x94xf32, #tpu.memory_space<vmem>>, vector<1x94xf32>
    %351 = vector.broadcast %350 : vector<1x94xf32> to vector<16x94xf32>
    %352 = arith.mulf %351, %349 : vector<16x94xf32>
    %353 = arith.addf %317, %352 : vector<16x94xf32>
    %c83 = arith.constant 83 : index
    %c0_117 = arith.constant 0 : index
    %354 = vector.load %arg2[%c83, %c0_117] : memref<98x94xf32, #tpu.memory_space<vmem>>, vector<1x94xf32>
    %355 = vector.broadcast %354 : vector<1x94xf32> to vector<16x94xf32>
    %356 = arith.mulf %355, %349 : vector<16x94xf32>
    %357 = arith.addf %321, %356 : vector<16x94xf32>
    %c5_118 = arith.constant 5 : index
    %c0_119 = arith.constant 0 : index
    %358 = vector.load %arg11[%c5_118, %c0_119] : memref<22x100xf32, #tpu.memory_space<vmem>>, vector<16x100xf32>
    %359 = vector.extract_strided_slice %358 {offsets = [0, 0], sizes = [16, 94], strides = [1, 1]} : vector<16x100xf32> to vector<16x94xf32>
    %c35 = arith.constant 35 : index
    %c0_120 = arith.constant 0 : index
    %360 = vector.load %arg2[%c35, %c0_120] : memref<98x94xf32, #tpu.memory_space<vmem>>, vector<1x94xf32>
    %361 = vector.broadcast %360 : vector<1x94xf32> to vector<16x94xf32>
    %362 = arith.mulf %361, %359 : vector<16x94xf32>
    %363 = arith.addf %326, %362 : vector<16x94xf32>
    %c84 = arith.constant 84 : index
    %c0_121 = arith.constant 0 : index
    %364 = vector.load %arg2[%c84, %c0_121] : memref<98x94xf32, #tpu.memory_space<vmem>>, vector<1x94xf32>
    %365 = vector.broadcast %364 : vector<1x94xf32> to vector<16x94xf32>
    %366 = arith.mulf %365, %359 : vector<16x94xf32>
    %367 = arith.addf %330, %366 : vector<16x94xf32>
    %368 = vector.extract_strided_slice %358 {offsets = [0, 1], sizes = [16, 94], strides = [1, 1]} : vector<16x100xf32> to vector<16x94xf32>
    %c36 = arith.constant 36 : index
    %c0_122 = arith.constant 0 : index
    %369 = vector.load %arg2[%c36, %c0_122] : memref<98x94xf32, #tpu.memory_space<vmem>>, vector<1x94xf32>
    %370 = vector.broadcast %369 : vector<1x94xf32> to vector<16x94xf32>
    %371 = arith.mulf %370, %368 : vector<16x94xf32>
    %372 = arith.addf %335, %371 : vector<16x94xf32>
    %c85 = arith.constant 85 : index
    %c0_123 = arith.constant 0 : index
    %373 = vector.load %arg2[%c85, %c0_123] : memref<98x94xf32, #tpu.memory_space<vmem>>, vector<1x94xf32>
    %374 = vector.broadcast %373 : vector<1x94xf32> to vector<16x94xf32>
    %375 = arith.mulf %374, %368 : vector<16x94xf32>
    %376 = arith.addf %339, %375 : vector<16x94xf32>
    %377 = vector.extract_strided_slice %358 {offsets = [0, 2], sizes = [16, 94], strides = [1, 1]} : vector<16x100xf32> to vector<16x94xf32>
    %c37 = arith.constant 37 : index
    %c0_124 = arith.constant 0 : index
    %378 = vector.load %arg2[%c37, %c0_124] : memref<98x94xf32, #tpu.memory_space<vmem>>, vector<1x94xf32>
    %379 = vector.broadcast %378 : vector<1x94xf32> to vector<16x94xf32>
    %380 = arith.mulf %379, %377 : vector<16x94xf32>
    %381 = arith.addf %344, %380 : vector<16x94xf32>
    %c86 = arith.constant 86 : index
    %c0_125 = arith.constant 0 : index
    %382 = vector.load %arg2[%c86, %c0_125] : memref<98x94xf32, #tpu.memory_space<vmem>>, vector<1x94xf32>
    %383 = vector.broadcast %382 : vector<1x94xf32> to vector<16x94xf32>
    %384 = arith.mulf %383, %377 : vector<16x94xf32>
    %385 = arith.addf %348, %384 : vector<16x94xf32>
    %386 = vector.extract_strided_slice %358 {offsets = [0, 3], sizes = [16, 94], strides = [1, 1]} : vector<16x100xf32> to vector<16x94xf32>
    %c38 = arith.constant 38 : index
    %c0_126 = arith.constant 0 : index
    %387 = vector.load %arg2[%c38, %c0_126] : memref<98x94xf32, #tpu.memory_space<vmem>>, vector<1x94xf32>
    %388 = vector.broadcast %387 : vector<1x94xf32> to vector<16x94xf32>
    %389 = arith.mulf %388, %386 : vector<16x94xf32>
    %390 = arith.addf %353, %389 : vector<16x94xf32>
    %c87 = arith.constant 87 : index
    %c0_127 = arith.constant 0 : index
    %391 = vector.load %arg2[%c87, %c0_127] : memref<98x94xf32, #tpu.memory_space<vmem>>, vector<1x94xf32>
    %392 = vector.broadcast %391 : vector<1x94xf32> to vector<16x94xf32>
    %393 = arith.mulf %392, %386 : vector<16x94xf32>
    %394 = arith.addf %357, %393 : vector<16x94xf32>
    %395 = vector.extract_strided_slice %358 {offsets = [0, 4], sizes = [16, 94], strides = [1, 1]} : vector<16x100xf32> to vector<16x94xf32>
    %c39 = arith.constant 39 : index
    %c0_128 = arith.constant 0 : index
    %396 = vector.load %arg2[%c39, %c0_128] : memref<98x94xf32, #tpu.memory_space<vmem>>, vector<1x94xf32>
    %397 = vector.broadcast %396 : vector<1x94xf32> to vector<16x94xf32>
    %398 = arith.mulf %397, %395 : vector<16x94xf32>
    %399 = arith.addf %363, %398 : vector<16x94xf32>
    %c88 = arith.constant 88 : index
    %c0_129 = arith.constant 0 : index
    %400 = vector.load %arg2[%c88, %c0_129] : memref<98x94xf32, #tpu.memory_space<vmem>>, vector<1x94xf32>
    %401 = vector.broadcast %400 : vector<1x94xf32> to vector<16x94xf32>
    %402 = arith.mulf %401, %395 : vector<16x94xf32>
    %403 = arith.addf %367, %402 : vector<16x94xf32>
    %404 = vector.extract_strided_slice %358 {offsets = [0, 5], sizes = [16, 94], strides = [1, 1]} : vector<16x100xf32> to vector<16x94xf32>
    %c40 = arith.constant 40 : index
    %c0_130 = arith.constant 0 : index
    %405 = vector.load %arg2[%c40, %c0_130] : memref<98x94xf32, #tpu.memory_space<vmem>>, vector<1x94xf32>
    %406 = vector.broadcast %405 : vector<1x94xf32> to vector<16x94xf32>
    %407 = arith.mulf %406, %404 : vector<16x94xf32>
    %408 = arith.addf %372, %407 : vector<16x94xf32>
    %c89 = arith.constant 89 : index
    %c0_131 = arith.constant 0 : index
    %409 = vector.load %arg2[%c89, %c0_131] : memref<98x94xf32, #tpu.memory_space<vmem>>, vector<1x94xf32>
    %410 = vector.broadcast %409 : vector<1x94xf32> to vector<16x94xf32>
    %411 = arith.mulf %410, %404 : vector<16x94xf32>
    %412 = arith.addf %376, %411 : vector<16x94xf32>
    %413 = vector.extract_strided_slice %358 {offsets = [0, 6], sizes = [16, 94], strides = [1, 1]} : vector<16x100xf32> to vector<16x94xf32>
    %c41 = arith.constant 41 : index
    %c0_132 = arith.constant 0 : index
    %414 = vector.load %arg2[%c41, %c0_132] : memref<98x94xf32, #tpu.memory_space<vmem>>, vector<1x94xf32>
    %415 = vector.broadcast %414 : vector<1x94xf32> to vector<16x94xf32>
    %416 = arith.mulf %415, %413 : vector<16x94xf32>
    %417 = arith.addf %381, %416 : vector<16x94xf32>
    %c90 = arith.constant 90 : index
    %c0_133 = arith.constant 0 : index
    %418 = vector.load %arg2[%c90, %c0_133] : memref<98x94xf32, #tpu.memory_space<vmem>>, vector<1x94xf32>
    %419 = vector.broadcast %418 : vector<1x94xf32> to vector<16x94xf32>
    %420 = arith.mulf %419, %413 : vector<16x94xf32>
    %421 = arith.addf %385, %420 : vector<16x94xf32>
    %c6_134 = arith.constant 6 : index
    %c0_135 = arith.constant 0 : index
    %422 = vector.load %arg11[%c6_134, %c0_135] : memref<22x100xf32, #tpu.memory_space<vmem>>, vector<16x100xf32>
    %423 = vector.extract_strided_slice %422 {offsets = [0, 0], sizes = [16, 94], strides = [1, 1]} : vector<16x100xf32> to vector<16x94xf32>
    %c42 = arith.constant 42 : index
    %c0_136 = arith.constant 0 : index
    %424 = vector.load %arg2[%c42, %c0_136] : memref<98x94xf32, #tpu.memory_space<vmem>>, vector<1x94xf32>
    %425 = vector.broadcast %424 : vector<1x94xf32> to vector<16x94xf32>
    %426 = arith.mulf %425, %423 : vector<16x94xf32>
    %427 = arith.addf %390, %426 : vector<16x94xf32>
    %c91 = arith.constant 91 : index
    %c0_137 = arith.constant 0 : index
    %428 = vector.load %arg2[%c91, %c0_137] : memref<98x94xf32, #tpu.memory_space<vmem>>, vector<1x94xf32>
    %429 = vector.broadcast %428 : vector<1x94xf32> to vector<16x94xf32>
    %430 = arith.mulf %429, %423 : vector<16x94xf32>
    %431 = arith.addf %394, %430 : vector<16x94xf32>
    %432 = vector.extract_strided_slice %422 {offsets = [0, 1], sizes = [16, 94], strides = [1, 1]} : vector<16x100xf32> to vector<16x94xf32>
    %c43 = arith.constant 43 : index
    %c0_138 = arith.constant 0 : index
    %433 = vector.load %arg2[%c43, %c0_138] : memref<98x94xf32, #tpu.memory_space<vmem>>, vector<1x94xf32>
    %434 = vector.broadcast %433 : vector<1x94xf32> to vector<16x94xf32>
    %435 = arith.mulf %434, %432 : vector<16x94xf32>
    %436 = arith.addf %399, %435 : vector<16x94xf32>
    %c92 = arith.constant 92 : index
    %c0_139 = arith.constant 0 : index
    %437 = vector.load %arg2[%c92, %c0_139] : memref<98x94xf32, #tpu.memory_space<vmem>>, vector<1x94xf32>
    %438 = vector.broadcast %437 : vector<1x94xf32> to vector<16x94xf32>
    %439 = arith.mulf %438, %432 : vector<16x94xf32>
    %440 = arith.addf %403, %439 : vector<16x94xf32>
    %441 = vector.extract_strided_slice %422 {offsets = [0, 2], sizes = [16, 94], strides = [1, 1]} : vector<16x100xf32> to vector<16x94xf32>
    %c44 = arith.constant 44 : index
    %c0_140 = arith.constant 0 : index
    %442 = vector.load %arg2[%c44, %c0_140] : memref<98x94xf32, #tpu.memory_space<vmem>>, vector<1x94xf32>
    %443 = vector.broadcast %442 : vector<1x94xf32> to vector<16x94xf32>
    %444 = arith.mulf %443, %441 : vector<16x94xf32>
    %445 = arith.addf %408, %444 : vector<16x94xf32>
    %c93 = arith.constant 93 : index
    %c0_141 = arith.constant 0 : index
    %446 = vector.load %arg2[%c93, %c0_141] : memref<98x94xf32, #tpu.memory_space<vmem>>, vector<1x94xf32>
    %447 = vector.broadcast %446 : vector<1x94xf32> to vector<16x94xf32>
    %448 = arith.mulf %447, %441 : vector<16x94xf32>
    %449 = arith.addf %412, %448 : vector<16x94xf32>
    %450 = vector.extract_strided_slice %422 {offsets = [0, 3], sizes = [16, 94], strides = [1, 1]} : vector<16x100xf32> to vector<16x94xf32>
    %c45 = arith.constant 45 : index
    %c0_142 = arith.constant 0 : index
    %451 = vector.load %arg2[%c45, %c0_142] : memref<98x94xf32, #tpu.memory_space<vmem>>, vector<1x94xf32>
    %452 = vector.broadcast %451 : vector<1x94xf32> to vector<16x94xf32>
    %453 = arith.mulf %452, %450 : vector<16x94xf32>
    %454 = arith.addf %417, %453 : vector<16x94xf32>
    %c94 = arith.constant 94 : index
    %c0_143 = arith.constant 0 : index
    %455 = vector.load %arg2[%c94, %c0_143] : memref<98x94xf32, #tpu.memory_space<vmem>>, vector<1x94xf32>
    %456 = vector.broadcast %455 : vector<1x94xf32> to vector<16x94xf32>
    %457 = arith.mulf %456, %450 : vector<16x94xf32>
    %458 = arith.addf %421, %457 : vector<16x94xf32>
    %459 = vector.extract_strided_slice %422 {offsets = [0, 4], sizes = [16, 94], strides = [1, 1]} : vector<16x100xf32> to vector<16x94xf32>
    %c46 = arith.constant 46 : index
    %c0_144 = arith.constant 0 : index
    %460 = vector.load %arg2[%c46, %c0_144] : memref<98x94xf32, #tpu.memory_space<vmem>>, vector<1x94xf32>
    %461 = vector.broadcast %460 : vector<1x94xf32> to vector<16x94xf32>
    %462 = arith.mulf %461, %459 : vector<16x94xf32>
    %463 = arith.addf %427, %462 : vector<16x94xf32>
    %c95 = arith.constant 95 : index
    %c0_145 = arith.constant 0 : index
    %464 = vector.load %arg2[%c95, %c0_145] : memref<98x94xf32, #tpu.memory_space<vmem>>, vector<1x94xf32>
    %465 = vector.broadcast %464 : vector<1x94xf32> to vector<16x94xf32>
    %466 = arith.mulf %465, %459 : vector<16x94xf32>
    %467 = arith.addf %431, %466 : vector<16x94xf32>
    %468 = vector.extract_strided_slice %422 {offsets = [0, 5], sizes = [16, 94], strides = [1, 1]} : vector<16x100xf32> to vector<16x94xf32>
    %c47 = arith.constant 47 : index
    %c0_146 = arith.constant 0 : index
    %469 = vector.load %arg2[%c47, %c0_146] : memref<98x94xf32, #tpu.memory_space<vmem>>, vector<1x94xf32>
    %470 = vector.broadcast %469 : vector<1x94xf32> to vector<16x94xf32>
    %471 = arith.mulf %470, %468 : vector<16x94xf32>
    %472 = arith.addf %436, %471 : vector<16x94xf32>
    %c96 = arith.constant 96 : index
    %c0_147 = arith.constant 0 : index
    %473 = vector.load %arg2[%c96, %c0_147] : memref<98x94xf32, #tpu.memory_space<vmem>>, vector<1x94xf32>
    %474 = vector.broadcast %473 : vector<1x94xf32> to vector<16x94xf32>
    %475 = arith.mulf %474, %468 : vector<16x94xf32>
    %476 = arith.addf %440, %475 : vector<16x94xf32>
    %477 = vector.extract_strided_slice %422 {offsets = [0, 6], sizes = [16, 94], strides = [1, 1]} : vector<16x100xf32> to vector<16x94xf32>
    %c48 = arith.constant 48 : index
    %c0_148 = arith.constant 0 : index
    %478 = vector.load %arg2[%c48, %c0_148] : memref<98x94xf32, #tpu.memory_space<vmem>>, vector<1x94xf32>
    %479 = vector.broadcast %478 : vector<1x94xf32> to vector<16x94xf32>
    %480 = arith.mulf %479, %477 : vector<16x94xf32>
    %481 = arith.addf %445, %480 : vector<16x94xf32>
    %c97 = arith.constant 97 : index
    %c0_149 = arith.constant 0 : index
    %482 = vector.load %arg2[%c97, %c0_149] : memref<98x94xf32, #tpu.memory_space<vmem>>, vector<1x94xf32>
    %483 = vector.broadcast %482 : vector<1x94xf32> to vector<16x94xf32>
    %484 = arith.mulf %483, %477 : vector<16x94xf32>
    %485 = arith.addf %449, %484 : vector<16x94xf32>
    %486 = arith.addf %481, %454 : vector<16x94xf32>
    %487 = arith.addf %463, %472 : vector<16x94xf32>
    %488 = arith.addf %486, %487 : vector<16x94xf32>
    %489 = vector.extract_strided_slice %488 {offsets = [0, 0], sizes = [16, 44], strides = [1, 1]} : vector<16x94xf32> to vector<16x44xf32>
    %490 = vector.extract_strided_slice %488 {offsets = [0, 50], sizes = [16, 44], strides = [1, 1]} : vector<16x94xf32> to vector<16x44xf32>
    %491 = arith.addf %489, %490 : vector<16x44xf32>
    %c0_150 = arith.constant 0 : index
    %492 = memref.load %arg4[%c0_150] : memref<2xf32, #tpu.memory_space<smem>>
    %493 = vector.broadcast %492 : f32 to vector<16x44xf32>
    %494 = arith.mulf %491, %493 : vector<16x44xf32>
    %c0_151 = arith.constant 0 : index
    %495 = memref.load %arg5[%c0_151] : memref<2xf32, #tpu.memory_space<smem>>
    %496 = vector.broadcast %495 : f32 to vector<16x44xf32>
    %497 = arith.addf %494, %496 : vector<16x44xf32>
    %cst_152 = arith.constant 0.000000e+00 : f32
    %498 = vector.broadcast %cst_152 : f32 to vector<16x44xf32>
    %499 = arith.cmpf oge, %497, %498 : vector<16x44xf32>
    %cst_153 = arith.constant 3.000000e-01 : f32
    %500 = vector.broadcast %cst_153 : f32 to vector<16x44xf32>
    %501 = arith.mulf %500, %497 : vector<16x44xf32>
    %502 = arith.select %499, %497, %501 : vector<16x44xi1>, vector<16x44xf32>
    %503 = arith.addf %485, %458 : vector<16x94xf32>
    %504 = arith.addf %467, %476 : vector<16x94xf32>
    %505 = arith.addf %503, %504 : vector<16x94xf32>
    %506 = vector.extract_strided_slice %505 {offsets = [0, 0], sizes = [16, 44], strides = [1, 1]} : vector<16x94xf32> to vector<16x44xf32>
    %507 = vector.extract_strided_slice %505 {offsets = [0, 50], sizes = [16, 44], strides = [1, 1]} : vector<16x94xf32> to vector<16x44xf32>
    %508 = arith.addf %506, %507 : vector<16x44xf32>
    %c1_154 = arith.constant 1 : index
    %509 = memref.load %arg4[%c1_154] : memref<2xf32, #tpu.memory_space<smem>>
    %510 = vector.broadcast %509 : f32 to vector<16x44xf32>
    %511 = arith.mulf %508, %510 : vector<16x44xf32>
    %c1_155 = arith.constant 1 : index
    %512 = memref.load %arg5[%c1_155] : memref<2xf32, #tpu.memory_space<smem>>
    %513 = vector.broadcast %512 : f32 to vector<16x44xf32>
    %514 = arith.addf %511, %513 : vector<16x44xf32>
    %cst_156 = arith.constant 0.000000e+00 : f32
    %515 = vector.broadcast %cst_156 : f32 to vector<16x44xf32>
    %516 = arith.cmpf oge, %514, %515 : vector<16x44xf32>
    %cst_157 = arith.constant 3.000000e-01 : f32
    %517 = vector.broadcast %cst_157 : f32 to vector<16x44xf32>
    %518 = arith.mulf %517, %514 : vector<16x44xf32>
    %519 = arith.select %516, %514, %518 : vector<16x44xi1>, vector<16x44xf32>
    %520 = vector.extract_strided_slice %502 {offsets = [0, 3], sizes = [16, 16], strides = [1, 1]} : vector<16x44xf32> to vector<16x16xf32>
    %c3_158 = arith.constant 3 : index
    %c6_159 = arith.constant 6 : index
    %521 = vector.load %arg11[%c3_158, %c6_159] : memref<22x100xf32, #tpu.memory_space<vmem>>, vector<16x16xf32>
    tpu.vector_store %arg11[%c3_158, %c6_159], %520 {strides = array<i32>} : memref<22x100xf32, #tpu.memory_space<vmem>>, vector<16x16xf32>,
    %522 = vector.extract_strided_slice %502 {offsets = [0, 25], sizes = [16, 16], strides = [1, 1]} : vector<16x44xf32> to vector<16x16xf32>
    %c3_160 = arith.constant 3 : index
    %c28_161 = arith.constant 28 : index
    %523 = vector.load %arg11[%c3_160, %c28_161] : memref<22x100xf32, #tpu.memory_space<vmem>>, vector<16x16xf32>
    tpu.vector_store %arg11[%c3_160, %c28_161], %522 {strides = array<i32>} : memref<22x100xf32, #tpu.memory_space<vmem>>, vector<16x16xf32>,
    %524 = vector.extract_strided_slice %519 {offsets = [0, 3], sizes = [16, 16], strides = [1, 1]} : vector<16x44xf32> to vector<16x16xf32>
    %c3_162 = arith.constant 3 : index
    %c56_163 = arith.constant 56 : index
    %525 = vector.load %arg11[%c3_162, %c56_163] : memref<22x100xf32, #tpu.memory_space<vmem>>, vector<16x16xf32>
    tpu.vector_store %arg11[%c3_162, %c56_163], %524 {strides = array<i32>} : memref<22x100xf32, #tpu.memory_space<vmem>>, vector<16x16xf32>,
    %526 = vector.extract_strided_slice %519 {offsets = [0, 25], sizes = [16, 16], strides = [1, 1]} : vector<16x44xf32> to vector<16x16xf32>
    %c3_164 = arith.constant 3 : index
    %c78_165 = arith.constant 78 : index
    %527 = vector.load %arg11[%c3_164, %c78_165] : memref<22x100xf32, #tpu.memory_space<vmem>>, vector<16x16xf32>
    tpu.vector_store %arg11[%c3_164, %c78_165], %526 {strides = array<i32>} : memref<22x100xf32, #tpu.memory_space<vmem>>, vector<16x16xf32>,
    %cst_166 = arith.constant 0.000000e+00 : f32
    %528 = vector.broadcast %cst_166 : f32 to vector<16x94xf32>
    %cst_167 = arith.constant 0.000000e+00 : f32
    %529 = vector.broadcast %cst_167 : f32 to vector<16x94xf32>
    %cst_168 = arith.constant 0.000000e+00 : f32
    %530 = vector.broadcast %cst_168 : f32 to vector<16x94xf32>
    %cst_169 = arith.constant 0.000000e+00 : f32
    %531 = vector.broadcast %cst_169 : f32 to vector<16x94xf32>
    %cst_170 = arith.constant 0.000000e+00 : f32
    %532 = vector.broadcast %cst_170 : f32 to vector<16x94xf32>
    %cst_171 = arith.constant 0.000000e+00 : f32
    %533 = vector.broadcast %cst_171 : f32 to vector<16x94xf32>
    %cst_172 = arith.constant 0.000000e+00 : f32
    %534 = vector.broadcast %cst_172 : f32 to vector<16x94xf32>
    %cst_173 = arith.constant 0.000000e+00 : f32
    %535 = vector.broadcast %cst_173 : f32 to vector<16x94xf32>
    %c0_174 = arith.constant 0 : index
    %c0_175 = arith.constant 0 : index
    %536 = vector.load %arg11[%c0_174, %c0_175] : memref<22x100xf32, #tpu.memory_space<vmem>>, vector<16x100xf32>
    %537 = vector.extract_strided_slice %536 {offsets = [0, 0], sizes = [16, 94], strides = [1, 1]} : vector<16x100xf32> to vector<16x94xf32>
    %c0_176 = arith.constant 0 : index
    %c0_177 = arith.constant 0 : index
    %538 = vector.load %arg3[%c0_176, %c0_177] : memref<98x94xf32, #tpu.memory_space<vmem>>, vector<1x94xf32>
    %539 = vector.broadcast %538 : vector<1x94xf32> to vector<16x94xf32>
    %540 = arith.mulf %539, %537 : vector<16x94xf32>
    %541 = arith.addf %528, %540 : vector<16x94xf32>
    %c49_178 = arith.constant 49 : index
    %c0_179 = arith.constant 0 : index
    %542 = vector.load %arg3[%c49_178, %c0_179] : memref<98x94xf32, #tpu.memory_space<vmem>>, vector<1x94xf32>
    %543 = vector.broadcast %542 : vector<1x94xf32> to vector<16x94xf32>
    %544 = arith.mulf %543, %537 : vector<16x94xf32>
    %545 = arith.addf %532, %544 : vector<16x94xf32>
    %546 = vector.extract_strided_slice %536 {offsets = [0, 1], sizes = [16, 94], strides = [1, 1]} : vector<16x100xf32> to vector<16x94xf32>
    %c1_180 = arith.constant 1 : index
    %c0_181 = arith.constant 0 : index
    %547 = vector.load %arg3[%c1_180, %c0_181] : memref<98x94xf32, #tpu.memory_space<vmem>>, vector<1x94xf32>
    %548 = vector.broadcast %547 : vector<1x94xf32> to vector<16x94xf32>
    %549 = arith.mulf %548, %546 : vector<16x94xf32>
    %550 = arith.addf %529, %549 : vector<16x94xf32>
    %c50_182 = arith.constant 50 : index
    %c0_183 = arith.constant 0 : index
    %551 = vector.load %arg3[%c50_182, %c0_183] : memref<98x94xf32, #tpu.memory_space<vmem>>, vector<1x94xf32>
    %552 = vector.broadcast %551 : vector<1x94xf32> to vector<16x94xf32>
    %553 = arith.mulf %552, %546 : vector<16x94xf32>
    %554 = arith.addf %533, %553 : vector<16x94xf32>
    %555 = vector.extract_strided_slice %536 {offsets = [0, 2], sizes = [16, 94], strides = [1, 1]} : vector<16x100xf32> to vector<16x94xf32>
    %c2_184 = arith.constant 2 : index
    %c0_185 = arith.constant 0 : index
    %556 = vector.load %arg3[%c2_184, %c0_185] : memref<98x94xf32, #tpu.memory_space<vmem>>, vector<1x94xf32>
    %557 = vector.broadcast %556 : vector<1x94xf32> to vector<16x94xf32>
    %558 = arith.mulf %557, %555 : vector<16x94xf32>
    %559 = arith.addf %530, %558 : vector<16x94xf32>
    %c51_186 = arith.constant 51 : index
    %c0_187 = arith.constant 0 : index
    %560 = vector.load %arg3[%c51_186, %c0_187] : memref<98x94xf32, #tpu.memory_space<vmem>>, vector<1x94xf32>
    %561 = vector.broadcast %560 : vector<1x94xf32> to vector<16x94xf32>
    %562 = arith.mulf %561, %555 : vector<16x94xf32>
    %563 = arith.addf %534, %562 : vector<16x94xf32>
    %564 = vector.extract_strided_slice %536 {offsets = [0, 3], sizes = [16, 94], strides = [1, 1]} : vector<16x100xf32> to vector<16x94xf32>
    %c3_188 = arith.constant 3 : index
    %c0_189 = arith.constant 0 : index
    %565 = vector.load %arg3[%c3_188, %c0_189] : memref<98x94xf32, #tpu.memory_space<vmem>>, vector<1x94xf32>
    %566 = vector.broadcast %565 : vector<1x94xf32> to vector<16x94xf32>
    %567 = arith.mulf %566, %564 : vector<16x94xf32>
    %568 = arith.addf %531, %567 : vector<16x94xf32>
    %c52_190 = arith.constant 52 : index
    %c0_191 = arith.constant 0 : index
    %569 = vector.load %arg3[%c52_190, %c0_191] : memref<98x94xf32, #tpu.memory_space<vmem>>, vector<1x94xf32>
    %570 = vector.broadcast %569 : vector<1x94xf32> to vector<16x94xf32>
    %571 = arith.mulf %570, %564 : vector<16x94xf32>
    %572 = arith.addf %535, %571 : vector<16x94xf32>
    %573 = vector.extract_strided_slice %536 {offsets = [0, 4], sizes = [16, 94], strides = [1, 1]} : vector<16x100xf32> to vector<16x94xf32>
    %c4_192 = arith.constant 4 : index
    %c0_193 = arith.constant 0 : index
    %574 = vector.load %arg3[%c4_192, %c0_193] : memref<98x94xf32, #tpu.memory_space<vmem>>, vector<1x94xf32>
    %575 = vector.broadcast %574 : vector<1x94xf32> to vector<16x94xf32>
    %576 = arith.mulf %575, %573 : vector<16x94xf32>
    %577 = arith.addf %541, %576 : vector<16x94xf32>
    %c53_194 = arith.constant 53 : index
    %c0_195 = arith.constant 0 : index
    %578 = vector.load %arg3[%c53_194, %c0_195] : memref<98x94xf32, #tpu.memory_space<vmem>>, vector<1x94xf32>
    %579 = vector.broadcast %578 : vector<1x94xf32> to vector<16x94xf32>
    %580 = arith.mulf %579, %573 : vector<16x94xf32>
    %581 = arith.addf %545, %580 : vector<16x94xf32>
    %582 = vector.extract_strided_slice %536 {offsets = [0, 5], sizes = [16, 94], strides = [1, 1]} : vector<16x100xf32> to vector<16x94xf32>
    %c5_196 = arith.constant 5 : index
    %c0_197 = arith.constant 0 : index
    %583 = vector.load %arg3[%c5_196, %c0_197] : memref<98x94xf32, #tpu.memory_space<vmem>>, vector<1x94xf32>
    %584 = vector.broadcast %583 : vector<1x94xf32> to vector<16x94xf32>
    %585 = arith.mulf %584, %582 : vector<16x94xf32>
    %586 = arith.addf %550, %585 : vector<16x94xf32>
    %c54_198 = arith.constant 54 : index
    %c0_199 = arith.constant 0 : index
    %587 = vector.load %arg3[%c54_198, %c0_199] : memref<98x94xf32, #tpu.memory_space<vmem>>, vector<1x94xf32>
    %588 = vector.broadcast %587 : vector<1x94xf32> to vector<16x94xf32>
    %589 = arith.mulf %588, %582 : vector<16x94xf32>
    %590 = arith.addf %554, %589 : vector<16x94xf32>
    %591 = vector.extract_strided_slice %536 {offsets = [0, 6], sizes = [16, 94], strides = [1, 1]} : vector<16x100xf32> to vector<16x94xf32>
    %c6_200 = arith.constant 6 : index
    %c0_201 = arith.constant 0 : index
    %592 = vector.load %arg3[%c6_200, %c0_201] : memref<98x94xf32, #tpu.memory_space<vmem>>, vector<1x94xf32>
    %593 = vector.broadcast %592 : vector<1x94xf32> to vector<16x94xf32>
    %594 = arith.mulf %593, %591 : vector<16x94xf32>
    %595 = arith.addf %559, %594 : vector<16x94xf32>
    %c55_202 = arith.constant 55 : index
    %c0_203 = arith.constant 0 : index
    %596 = vector.load %arg3[%c55_202, %c0_203] : memref<98x94xf32, #tpu.memory_space<vmem>>, vector<1x94xf32>
    %597 = vector.broadcast %596 : vector<1x94xf32> to vector<16x94xf32>
    %598 = arith.mulf %597, %591 : vector<16x94xf32>
    %599 = arith.addf %563, %598 : vector<16x94xf32>
    %c1_204 = arith.constant 1 : index
    %c0_205 = arith.constant 0 : index
    %600 = vector.load %arg11[%c1_204, %c0_205] : memref<22x100xf32, #tpu.memory_space<vmem>>, vector<16x100xf32>
    %601 = vector.extract_strided_slice %600 {offsets = [0, 0], sizes = [16, 94], strides = [1, 1]} : vector<16x100xf32> to vector<16x94xf32>
    %c7_206 = arith.constant 7 : index
    %c0_207 = arith.constant 0 : index
    %602 = vector.load %arg3[%c7_206, %c0_207] : memref<98x94xf32, #tpu.memory_space<vmem>>, vector<1x94xf32>
    %603 = vector.broadcast %602 : vector<1x94xf32> to vector<16x94xf32>
    %604 = arith.mulf %603, %601 : vector<16x94xf32>
    %605 = arith.addf %568, %604 : vector<16x94xf32>
    %c56_208 = arith.constant 56 : index
    %c0_209 = arith.constant 0 : index
    %606 = vector.load %arg3[%c56_208, %c0_209] : memref<98x94xf32, #tpu.memory_space<vmem>>, vector<1x94xf32>
    %607 = vector.broadcast %606 : vector<1x94xf32> to vector<16x94xf32>
    %608 = arith.mulf %607, %601 : vector<16x94xf32>
    %609 = arith.addf %572, %608 : vector<16x94xf32>
    %610 = vector.extract_strided_slice %600 {offsets = [0, 1], sizes = [16, 94], strides = [1, 1]} : vector<16x100xf32> to vector<16x94xf32>
    %c8_210 = arith.constant 8 : index
    %c0_211 = arith.constant 0 : index
    %611 = vector.load %arg3[%c8_210, %c0_211] : memref<98x94xf32, #tpu.memory_space<vmem>>, vector<1x94xf32>
    %612 = vector.broadcast %611 : vector<1x94xf32> to vector<16x94xf32>
    %613 = arith.mulf %612, %610 : vector<16x94xf32>
    %614 = arith.addf %577, %613 : vector<16x94xf32>
    %c57_212 = arith.constant 57 : index
    %c0_213 = arith.constant 0 : index
    %615 = vector.load %arg3[%c57_212, %c0_213] : memref<98x94xf32, #tpu.memory_space<vmem>>, vector<1x94xf32>
    %616 = vector.broadcast %615 : vector<1x94xf32> to vector<16x94xf32>
    %617 = arith.mulf %616, %610 : vector<16x94xf32>
    %618 = arith.addf %581, %617 : vector<16x94xf32>
    %619 = vector.extract_strided_slice %600 {offsets = [0, 2], sizes = [16, 94], strides = [1, 1]} : vector<16x100xf32> to vector<16x94xf32>
    %c9_214 = arith.constant 9 : index
    %c0_215 = arith.constant 0 : index
    %620 = vector.load %arg3[%c9_214, %c0_215] : memref<98x94xf32, #tpu.memory_space<vmem>>, vector<1x94xf32>
    %621 = vector.broadcast %620 : vector<1x94xf32> to vector<16x94xf32>
    %622 = arith.mulf %621, %619 : vector<16x94xf32>
    %623 = arith.addf %586, %622 : vector<16x94xf32>
    %c58_216 = arith.constant 58 : index
    %c0_217 = arith.constant 0 : index
    %624 = vector.load %arg3[%c58_216, %c0_217] : memref<98x94xf32, #tpu.memory_space<vmem>>, vector<1x94xf32>
    %625 = vector.broadcast %624 : vector<1x94xf32> to vector<16x94xf32>
    %626 = arith.mulf %625, %619 : vector<16x94xf32>
    %627 = arith.addf %590, %626 : vector<16x94xf32>
    %628 = vector.extract_strided_slice %600 {offsets = [0, 3], sizes = [16, 94], strides = [1, 1]} : vector<16x100xf32> to vector<16x94xf32>
    %c10_218 = arith.constant 10 : index
    %c0_219 = arith.constant 0 : index
    %629 = vector.load %arg3[%c10_218, %c0_219] : memref<98x94xf32, #tpu.memory_space<vmem>>, vector<1x94xf32>
    %630 = vector.broadcast %629 : vector<1x94xf32> to vector<16x94xf32>
    %631 = arith.mulf %630, %628 : vector<16x94xf32>
    %632 = arith.addf %595, %631 : vector<16x94xf32>
    %c59_220 = arith.constant 59 : index
    %c0_221 = arith.constant 0 : index
    %633 = vector.load %arg3[%c59_220, %c0_221] : memref<98x94xf32, #tpu.memory_space<vmem>>, vector<1x94xf32>
    %634 = vector.broadcast %633 : vector<1x94xf32> to vector<16x94xf32>
    %635 = arith.mulf %634, %628 : vector<16x94xf32>
    %636 = arith.addf %599, %635 : vector<16x94xf32>
    %637 = vector.extract_strided_slice %600 {offsets = [0, 4], sizes = [16, 94], strides = [1, 1]} : vector<16x100xf32> to vector<16x94xf32>
    %c11_222 = arith.constant 11 : index
    %c0_223 = arith.constant 0 : index
    %638 = vector.load %arg3[%c11_222, %c0_223] : memref<98x94xf32, #tpu.memory_space<vmem>>, vector<1x94xf32>
    %639 = vector.broadcast %638 : vector<1x94xf32> to vector<16x94xf32>
    %640 = arith.mulf %639, %637 : vector<16x94xf32>
    %641 = arith.addf %605, %640 : vector<16x94xf32>
    %c60_224 = arith.constant 60 : index
    %c0_225 = arith.constant 0 : index
    %642 = vector.load %arg3[%c60_224, %c0_225] : memref<98x94xf32, #tpu.memory_space<vmem>>, vector<1x94xf32>
    %643 = vector.broadcast %642 : vector<1x94xf32> to vector<16x94xf32>
    %644 = arith.mulf %643, %637 : vector<16x94xf32>
    %645 = arith.addf %609, %644 : vector<16x94xf32>
    %646 = vector.extract_strided_slice %600 {offsets = [0, 5], sizes = [16, 94], strides = [1, 1]} : vector<16x100xf32> to vector<16x94xf32>
    %c12_226 = arith.constant 12 : index
    %c0_227 = arith.constant 0 : index
    %647 = vector.load %arg3[%c12_226, %c0_227] : memref<98x94xf32, #tpu.memory_space<vmem>>, vector<1x94xf32>
    %648 = vector.broadcast %647 : vector<1x94xf32> to vector<16x94xf32>
    %649 = arith.mulf %648, %646 : vector<16x94xf32>
    %650 = arith.addf %614, %649 : vector<16x94xf32>
    %c61_228 = arith.constant 61 : index
    %c0_229 = arith.constant 0 : index
    %651 = vector.load %arg3[%c61_228, %c0_229] : memref<98x94xf32, #tpu.memory_space<vmem>>, vector<1x94xf32>
    %652 = vector.broadcast %651 : vector<1x94xf32> to vector<16x94xf32>
    %653 = arith.mulf %652, %646 : vector<16x94xf32>
    %654 = arith.addf %618, %653 : vector<16x94xf32>
    %655 = vector.extract_strided_slice %600 {offsets = [0, 6], sizes = [16, 94], strides = [1, 1]} : vector<16x100xf32> to vector<16x94xf32>
    %c13_230 = arith.constant 13 : index
    %c0_231 = arith.constant 0 : index
    %656 = vector.load %arg3[%c13_230, %c0_231] : memref<98x94xf32, #tpu.memory_space<vmem>>, vector<1x94xf32>
    %657 = vector.broadcast %656 : vector<1x94xf32> to vector<16x94xf32>
    %658 = arith.mulf %657, %655 : vector<16x94xf32>
    %659 = arith.addf %623, %658 : vector<16x94xf32>
    %c62_232 = arith.constant 62 : index
    %c0_233 = arith.constant 0 : index
    %660 = vector.load %arg3[%c62_232, %c0_233] : memref<98x94xf32, #tpu.memory_space<vmem>>, vector<1x94xf32>
    %661 = vector.broadcast %660 : vector<1x94xf32> to vector<16x94xf32>
    %662 = arith.mulf %661, %655 : vector<16x94xf32>
    %663 = arith.addf %627, %662 : vector<16x94xf32>
    %c2_234 = arith.constant 2 : index
    %c0_235 = arith.constant 0 : index
    %664 = vector.load %arg11[%c2_234, %c0_235] : memref<22x100xf32, #tpu.memory_space<vmem>>, vector<16x100xf32>
    %665 = vector.extract_strided_slice %664 {offsets = [0, 0], sizes = [16, 94], strides = [1, 1]} : vector<16x100xf32> to vector<16x94xf32>
    %c14_236 = arith.constant 14 : index
    %c0_237 = arith.constant 0 : index
    %666 = vector.load %arg3[%c14_236, %c0_237] : memref<98x94xf32, #tpu.memory_space<vmem>>, vector<1x94xf32>
    %667 = vector.broadcast %666 : vector<1x94xf32> to vector<16x94xf32>
    %668 = arith.mulf %667, %665 : vector<16x94xf32>
    %669 = arith.addf %632, %668 : vector<16x94xf32>
    %c63_238 = arith.constant 63 : index
    %c0_239 = arith.constant 0 : index
    %670 = vector.load %arg3[%c63_238, %c0_239] : memref<98x94xf32, #tpu.memory_space<vmem>>, vector<1x94xf32>
    %671 = vector.broadcast %670 : vector<1x94xf32> to vector<16x94xf32>
    %672 = arith.mulf %671, %665 : vector<16x94xf32>
    %673 = arith.addf %636, %672 : vector<16x94xf32>
    %674 = vector.extract_strided_slice %664 {offsets = [0, 1], sizes = [16, 94], strides = [1, 1]} : vector<16x100xf32> to vector<16x94xf32>
    %c15_240 = arith.constant 15 : index
    %c0_241 = arith.constant 0 : index
    %675 = vector.load %arg3[%c15_240, %c0_241] : memref<98x94xf32, #tpu.memory_space<vmem>>, vector<1x94xf32>
    %676 = vector.broadcast %675 : vector<1x94xf32> to vector<16x94xf32>
    %677 = arith.mulf %676, %674 : vector<16x94xf32>
    %678 = arith.addf %641, %677 : vector<16x94xf32>
    %c64_242 = arith.constant 64 : index
    %c0_243 = arith.constant 0 : index
    %679 = vector.load %arg3[%c64_242, %c0_243] : memref<98x94xf32, #tpu.memory_space<vmem>>, vector<1x94xf32>
    %680 = vector.broadcast %679 : vector<1x94xf32> to vector<16x94xf32>
    %681 = arith.mulf %680, %674 : vector<16x94xf32>
    %682 = arith.addf %645, %681 : vector<16x94xf32>
    %683 = vector.extract_strided_slice %664 {offsets = [0, 2], sizes = [16, 94], strides = [1, 1]} : vector<16x100xf32> to vector<16x94xf32>
    %c16_244 = arith.constant 16 : index
    %c0_245 = arith.constant 0 : index
    %684 = vector.load %arg3[%c16_244, %c0_245] : memref<98x94xf32, #tpu.memory_space<vmem>>, vector<1x94xf32>
    %685 = vector.broadcast %684 : vector<1x94xf32> to vector<16x94xf32>
    %686 = arith.mulf %685, %683 : vector<16x94xf32>
    %687 = arith.addf %650, %686 : vector<16x94xf32>
    %c65_246 = arith.constant 65 : index
    %c0_247 = arith.constant 0 : index
    %688 = vector.load %arg3[%c65_246, %c0_247] : memref<98x94xf32, #tpu.memory_space<vmem>>, vector<1x94xf32>
    %689 = vector.broadcast %688 : vector<1x94xf32> to vector<16x94xf32>
    %690 = arith.mulf %689, %683 : vector<16x94xf32>
    %691 = arith.addf %654, %690 : vector<16x94xf32>
    %692 = vector.extract_strided_slice %664 {offsets = [0, 3], sizes = [16, 94], strides = [1, 1]} : vector<16x100xf32> to vector<16x94xf32>
    %c17_248 = arith.constant 17 : index
    %c0_249 = arith.constant 0 : index
    %693 = vector.load %arg3[%c17_248, %c0_249] : memref<98x94xf32, #tpu.memory_space<vmem>>, vector<1x94xf32>
    %694 = vector.broadcast %693 : vector<1x94xf32> to vector<16x94xf32>
    %695 = arith.mulf %694, %692 : vector<16x94xf32>
    %696 = arith.addf %659, %695 : vector<16x94xf32>
    %c66_250 = arith.constant 66 : index
    %c0_251 = arith.constant 0 : index
    %697 = vector.load %arg3[%c66_250, %c0_251] : memref<98x94xf32, #tpu.memory_space<vmem>>, vector<1x94xf32>
    %698 = vector.broadcast %697 : vector<1x94xf32> to vector<16x94xf32>
    %699 = arith.mulf %698, %692 : vector<16x94xf32>
    %700 = arith.addf %663, %699 : vector<16x94xf32>
    %701 = vector.extract_strided_slice %664 {offsets = [0, 4], sizes = [16, 94], strides = [1, 1]} : vector<16x100xf32> to vector<16x94xf32>
    %c18_252 = arith.constant 18 : index
    %c0_253 = arith.constant 0 : index
    %702 = vector.load %arg3[%c18_252, %c0_253] : memref<98x94xf32, #tpu.memory_space<vmem>>, vector<1x94xf32>
    %703 = vector.broadcast %702 : vector<1x94xf32> to vector<16x94xf32>
    %704 = arith.mulf %703, %701 : vector<16x94xf32>
    %705 = arith.addf %669, %704 : vector<16x94xf32>
    %c67_254 = arith.constant 67 : index
    %c0_255 = arith.constant 0 : index
    %706 = vector.load %arg3[%c67_254, %c0_255] : memref<98x94xf32, #tpu.memory_space<vmem>>, vector<1x94xf32>
    %707 = vector.broadcast %706 : vector<1x94xf32> to vector<16x94xf32>
    %708 = arith.mulf %707, %701 : vector<16x94xf32>
    %709 = arith.addf %673, %708 : vector<16x94xf32>
    %710 = vector.extract_strided_slice %664 {offsets = [0, 5], sizes = [16, 94], strides = [1, 1]} : vector<16x100xf32> to vector<16x94xf32>
    %c19_256 = arith.constant 19 : index
    %c0_257 = arith.constant 0 : index
    %711 = vector.load %arg3[%c19_256, %c0_257] : memref<98x94xf32, #tpu.memory_space<vmem>>, vector<1x94xf32>
    %712 = vector.broadcast %711 : vector<1x94xf32> to vector<16x94xf32>
    %713 = arith.mulf %712, %710 : vector<16x94xf32>
    %714 = arith.addf %678, %713 : vector<16x94xf32>
    %c68_258 = arith.constant 68 : index
    %c0_259 = arith.constant 0 : index
    %715 = vector.load %arg3[%c68_258, %c0_259] : memref<98x94xf32, #tpu.memory_space<vmem>>, vector<1x94xf32>
    %716 = vector.broadcast %715 : vector<1x94xf32> to vector<16x94xf32>
    %717 = arith.mulf %716, %710 : vector<16x94xf32>
    %718 = arith.addf %682, %717 : vector<16x94xf32>
    %719 = vector.extract_strided_slice %664 {offsets = [0, 6], sizes = [16, 94], strides = [1, 1]} : vector<16x100xf32> to vector<16x94xf32>
    %c20_260 = arith.constant 20 : index
    %c0_261 = arith.constant 0 : index
    %720 = vector.load %arg3[%c20_260, %c0_261] : memref<98x94xf32, #tpu.memory_space<vmem>>, vector<1x94xf32>
    %721 = vector.broadcast %720 : vector<1x94xf32> to vector<16x94xf32>
    %722 = arith.mulf %721, %719 : vector<16x94xf32>
    %723 = arith.addf %687, %722 : vector<16x94xf32>
    %c69_262 = arith.constant 69 : index
    %c0_263 = arith.constant 0 : index
    %724 = vector.load %arg3[%c69_262, %c0_263] : memref<98x94xf32, #tpu.memory_space<vmem>>, vector<1x94xf32>
    %725 = vector.broadcast %724 : vector<1x94xf32> to vector<16x94xf32>
    %726 = arith.mulf %725, %719 : vector<16x94xf32>
    %727 = arith.addf %691, %726 : vector<16x94xf32>
    %c3_264 = arith.constant 3 : index
    %c0_265 = arith.constant 0 : index
    %728 = vector.load %arg11[%c3_264, %c0_265] : memref<22x100xf32, #tpu.memory_space<vmem>>, vector<16x100xf32>
    %729 = vector.extract_strided_slice %728 {offsets = [0, 0], sizes = [16, 94], strides = [1, 1]} : vector<16x100xf32> to vector<16x94xf32>
    %c21_266 = arith.constant 21 : index
    %c0_267 = arith.constant 0 : index
    %730 = vector.load %arg3[%c21_266, %c0_267] : memref<98x94xf32, #tpu.memory_space<vmem>>, vector<1x94xf32>
    %731 = vector.broadcast %730 : vector<1x94xf32> to vector<16x94xf32>
    %732 = arith.mulf %731, %729 : vector<16x94xf32>
    %733 = arith.addf %696, %732 : vector<16x94xf32>
    %c70_268 = arith.constant 70 : index
    %c0_269 = arith.constant 0 : index
    %734 = vector.load %arg3[%c70_268, %c0_269] : memref<98x94xf32, #tpu.memory_space<vmem>>, vector<1x94xf32>
    %735 = vector.broadcast %734 : vector<1x94xf32> to vector<16x94xf32>
    %736 = arith.mulf %735, %729 : vector<16x94xf32>
    %737 = arith.addf %700, %736 : vector<16x94xf32>
    %738 = vector.extract_strided_slice %728 {offsets = [0, 1], sizes = [16, 94], strides = [1, 1]} : vector<16x100xf32> to vector<16x94xf32>
    %c22_270 = arith.constant 22 : index
    %c0_271 = arith.constant 0 : index
    %739 = vector.load %arg3[%c22_270, %c0_271] : memref<98x94xf32, #tpu.memory_space<vmem>>, vector<1x94xf32>
    %740 = vector.broadcast %739 : vector<1x94xf32> to vector<16x94xf32>
    %741 = arith.mulf %740, %738 : vector<16x94xf32>
    %742 = arith.addf %705, %741 : vector<16x94xf32>
    %c71_272 = arith.constant 71 : index
    %c0_273 = arith.constant 0 : index
    %743 = vector.load %arg3[%c71_272, %c0_273] : memref<98x94xf32, #tpu.memory_space<vmem>>, vector<1x94xf32>
    %744 = vector.broadcast %743 : vector<1x94xf32> to vector<16x94xf32>
    %745 = arith.mulf %744, %738 : vector<16x94xf32>
    %746 = arith.addf %709, %745 : vector<16x94xf32>
    %747 = vector.extract_strided_slice %728 {offsets = [0, 2], sizes = [16, 94], strides = [1, 1]} : vector<16x100xf32> to vector<16x94xf32>
    %c23_274 = arith.constant 23 : index
    %c0_275 = arith.constant 0 : index
    %748 = vector.load %arg3[%c23_274, %c0_275] : memref<98x94xf32, #tpu.memory_space<vmem>>, vector<1x94xf32>
    %749 = vector.broadcast %748 : vector<1x94xf32> to vector<16x94xf32>
    %750 = arith.mulf %749, %747 : vector<16x94xf32>
    %751 = arith.addf %714, %750 : vector<16x94xf32>
    %c72_276 = arith.constant 72 : index
    %c0_277 = arith.constant 0 : index
    %752 = vector.load %arg3[%c72_276, %c0_277] : memref<98x94xf32, #tpu.memory_space<vmem>>, vector<1x94xf32>
    %753 = vector.broadcast %752 : vector<1x94xf32> to vector<16x94xf32>
    %754 = arith.mulf %753, %747 : vector<16x94xf32>
    %755 = arith.addf %718, %754 : vector<16x94xf32>
    %756 = vector.extract_strided_slice %728 {offsets = [0, 3], sizes = [16, 94], strides = [1, 1]} : vector<16x100xf32> to vector<16x94xf32>
    %c24_278 = arith.constant 24 : index
    %c0_279 = arith.constant 0 : index
    %757 = vector.load %arg3[%c24_278, %c0_279] : memref<98x94xf32, #tpu.memory_space<vmem>>, vector<1x94xf32>
    %758 = vector.broadcast %757 : vector<1x94xf32> to vector<16x94xf32>
    %759 = arith.mulf %758, %756 : vector<16x94xf32>
    %760 = arith.addf %723, %759 : vector<16x94xf32>
    %c73_280 = arith.constant 73 : index
    %c0_281 = arith.constant 0 : index
    %761 = vector.load %arg3[%c73_280, %c0_281] : memref<98x94xf32, #tpu.memory_space<vmem>>, vector<1x94xf32>
    %762 = vector.broadcast %761 : vector<1x94xf32> to vector<16x94xf32>
    %763 = arith.mulf %762, %756 : vector<16x94xf32>
    %764 = arith.addf %727, %763 : vector<16x94xf32>
    %765 = vector.extract_strided_slice %728 {offsets = [0, 4], sizes = [16, 94], strides = [1, 1]} : vector<16x100xf32> to vector<16x94xf32>
    %c25_282 = arith.constant 25 : index
    %c0_283 = arith.constant 0 : index
    %766 = vector.load %arg3[%c25_282, %c0_283] : memref<98x94xf32, #tpu.memory_space<vmem>>, vector<1x94xf32>
    %767 = vector.broadcast %766 : vector<1x94xf32> to vector<16x94xf32>
    %768 = arith.mulf %767, %765 : vector<16x94xf32>
    %769 = arith.addf %733, %768 : vector<16x94xf32>
    %c74_284 = arith.constant 74 : index
    %c0_285 = arith.constant 0 : index
    %770 = vector.load %arg3[%c74_284, %c0_285] : memref<98x94xf32, #tpu.memory_space<vmem>>, vector<1x94xf32>
    %771 = vector.broadcast %770 : vector<1x94xf32> to vector<16x94xf32>
    %772 = arith.mulf %771, %765 : vector<16x94xf32>
    %773 = arith.addf %737, %772 : vector<16x94xf32>
    %774 = vector.extract_strided_slice %728 {offsets = [0, 5], sizes = [16, 94], strides = [1, 1]} : vector<16x100xf32> to vector<16x94xf32>
    %c26_286 = arith.constant 26 : index
    %c0_287 = arith.constant 0 : index
    %775 = vector.load %arg3[%c26_286, %c0_287] : memref<98x94xf32, #tpu.memory_space<vmem>>, vector<1x94xf32>
    %776 = vector.broadcast %775 : vector<1x94xf32> to vector<16x94xf32>
    %777 = arith.mulf %776, %774 : vector<16x94xf32>
    %778 = arith.addf %742, %777 : vector<16x94xf32>
    %c75_288 = arith.constant 75 : index
    %c0_289 = arith.constant 0 : index
    %779 = vector.load %arg3[%c75_288, %c0_289] : memref<98x94xf32, #tpu.memory_space<vmem>>, vector<1x94xf32>
    %780 = vector.broadcast %779 : vector<1x94xf32> to vector<16x94xf32>
    %781 = arith.mulf %780, %774 : vector<16x94xf32>
    %782 = arith.addf %746, %781 : vector<16x94xf32>
    %783 = vector.extract_strided_slice %728 {offsets = [0, 6], sizes = [16, 94], strides = [1, 1]} : vector<16x100xf32> to vector<16x94xf32>
    %c27_290 = arith.constant 27 : index
    %c0_291 = arith.constant 0 : index
    %784 = vector.load %arg3[%c27_290, %c0_291] : memref<98x94xf32, #tpu.memory_space<vmem>>, vector<1x94xf32>
    %785 = vector.broadcast %784 : vector<1x94xf32> to vector<16x94xf32>
    %786 = arith.mulf %785, %783 : vector<16x94xf32>
    %787 = arith.addf %751, %786 : vector<16x94xf32>
    %c76_292 = arith.constant 76 : index
    %c0_293 = arith.constant 0 : index
    %788 = vector.load %arg3[%c76_292, %c0_293] : memref<98x94xf32, #tpu.memory_space<vmem>>, vector<1x94xf32>
    %789 = vector.broadcast %788 : vector<1x94xf32> to vector<16x94xf32>
    %790 = arith.mulf %789, %783 : vector<16x94xf32>
    %791 = arith.addf %755, %790 : vector<16x94xf32>
    %c4_294 = arith.constant 4 : index
    %c0_295 = arith.constant 0 : index
    %792 = vector.load %arg11[%c4_294, %c0_295] : memref<22x100xf32, #tpu.memory_space<vmem>>, vector<16x100xf32>
    %793 = vector.extract_strided_slice %792 {offsets = [0, 0], sizes = [16, 94], strides = [1, 1]} : vector<16x100xf32> to vector<16x94xf32>
    %c28_296 = arith.constant 28 : index
    %c0_297 = arith.constant 0 : index
    %794 = vector.load %arg3[%c28_296, %c0_297] : memref<98x94xf32, #tpu.memory_space<vmem>>, vector<1x94xf32>
    %795 = vector.broadcast %794 : vector<1x94xf32> to vector<16x94xf32>
    %796 = arith.mulf %795, %793 : vector<16x94xf32>
    %797 = arith.addf %760, %796 : vector<16x94xf32>
    %c77_298 = arith.constant 77 : index
    %c0_299 = arith.constant 0 : index
    %798 = vector.load %arg3[%c77_298, %c0_299] : memref<98x94xf32, #tpu.memory_space<vmem>>, vector<1x94xf32>
    %799 = vector.broadcast %798 : vector<1x94xf32> to vector<16x94xf32>
    %800 = arith.mulf %799, %793 : vector<16x94xf32>
    %801 = arith.addf %764, %800 : vector<16x94xf32>
    %802 = vector.extract_strided_slice %792 {offsets = [0, 1], sizes = [16, 94], strides = [1, 1]} : vector<16x100xf32> to vector<16x94xf32>
    %c29_300 = arith.constant 29 : index
    %c0_301 = arith.constant 0 : index
    %803 = vector.load %arg3[%c29_300, %c0_301] : memref<98x94xf32, #tpu.memory_space<vmem>>, vector<1x94xf32>
    %804 = vector.broadcast %803 : vector<1x94xf32> to vector<16x94xf32>
    %805 = arith.mulf %804, %802 : vector<16x94xf32>
    %806 = arith.addf %769, %805 : vector<16x94xf32>
    %c78_302 = arith.constant 78 : index
    %c0_303 = arith.constant 0 : index
    %807 = vector.load %arg3[%c78_302, %c0_303] : memref<98x94xf32, #tpu.memory_space<vmem>>, vector<1x94xf32>
    %808 = vector.broadcast %807 : vector<1x94xf32> to vector<16x94xf32>
    %809 = arith.mulf %808, %802 : vector<16x94xf32>
    %810 = arith.addf %773, %809 : vector<16x94xf32>
    %811 = vector.extract_strided_slice %792 {offsets = [0, 2], sizes = [16, 94], strides = [1, 1]} : vector<16x100xf32> to vector<16x94xf32>
    %c30_304 = arith.constant 30 : index
    %c0_305 = arith.constant 0 : index
    %812 = vector.load %arg3[%c30_304, %c0_305] : memref<98x94xf32, #tpu.memory_space<vmem>>, vector<1x94xf32>
    %813 = vector.broadcast %812 : vector<1x94xf32> to vector<16x94xf32>
    %814 = arith.mulf %813, %811 : vector<16x94xf32>
    %815 = arith.addf %778, %814 : vector<16x94xf32>
    %c79_306 = arith.constant 79 : index
    %c0_307 = arith.constant 0 : index
    %816 = vector.load %arg3[%c79_306, %c0_307] : memref<98x94xf32, #tpu.memory_space<vmem>>, vector<1x94xf32>
    %817 = vector.broadcast %816 : vector<1x94xf32> to vector<16x94xf32>
    %818 = arith.mulf %817, %811 : vector<16x94xf32>
    %819 = arith.addf %782, %818 : vector<16x94xf32>
    %820 = vector.extract_strided_slice %792 {offsets = [0, 3], sizes = [16, 94], strides = [1, 1]} : vector<16x100xf32> to vector<16x94xf32>
    %c31_308 = arith.constant 31 : index
    %c0_309 = arith.constant 0 : index
    %821 = vector.load %arg3[%c31_308, %c0_309] : memref<98x94xf32, #tpu.memory_space<vmem>>, vector<1x94xf32>
    %822 = vector.broadcast %821 : vector<1x94xf32> to vector<16x94xf32>
    %823 = arith.mulf %822, %820 : vector<16x94xf32>
    %824 = arith.addf %787, %823 : vector<16x94xf32>
    %c80_310 = arith.constant 80 : index
    %c0_311 = arith.constant 0 : index
    %825 = vector.load %arg3[%c80_310, %c0_311] : memref<98x94xf32, #tpu.memory_space<vmem>>, vector<1x94xf32>
    %826 = vector.broadcast %825 : vector<1x94xf32> to vector<16x94xf32>
    %827 = arith.mulf %826, %820 : vector<16x94xf32>
    %828 = arith.addf %791, %827 : vector<16x94xf32>
    %829 = vector.extract_strided_slice %792 {offsets = [0, 4], sizes = [16, 94], strides = [1, 1]} : vector<16x100xf32> to vector<16x94xf32>
    %c32_312 = arith.constant 32 : index
    %c0_313 = arith.constant 0 : index
    %830 = vector.load %arg3[%c32_312, %c0_313] : memref<98x94xf32, #tpu.memory_space<vmem>>, vector<1x94xf32>
    %831 = vector.broadcast %830 : vector<1x94xf32> to vector<16x94xf32>
    %832 = arith.mulf %831, %829 : vector<16x94xf32>
    %833 = arith.addf %797, %832 : vector<16x94xf32>
    %c81_314 = arith.constant 81 : index
    %c0_315 = arith.constant 0 : index
    %834 = vector.load %arg3[%c81_314, %c0_315] : memref<98x94xf32, #tpu.memory_space<vmem>>, vector<1x94xf32>
    %835 = vector.broadcast %834 : vector<1x94xf32> to vector<16x94xf32>
    %836 = arith.mulf %835, %829 : vector<16x94xf32>
    %837 = arith.addf %801, %836 : vector<16x94xf32>
    %838 = vector.extract_strided_slice %792 {offsets = [0, 5], sizes = [16, 94], strides = [1, 1]} : vector<16x100xf32> to vector<16x94xf32>
    %c33_316 = arith.constant 33 : index
    %c0_317 = arith.constant 0 : index
    %839 = vector.load %arg3[%c33_316, %c0_317] : memref<98x94xf32, #tpu.memory_space<vmem>>, vector<1x94xf32>
    %840 = vector.broadcast %839 : vector<1x94xf32> to vector<16x94xf32>
    %841 = arith.mulf %840, %838 : vector<16x94xf32>
    %842 = arith.addf %806, %841 : vector<16x94xf32>
    %c82_318 = arith.constant 82 : index
    %c0_319 = arith.constant 0 : index
    %843 = vector.load %arg3[%c82_318, %c0_319] : memref<98x94xf32, #tpu.memory_space<vmem>>, vector<1x94xf32>
    %844 = vector.broadcast %843 : vector<1x94xf32> to vector<16x94xf32>
    %845 = arith.mulf %844, %838 : vector<16x94xf32>
    %846 = arith.addf %810, %845 : vector<16x94xf32>
    %847 = vector.extract_strided_slice %792 {offsets = [0, 6], sizes = [16, 94], strides = [1, 1]} : vector<16x100xf32> to vector<16x94xf32>
    %c34_320 = arith.constant 34 : index
    %c0_321 = arith.constant 0 : index
    %848 = vector.load %arg3[%c34_320, %c0_321] : memref<98x94xf32, #tpu.memory_space<vmem>>, vector<1x94xf32>
    %849 = vector.broadcast %848 : vector<1x94xf32> to vector<16x94xf32>
    %850 = arith.mulf %849, %847 : vector<16x94xf32>
    %851 = arith.addf %815, %850 : vector<16x94xf32>
    %c83_322 = arith.constant 83 : index
    %c0_323 = arith.constant 0 : index
    %852 = vector.load %arg3[%c83_322, %c0_323] : memref<98x94xf32, #tpu.memory_space<vmem>>, vector<1x94xf32>
    %853 = vector.broadcast %852 : vector<1x94xf32> to vector<16x94xf32>
    %854 = arith.mulf %853, %847 : vector<16x94xf32>
    %855 = arith.addf %819, %854 : vector<16x94xf32>
    %c5_324 = arith.constant 5 : index
    %c0_325 = arith.constant 0 : index
    %856 = vector.load %arg11[%c5_324, %c0_325] : memref<22x100xf32, #tpu.memory_space<vmem>>, vector<16x100xf32>
    %857 = vector.extract_strided_slice %856 {offsets = [0, 0], sizes = [16, 94], strides = [1, 1]} : vector<16x100xf32> to vector<16x94xf32>
    %c35_326 = arith.constant 35 : index
    %c0_327 = arith.constant 0 : index
    %858 = vector.load %arg3[%c35_326, %c0_327] : memref<98x94xf32, #tpu.memory_space<vmem>>, vector<1x94xf32>
    %859 = vector.broadcast %858 : vector<1x94xf32> to vector<16x94xf32>
    %860 = arith.mulf %859, %857 : vector<16x94xf32>
    %861 = arith.addf %824, %860 : vector<16x94xf32>
    %c84_328 = arith.constant 84 : index
    %c0_329 = arith.constant 0 : index
    %862 = vector.load %arg3[%c84_328, %c0_329] : memref<98x94xf32, #tpu.memory_space<vmem>>, vector<1x94xf32>
    %863 = vector.broadcast %862 : vector<1x94xf32> to vector<16x94xf32>
    %864 = arith.mulf %863, %857 : vector<16x94xf32>
    %865 = arith.addf %828, %864 : vector<16x94xf32>
    %866 = vector.extract_strided_slice %856 {offsets = [0, 1], sizes = [16, 94], strides = [1, 1]} : vector<16x100xf32> to vector<16x94xf32>
    %c36_330 = arith.constant 36 : index
    %c0_331 = arith.constant 0 : index
    %867 = vector.load %arg3[%c36_330, %c0_331] : memref<98x94xf32, #tpu.memory_space<vmem>>, vector<1x94xf32>
    %868 = vector.broadcast %867 : vector<1x94xf32> to vector<16x94xf32>
    %869 = arith.mulf %868, %866 : vector<16x94xf32>
    %870 = arith.addf %833, %869 : vector<16x94xf32>
    %c85_332 = arith.constant 85 : index
    %c0_333 = arith.constant 0 : index
    %871 = vector.load %arg3[%c85_332, %c0_333] : memref<98x94xf32, #tpu.memory_space<vmem>>, vector<1x94xf32>
    %872 = vector.broadcast %871 : vector<1x94xf32> to vector<16x94xf32>
    %873 = arith.mulf %872, %866 : vector<16x94xf32>
    %874 = arith.addf %837, %873 : vector<16x94xf32>
    %875 = vector.extract_strided_slice %856 {offsets = [0, 2], sizes = [16, 94], strides = [1, 1]} : vector<16x100xf32> to vector<16x94xf32>
    %c37_334 = arith.constant 37 : index
    %c0_335 = arith.constant 0 : index
    %876 = vector.load %arg3[%c37_334, %c0_335] : memref<98x94xf32, #tpu.memory_space<vmem>>, vector<1x94xf32>
    %877 = vector.broadcast %876 : vector<1x94xf32> to vector<16x94xf32>
    %878 = arith.mulf %877, %875 : vector<16x94xf32>
    %879 = arith.addf %842, %878 : vector<16x94xf32>
    %c86_336 = arith.constant 86 : index
    %c0_337 = arith.constant 0 : index
    %880 = vector.load %arg3[%c86_336, %c0_337] : memref<98x94xf32, #tpu.memory_space<vmem>>, vector<1x94xf32>
    %881 = vector.broadcast %880 : vector<1x94xf32> to vector<16x94xf32>
    %882 = arith.mulf %881, %875 : vector<16x94xf32>
    %883 = arith.addf %846, %882 : vector<16x94xf32>
    %884 = vector.extract_strided_slice %856 {offsets = [0, 3], sizes = [16, 94], strides = [1, 1]} : vector<16x100xf32> to vector<16x94xf32>
    %c38_338 = arith.constant 38 : index
    %c0_339 = arith.constant 0 : index
    %885 = vector.load %arg3[%c38_338, %c0_339] : memref<98x94xf32, #tpu.memory_space<vmem>>, vector<1x94xf32>
    %886 = vector.broadcast %885 : vector<1x94xf32> to vector<16x94xf32>
    %887 = arith.mulf %886, %884 : vector<16x94xf32>
    %888 = arith.addf %851, %887 : vector<16x94xf32>
    %c87_340 = arith.constant 87 : index
    %c0_341 = arith.constant 0 : index
    %889 = vector.load %arg3[%c87_340, %c0_341] : memref<98x94xf32, #tpu.memory_space<vmem>>, vector<1x94xf32>
    %890 = vector.broadcast %889 : vector<1x94xf32> to vector<16x94xf32>
    %891 = arith.mulf %890, %884 : vector<16x94xf32>
    %892 = arith.addf %855, %891 : vector<16x94xf32>
    %893 = vector.extract_strided_slice %856 {offsets = [0, 4], sizes = [16, 94], strides = [1, 1]} : vector<16x100xf32> to vector<16x94xf32>
    %c39_342 = arith.constant 39 : index
    %c0_343 = arith.constant 0 : index
    %894 = vector.load %arg3[%c39_342, %c0_343] : memref<98x94xf32, #tpu.memory_space<vmem>>, vector<1x94xf32>
    %895 = vector.broadcast %894 : vector<1x94xf32> to vector<16x94xf32>
    %896 = arith.mulf %895, %893 : vector<16x94xf32>
    %897 = arith.addf %861, %896 : vector<16x94xf32>
    %c88_344 = arith.constant 88 : index
    %c0_345 = arith.constant 0 : index
    %898 = vector.load %arg3[%c88_344, %c0_345] : memref<98x94xf32, #tpu.memory_space<vmem>>, vector<1x94xf32>
    %899 = vector.broadcast %898 : vector<1x94xf32> to vector<16x94xf32>
    %900 = arith.mulf %899, %893 : vector<16x94xf32>
    %901 = arith.addf %865, %900 : vector<16x94xf32>
    %902 = vector.extract_strided_slice %856 {offsets = [0, 5], sizes = [16, 94], strides = [1, 1]} : vector<16x100xf32> to vector<16x94xf32>
    %c40_346 = arith.constant 40 : index
    %c0_347 = arith.constant 0 : index
    %903 = vector.load %arg3[%c40_346, %c0_347] : memref<98x94xf32, #tpu.memory_space<vmem>>, vector<1x94xf32>
    %904 = vector.broadcast %903 : vector<1x94xf32> to vector<16x94xf32>
    %905 = arith.mulf %904, %902 : vector<16x94xf32>
    %906 = arith.addf %870, %905 : vector<16x94xf32>
    %c89_348 = arith.constant 89 : index
    %c0_349 = arith.constant 0 : index
    %907 = vector.load %arg3[%c89_348, %c0_349] : memref<98x94xf32, #tpu.memory_space<vmem>>, vector<1x94xf32>
    %908 = vector.broadcast %907 : vector<1x94xf32> to vector<16x94xf32>
    %909 = arith.mulf %908, %902 : vector<16x94xf32>
    %910 = arith.addf %874, %909 : vector<16x94xf32>
    %911 = vector.extract_strided_slice %856 {offsets = [0, 6], sizes = [16, 94], strides = [1, 1]} : vector<16x100xf32> to vector<16x94xf32>
    %c41_350 = arith.constant 41 : index
    %c0_351 = arith.constant 0 : index
    %912 = vector.load %arg3[%c41_350, %c0_351] : memref<98x94xf32, #tpu.memory_space<vmem>>, vector<1x94xf32>
    %913 = vector.broadcast %912 : vector<1x94xf32> to vector<16x94xf32>
    %914 = arith.mulf %913, %911 : vector<16x94xf32>
    %915 = arith.addf %879, %914 : vector<16x94xf32>
    %c90_352 = arith.constant 90 : index
    %c0_353 = arith.constant 0 : index
    %916 = vector.load %arg3[%c90_352, %c0_353] : memref<98x94xf32, #tpu.memory_space<vmem>>, vector<1x94xf32>
    %917 = vector.broadcast %916 : vector<1x94xf32> to vector<16x94xf32>
    %918 = arith.mulf %917, %911 : vector<16x94xf32>
    %919 = arith.addf %883, %918 : vector<16x94xf32>
    %c6_354 = arith.constant 6 : index
    %c0_355 = arith.constant 0 : index
    %920 = vector.load %arg11[%c6_354, %c0_355] : memref<22x100xf32, #tpu.memory_space<vmem>>, vector<16x100xf32>
    %921 = vector.extract_strided_slice %920 {offsets = [0, 0], sizes = [16, 94], strides = [1, 1]} : vector<16x100xf32> to vector<16x94xf32>
    %c42_356 = arith.constant 42 : index
    %c0_357 = arith.constant 0 : index
    %922 = vector.load %arg3[%c42_356, %c0_357] : memref<98x94xf32, #tpu.memory_space<vmem>>, vector<1x94xf32>
    %923 = vector.broadcast %922 : vector<1x94xf32> to vector<16x94xf32>
    %924 = arith.mulf %923, %921 : vector<16x94xf32>
    %925 = arith.addf %888, %924 : vector<16x94xf32>
    %c91_358 = arith.constant 91 : index
    %c0_359 = arith.constant 0 : index
    %926 = vector.load %arg3[%c91_358, %c0_359] : memref<98x94xf32, #tpu.memory_space<vmem>>, vector<1x94xf32>
    %927 = vector.broadcast %926 : vector<1x94xf32> to vector<16x94xf32>
    %928 = arith.mulf %927, %921 : vector<16x94xf32>
    %929 = arith.addf %892, %928 : vector<16x94xf32>
    %930 = vector.extract_strided_slice %920 {offsets = [0, 1], sizes = [16, 94], strides = [1, 1]} : vector<16x100xf32> to vector<16x94xf32>
    %c43_360 = arith.constant 43 : index
    %c0_361 = arith.constant 0 : index
    %931 = vector.load %arg3[%c43_360, %c0_361] : memref<98x94xf32, #tpu.memory_space<vmem>>, vector<1x94xf32>
    %932 = vector.broadcast %931 : vector<1x94xf32> to vector<16x94xf32>
    %933 = arith.mulf %932, %930 : vector<16x94xf32>
    %934 = arith.addf %897, %933 : vector<16x94xf32>
    %c92_362 = arith.constant 92 : index
    %c0_363 = arith.constant 0 : index
    %935 = vector.load %arg3[%c92_362, %c0_363] : memref<98x94xf32, #tpu.memory_space<vmem>>, vector<1x94xf32>
    %936 = vector.broadcast %935 : vector<1x94xf32> to vector<16x94xf32>
    %937 = arith.mulf %936, %930 : vector<16x94xf32>
    %938 = arith.addf %901, %937 : vector<16x94xf32>
    %939 = vector.extract_strided_slice %920 {offsets = [0, 2], sizes = [16, 94], strides = [1, 1]} : vector<16x100xf32> to vector<16x94xf32>
    %c44_364 = arith.constant 44 : index
    %c0_365 = arith.constant 0 : index
    %940 = vector.load %arg3[%c44_364, %c0_365] : memref<98x94xf32, #tpu.memory_space<vmem>>, vector<1x94xf32>
    %941 = vector.broadcast %940 : vector<1x94xf32> to vector<16x94xf32>
    %942 = arith.mulf %941, %939 : vector<16x94xf32>
    %943 = arith.addf %906, %942 : vector<16x94xf32>
    %c93_366 = arith.constant 93 : index
    %c0_367 = arith.constant 0 : index
    %944 = vector.load %arg3[%c93_366, %c0_367] : memref<98x94xf32, #tpu.memory_space<vmem>>, vector<1x94xf32>
    %945 = vector.broadcast %944 : vector<1x94xf32> to vector<16x94xf32>
    %946 = arith.mulf %945, %939 : vector<16x94xf32>
    %947 = arith.addf %910, %946 : vector<16x94xf32>
    %948 = vector.extract_strided_slice %920 {offsets = [0, 3], sizes = [16, 94], strides = [1, 1]} : vector<16x100xf32> to vector<16x94xf32>
    %c45_368 = arith.constant 45 : index
    %c0_369 = arith.constant 0 : index
    %949 = vector.load %arg3[%c45_368, %c0_369] : memref<98x94xf32, #tpu.memory_space<vmem>>, vector<1x94xf32>
    %950 = vector.broadcast %949 : vector<1x94xf32> to vector<16x94xf32>
    %951 = arith.mulf %950, %948 : vector<16x94xf32>
    %952 = arith.addf %915, %951 : vector<16x94xf32>
    %c94_370 = arith.constant 94 : index
    %c0_371 = arith.constant 0 : index
    %953 = vector.load %arg3[%c94_370, %c0_371] : memref<98x94xf32, #tpu.memory_space<vmem>>, vector<1x94xf32>
    %954 = vector.broadcast %953 : vector<1x94xf32> to vector<16x94xf32>
    %955 = arith.mulf %954, %948 : vector<16x94xf32>
    %956 = arith.addf %919, %955 : vector<16x94xf32>
    %957 = vector.extract_strided_slice %920 {offsets = [0, 4], sizes = [16, 94], strides = [1, 1]} : vector<16x100xf32> to vector<16x94xf32>
    %c46_372 = arith.constant 46 : index
    %c0_373 = arith.constant 0 : index
    %958 = vector.load %arg3[%c46_372, %c0_373] : memref<98x94xf32, #tpu.memory_space<vmem>>, vector<1x94xf32>
    %959 = vector.broadcast %958 : vector<1x94xf32> to vector<16x94xf32>
    %960 = arith.mulf %959, %957 : vector<16x94xf32>
    %961 = arith.addf %925, %960 : vector<16x94xf32>
    %c95_374 = arith.constant 95 : index
    %c0_375 = arith.constant 0 : index
    %962 = vector.load %arg3[%c95_374, %c0_375] : memref<98x94xf32, #tpu.memory_space<vmem>>, vector<1x94xf32>
    %963 = vector.broadcast %962 : vector<1x94xf32> to vector<16x94xf32>
    %964 = arith.mulf %963, %957 : vector<16x94xf32>
    %965 = arith.addf %929, %964 : vector<16x94xf32>
    %966 = vector.extract_strided_slice %920 {offsets = [0, 5], sizes = [16, 94], strides = [1, 1]} : vector<16x100xf32> to vector<16x94xf32>
    %c47_376 = arith.constant 47 : index
    %c0_377 = arith.constant 0 : index
    %967 = vector.load %arg3[%c47_376, %c0_377] : memref<98x94xf32, #tpu.memory_space<vmem>>, vector<1x94xf32>
    %968 = vector.broadcast %967 : vector<1x94xf32> to vector<16x94xf32>
    %969 = arith.mulf %968, %966 : vector<16x94xf32>
    %970 = arith.addf %934, %969 : vector<16x94xf32>
    %c96_378 = arith.constant 96 : index
    %c0_379 = arith.constant 0 : index
    %971 = vector.load %arg3[%c96_378, %c0_379] : memref<98x94xf32, #tpu.memory_space<vmem>>, vector<1x94xf32>
    %972 = vector.broadcast %971 : vector<1x94xf32> to vector<16x94xf32>
    %973 = arith.mulf %972, %966 : vector<16x94xf32>
    %974 = arith.addf %938, %973 : vector<16x94xf32>
    %975 = vector.extract_strided_slice %920 {offsets = [0, 6], sizes = [16, 94], strides = [1, 1]} : vector<16x100xf32> to vector<16x94xf32>
    %c48_380 = arith.constant 48 : index
    %c0_381 = arith.constant 0 : index
    %976 = vector.load %arg3[%c48_380, %c0_381] : memref<98x94xf32, #tpu.memory_space<vmem>>, vector<1x94xf32>
    %977 = vector.broadcast %976 : vector<1x94xf32> to vector<16x94xf32>
    %978 = arith.mulf %977, %975 : vector<16x94xf32>
    %979 = arith.addf %943, %978 : vector<16x94xf32>
    %c97_382 = arith.constant 97 : index
    %c0_383 = arith.constant 0 : index
    %980 = vector.load %arg3[%c97_382, %c0_383] : memref<98x94xf32, #tpu.memory_space<vmem>>, vector<1x94xf32>
    %981 = vector.broadcast %980 : vector<1x94xf32> to vector<16x94xf32>
    %982 = arith.mulf %981, %975 : vector<16x94xf32>
    %983 = arith.addf %947, %982 : vector<16x94xf32>
    %984 = arith.addf %979, %952 : vector<16x94xf32>
    %985 = arith.addf %961, %970 : vector<16x94xf32>
    %986 = arith.addf %984, %985 : vector<16x94xf32>
    %987 = vector.extract_strided_slice %986 {offsets = [0, 0], sizes = [16, 44], strides = [1, 1]} : vector<16x94xf32> to vector<16x44xf32>
    %988 = vector.extract_strided_slice %986 {offsets = [0, 50], sizes = [16, 44], strides = [1, 1]} : vector<16x94xf32> to vector<16x44xf32>
    %989 = arith.addf %987, %988 : vector<16x44xf32>
    %c0_384 = arith.constant 0 : index
    %990 = memref.load %arg6[%c0_384] : memref<2xf32, #tpu.memory_space<smem>>
    %991 = vector.broadcast %990 : f32 to vector<16x44xf32>
    %992 = arith.mulf %989, %991 : vector<16x44xf32>
    %c0_385 = arith.constant 0 : index
    %993 = memref.load %arg7[%c0_385] : memref<2xf32, #tpu.memory_space<smem>>
    %994 = vector.broadcast %993 : f32 to vector<16x44xf32>
    %995 = arith.addf %992, %994 : vector<16x44xf32>
    %cst_386 = arith.constant 0.000000e+00 : f32
    %996 = vector.broadcast %cst_386 : f32 to vector<16x44xf32>
    %997 = arith.cmpf oge, %995, %996 : vector<16x44xf32>
    %cst_387 = arith.constant 3.000000e-01 : f32
    %998 = vector.broadcast %cst_387 : f32 to vector<16x44xf32>
    %999 = arith.mulf %998, %995 : vector<16x44xf32>
    %1000 = arith.select %997, %995, %999 : vector<16x44xi1>, vector<16x44xf32>
    %1001 = arith.addf %983, %956 : vector<16x94xf32>
    %1002 = arith.addf %965, %974 : vector<16x94xf32>
    %1003 = arith.addf %1001, %1002 : vector<16x94xf32>
    %1004 = vector.extract_strided_slice %1003 {offsets = [0, 0], sizes = [16, 44], strides = [1, 1]} : vector<16x94xf32> to vector<16x44xf32>
    %1005 = vector.extract_strided_slice %1003 {offsets = [0, 50], sizes = [16, 44], strides = [1, 1]} : vector<16x94xf32> to vector<16x44xf32>
    %1006 = arith.addf %1004, %1005 : vector<16x44xf32>
    %c1_388 = arith.constant 1 : index
    %1007 = memref.load %arg6[%c1_388] : memref<2xf32, #tpu.memory_space<smem>>
    %1008 = vector.broadcast %1007 : f32 to vector<16x44xf32>
    %1009 = arith.mulf %1006, %1008 : vector<16x44xf32>
    %c1_389 = arith.constant 1 : index
    %1010 = memref.load %arg7[%c1_389] : memref<2xf32, #tpu.memory_space<smem>>
    %1011 = vector.broadcast %1010 : f32 to vector<16x44xf32>
    %1012 = arith.addf %1009, %1011 : vector<16x44xf32>
    %cst_390 = arith.constant 0.000000e+00 : f32
    %1013 = vector.broadcast %cst_390 : f32 to vector<16x44xf32>
    %1014 = arith.cmpf oge, %1012, %1013 : vector<16x44xf32>
    %cst_391 = arith.constant 3.000000e-01 : f32
    %1015 = vector.broadcast %cst_391 : f32 to vector<16x44xf32>
    %1016 = arith.mulf %1015, %1012 : vector<16x44xf32>
    %1017 = arith.select %1014, %1012, %1016 : vector<16x44xi1>, vector<16x44xf32>
    %1018 = vector.extract_strided_slice %1000 {offsets = [0, 3], sizes = [1, 16], strides = [1, 1]} : vector<16x44xf32> to vector<1x16xf32>
    %c0_392 = arith.constant 0 : index
    %c0_393 = arith.constant 0 : index
    %1019 = vector.load %arg12[%c0_392, %c0_393] : memref<2x512xf32, #tpu.memory_space<vmem>>, vector<1x16xf32>
    tpu.vector_store %arg12[%c0_392, %c0_393], %1018 {strides = array<i32>} : memref<2x512xf32, #tpu.memory_space<vmem>>, vector<1x16xf32>,
    %1020 = vector.extract_strided_slice %1000 {offsets = [1, 3], sizes = [1, 16], strides = [1, 1]} : vector<16x44xf32> to vector<1x16xf32>
    %c0_394 = arith.constant 0 : index
    %c16_395 = arith.constant 16 : index
    %1021 = vector.load %arg12[%c0_394, %c16_395] : memref<2x512xf32, #tpu.memory_space<vmem>>, vector<1x16xf32>
    tpu.vector_store %arg12[%c0_394, %c16_395], %1020 {strides = array<i32>} : memref<2x512xf32, #tpu.memory_space<vmem>>, vector<1x16xf32>,
    %1022 = vector.extract_strided_slice %1000 {offsets = [2, 3], sizes = [1, 16], strides = [1, 1]} : vector<16x44xf32> to vector<1x16xf32>
    %c0_396 = arith.constant 0 : index
    %c32_397 = arith.constant 32 : index
    %1023 = vector.load %arg12[%c0_396, %c32_397] : memref<2x512xf32, #tpu.memory_space<vmem>>, vector<1x16xf32>
    tpu.vector_store %arg12[%c0_396, %c32_397], %1022 {strides = array<i32>} : memref<2x512xf32, #tpu.memory_space<vmem>>, vector<1x16xf32>,
    %1024 = vector.extract_strided_slice %1000 {offsets = [3, 3], sizes = [1, 16], strides = [1, 1]} : vector<16x44xf32> to vector<1x16xf32>
    %c0_398 = arith.constant 0 : index
    %c48_399 = arith.constant 48 : index
    %1025 = vector.load %arg12[%c0_398, %c48_399] : memref<2x512xf32, #tpu.memory_space<vmem>>, vector<1x16xf32>
    tpu.vector_store %arg12[%c0_398, %c48_399], %1024 {strides = array<i32>} : memref<2x512xf32, #tpu.memory_space<vmem>>, vector<1x16xf32>,
    %1026 = vector.extract_strided_slice %1000 {offsets = [4, 3], sizes = [1, 16], strides = [1, 1]} : vector<16x44xf32> to vector<1x16xf32>
    %c0_400 = arith.constant 0 : index
    %c64_401 = arith.constant 64 : index
    %1027 = vector.load %arg12[%c0_400, %c64_401] : memref<2x512xf32, #tpu.memory_space<vmem>>, vector<1x16xf32>
    tpu.vector_store %arg12[%c0_400, %c64_401], %1026 {strides = array<i32>} : memref<2x512xf32, #tpu.memory_space<vmem>>, vector<1x16xf32>,
    %1028 = vector.extract_strided_slice %1000 {offsets = [5, 3], sizes = [1, 16], strides = [1, 1]} : vector<16x44xf32> to vector<1x16xf32>
    %c0_402 = arith.constant 0 : index
    %c80_403 = arith.constant 80 : index
    %1029 = vector.load %arg12[%c0_402, %c80_403] : memref<2x512xf32, #tpu.memory_space<vmem>>, vector<1x16xf32>
    tpu.vector_store %arg12[%c0_402, %c80_403], %1028 {strides = array<i32>} : memref<2x512xf32, #tpu.memory_space<vmem>>, vector<1x16xf32>,
    %1030 = vector.extract_strided_slice %1000 {offsets = [6, 3], sizes = [1, 16], strides = [1, 1]} : vector<16x44xf32> to vector<1x16xf32>
    %c0_404 = arith.constant 0 : index
    %c96_405 = arith.constant 96 : index
    %1031 = vector.load %arg12[%c0_404, %c96_405] : memref<2x512xf32, #tpu.memory_space<vmem>>, vector<1x16xf32>
    tpu.vector_store %arg12[%c0_404, %c96_405], %1030 {strides = array<i32>} : memref<2x512xf32, #tpu.memory_space<vmem>>, vector<1x16xf32>,
    %1032 = vector.extract_strided_slice %1000 {offsets = [7, 3], sizes = [1, 16], strides = [1, 1]} : vector<16x44xf32> to vector<1x16xf32>
    %c0_406 = arith.constant 0 : index
    %c112 = arith.constant 112 : index
    %1033 = vector.load %arg12[%c0_406, %c112] : memref<2x512xf32, #tpu.memory_space<vmem>>, vector<1x16xf32>
    tpu.vector_store %arg12[%c0_406, %c112], %1032 {strides = array<i32>} : memref<2x512xf32, #tpu.memory_space<vmem>>, vector<1x16xf32>,
    %1034 = vector.extract_strided_slice %1000 {offsets = [8, 3], sizes = [1, 16], strides = [1, 1]} : vector<16x44xf32> to vector<1x16xf32>
    %c0_407 = arith.constant 0 : index
    %c128 = arith.constant 128 : index
    %1035 = vector.load %arg12[%c0_407, %c128] : memref<2x512xf32, #tpu.memory_space<vmem>>, vector<1x16xf32>
    tpu.vector_store %arg12[%c0_407, %c128], %1034 {strides = array<i32>} : memref<2x512xf32, #tpu.memory_space<vmem>>, vector<1x16xf32>,
    %1036 = vector.extract_strided_slice %1000 {offsets = [9, 3], sizes = [1, 16], strides = [1, 1]} : vector<16x44xf32> to vector<1x16xf32>
    %c0_408 = arith.constant 0 : index
    %c144 = arith.constant 144 : index
    %1037 = vector.load %arg12[%c0_408, %c144] : memref<2x512xf32, #tpu.memory_space<vmem>>, vector<1x16xf32>
    tpu.vector_store %arg12[%c0_408, %c144], %1036 {strides = array<i32>} : memref<2x512xf32, #tpu.memory_space<vmem>>, vector<1x16xf32>,
    %1038 = vector.extract_strided_slice %1000 {offsets = [10, 3], sizes = [1, 16], strides = [1, 1]} : vector<16x44xf32> to vector<1x16xf32>
    %c0_409 = arith.constant 0 : index
    %c160 = arith.constant 160 : index
    %1039 = vector.load %arg12[%c0_409, %c160] : memref<2x512xf32, #tpu.memory_space<vmem>>, vector<1x16xf32>
    tpu.vector_store %arg12[%c0_409, %c160], %1038 {strides = array<i32>} : memref<2x512xf32, #tpu.memory_space<vmem>>, vector<1x16xf32>,
    %1040 = vector.extract_strided_slice %1000 {offsets = [11, 3], sizes = [1, 16], strides = [1, 1]} : vector<16x44xf32> to vector<1x16xf32>
    %c0_410 = arith.constant 0 : index
    %c176 = arith.constant 176 : index
    %1041 = vector.load %arg12[%c0_410, %c176] : memref<2x512xf32, #tpu.memory_space<vmem>>, vector<1x16xf32>
    tpu.vector_store %arg12[%c0_410, %c176], %1040 {strides = array<i32>} : memref<2x512xf32, #tpu.memory_space<vmem>>, vector<1x16xf32>,
    %1042 = vector.extract_strided_slice %1000 {offsets = [12, 3], sizes = [1, 16], strides = [1, 1]} : vector<16x44xf32> to vector<1x16xf32>
    %c0_411 = arith.constant 0 : index
    %c192 = arith.constant 192 : index
    %1043 = vector.load %arg12[%c0_411, %c192] : memref<2x512xf32, #tpu.memory_space<vmem>>, vector<1x16xf32>
    tpu.vector_store %arg12[%c0_411, %c192], %1042 {strides = array<i32>} : memref<2x512xf32, #tpu.memory_space<vmem>>, vector<1x16xf32>,
    %1044 = vector.extract_strided_slice %1000 {offsets = [13, 3], sizes = [1, 16], strides = [1, 1]} : vector<16x44xf32> to vector<1x16xf32>
    %c0_412 = arith.constant 0 : index
    %c208 = arith.constant 208 : index
    %1045 = vector.load %arg12[%c0_412, %c208] : memref<2x512xf32, #tpu.memory_space<vmem>>, vector<1x16xf32>
    tpu.vector_store %arg12[%c0_412, %c208], %1044 {strides = array<i32>} : memref<2x512xf32, #tpu.memory_space<vmem>>, vector<1x16xf32>,
    %1046 = vector.extract_strided_slice %1000 {offsets = [14, 3], sizes = [1, 16], strides = [1, 1]} : vector<16x44xf32> to vector<1x16xf32>
    %c0_413 = arith.constant 0 : index
    %c224 = arith.constant 224 : index
    %1047 = vector.load %arg12[%c0_413, %c224] : memref<2x512xf32, #tpu.memory_space<vmem>>, vector<1x16xf32>
    tpu.vector_store %arg12[%c0_413, %c224], %1046 {strides = array<i32>} : memref<2x512xf32, #tpu.memory_space<vmem>>, vector<1x16xf32>,
    %1048 = vector.extract_strided_slice %1000 {offsets = [15, 3], sizes = [1, 16], strides = [1, 1]} : vector<16x44xf32> to vector<1x16xf32>
    %c0_414 = arith.constant 0 : index
    %c240 = arith.constant 240 : index
    %1049 = vector.load %arg12[%c0_414, %c240] : memref<2x512xf32, #tpu.memory_space<vmem>>, vector<1x16xf32>
    tpu.vector_store %arg12[%c0_414, %c240], %1048 {strides = array<i32>} : memref<2x512xf32, #tpu.memory_space<vmem>>, vector<1x16xf32>,
    %1050 = vector.extract_strided_slice %1000 {offsets = [0, 25], sizes = [1, 16], strides = [1, 1]} : vector<16x44xf32> to vector<1x16xf32>
    %c1_415 = arith.constant 1 : index
    %c0_416 = arith.constant 0 : index
    %1051 = vector.load %arg12[%c1_415, %c0_416] : memref<2x512xf32, #tpu.memory_space<vmem>>, vector<1x16xf32>
    tpu.vector_store %arg12[%c1_415, %c0_416], %1050 {strides = array<i32>} : memref<2x512xf32, #tpu.memory_space<vmem>>, vector<1x16xf32>,
    %1052 = vector.extract_strided_slice %1000 {offsets = [1, 25], sizes = [1, 16], strides = [1, 1]} : vector<16x44xf32> to vector<1x16xf32>
    %c1_417 = arith.constant 1 : index
    %c16_418 = arith.constant 16 : index
    %1053 = vector.load %arg12[%c1_417, %c16_418] : memref<2x512xf32, #tpu.memory_space<vmem>>, vector<1x16xf32>
    tpu.vector_store %arg12[%c1_417, %c16_418], %1052 {strides = array<i32>} : memref<2x512xf32, #tpu.memory_space<vmem>>, vector<1x16xf32>,
    %1054 = vector.extract_strided_slice %1000 {offsets = [2, 25], sizes = [1, 16], strides = [1, 1]} : vector<16x44xf32> to vector<1x16xf32>
    %c1_419 = arith.constant 1 : index
    %c32_420 = arith.constant 32 : index
    %1055 = vector.load %arg12[%c1_419, %c32_420] : memref<2x512xf32, #tpu.memory_space<vmem>>, vector<1x16xf32>
    tpu.vector_store %arg12[%c1_419, %c32_420], %1054 {strides = array<i32>} : memref<2x512xf32, #tpu.memory_space<vmem>>, vector<1x16xf32>,
    %1056 = vector.extract_strided_slice %1000 {offsets = [3, 25], sizes = [1, 16], strides = [1, 1]} : vector<16x44xf32> to vector<1x16xf32>
    %c1_421 = arith.constant 1 : index
    %c48_422 = arith.constant 48 : index
    %1057 = vector.load %arg12[%c1_421, %c48_422] : memref<2x512xf32, #tpu.memory_space<vmem>>, vector<1x16xf32>
    tpu.vector_store %arg12[%c1_421, %c48_422], %1056 {strides = array<i32>} : memref<2x512xf32, #tpu.memory_space<vmem>>, vector<1x16xf32>,
    %1058 = vector.extract_strided_slice %1000 {offsets = [4, 25], sizes = [1, 16], strides = [1, 1]} : vector<16x44xf32> to vector<1x16xf32>
    %c1_423 = arith.constant 1 : index
    %c64_424 = arith.constant 64 : index
    %1059 = vector.load %arg12[%c1_423, %c64_424] : memref<2x512xf32, #tpu.memory_space<vmem>>, vector<1x16xf32>
    tpu.vector_store %arg12[%c1_423, %c64_424], %1058 {strides = array<i32>} : memref<2x512xf32, #tpu.memory_space<vmem>>, vector<1x16xf32>,
    %1060 = vector.extract_strided_slice %1000 {offsets = [5, 25], sizes = [1, 16], strides = [1, 1]} : vector<16x44xf32> to vector<1x16xf32>
    %c1_425 = arith.constant 1 : index
    %c80_426 = arith.constant 80 : index
    %1061 = vector.load %arg12[%c1_425, %c80_426] : memref<2x512xf32, #tpu.memory_space<vmem>>, vector<1x16xf32>
    tpu.vector_store %arg12[%c1_425, %c80_426], %1060 {strides = array<i32>} : memref<2x512xf32, #tpu.memory_space<vmem>>, vector<1x16xf32>,
    %1062 = vector.extract_strided_slice %1000 {offsets = [6, 25], sizes = [1, 16], strides = [1, 1]} : vector<16x44xf32> to vector<1x16xf32>
    %c1_427 = arith.constant 1 : index
    %c96_428 = arith.constant 96 : index
    %1063 = vector.load %arg12[%c1_427, %c96_428] : memref<2x512xf32, #tpu.memory_space<vmem>>, vector<1x16xf32>
    tpu.vector_store %arg12[%c1_427, %c96_428], %1062 {strides = array<i32>} : memref<2x512xf32, #tpu.memory_space<vmem>>, vector<1x16xf32>,
    %1064 = vector.extract_strided_slice %1000 {offsets = [7, 25], sizes = [1, 16], strides = [1, 1]} : vector<16x44xf32> to vector<1x16xf32>
    %c1_429 = arith.constant 1 : index
    %c112_430 = arith.constant 112 : index
    %1065 = vector.load %arg12[%c1_429, %c112_430] : memref<2x512xf32, #tpu.memory_space<vmem>>, vector<1x16xf32>
    tpu.vector_store %arg12[%c1_429, %c112_430], %1064 {strides = array<i32>} : memref<2x512xf32, #tpu.memory_space<vmem>>, vector<1x16xf32>,
    %1066 = vector.extract_strided_slice %1000 {offsets = [8, 25], sizes = [1, 16], strides = [1, 1]} : vector<16x44xf32> to vector<1x16xf32>
    %c1_431 = arith.constant 1 : index
    %c128_432 = arith.constant 128 : index
    %1067 = vector.load %arg12[%c1_431, %c128_432] : memref<2x512xf32, #tpu.memory_space<vmem>>, vector<1x16xf32>
    tpu.vector_store %arg12[%c1_431, %c128_432], %1066 {strides = array<i32>} : memref<2x512xf32, #tpu.memory_space<vmem>>, vector<1x16xf32>,
    %1068 = vector.extract_strided_slice %1000 {offsets = [9, 25], sizes = [1, 16], strides = [1, 1]} : vector<16x44xf32> to vector<1x16xf32>
    %c1_433 = arith.constant 1 : index
    %c144_434 = arith.constant 144 : index
    %1069 = vector.load %arg12[%c1_433, %c144_434] : memref<2x512xf32, #tpu.memory_space<vmem>>, vector<1x16xf32>
    tpu.vector_store %arg12[%c1_433, %c144_434], %1068 {strides = array<i32>} : memref<2x512xf32, #tpu.memory_space<vmem>>, vector<1x16xf32>,
    %1070 = vector.extract_strided_slice %1000 {offsets = [10, 25], sizes = [1, 16], strides = [1, 1]} : vector<16x44xf32> to vector<1x16xf32>
    %c1_435 = arith.constant 1 : index
    %c160_436 = arith.constant 160 : index
    %1071 = vector.load %arg12[%c1_435, %c160_436] : memref<2x512xf32, #tpu.memory_space<vmem>>, vector<1x16xf32>
    tpu.vector_store %arg12[%c1_435, %c160_436], %1070 {strides = array<i32>} : memref<2x512xf32, #tpu.memory_space<vmem>>, vector<1x16xf32>,
    %1072 = vector.extract_strided_slice %1000 {offsets = [11, 25], sizes = [1, 16], strides = [1, 1]} : vector<16x44xf32> to vector<1x16xf32>
    %c1_437 = arith.constant 1 : index
    %c176_438 = arith.constant 176 : index
    %1073 = vector.load %arg12[%c1_437, %c176_438] : memref<2x512xf32, #tpu.memory_space<vmem>>, vector<1x16xf32>
    tpu.vector_store %arg12[%c1_437, %c176_438], %1072 {strides = array<i32>} : memref<2x512xf32, #tpu.memory_space<vmem>>, vector<1x16xf32>,
    %1074 = vector.extract_strided_slice %1000 {offsets = [12, 25], sizes = [1, 16], strides = [1, 1]} : vector<16x44xf32> to vector<1x16xf32>
    %c1_439 = arith.constant 1 : index
    %c192_440 = arith.constant 192 : index
    %1075 = vector.load %arg12[%c1_439, %c192_440] : memref<2x512xf32, #tpu.memory_space<vmem>>, vector<1x16xf32>
    tpu.vector_store %arg12[%c1_439, %c192_440], %1074 {strides = array<i32>} : memref<2x512xf32, #tpu.memory_space<vmem>>, vector<1x16xf32>,
    %1076 = vector.extract_strided_slice %1000 {offsets = [13, 25], sizes = [1, 16], strides = [1, 1]} : vector<16x44xf32> to vector<1x16xf32>
    %c1_441 = arith.constant 1 : index
    %c208_442 = arith.constant 208 : index
    %1077 = vector.load %arg12[%c1_441, %c208_442] : memref<2x512xf32, #tpu.memory_space<vmem>>, vector<1x16xf32>
    tpu.vector_store %arg12[%c1_441, %c208_442], %1076 {strides = array<i32>} : memref<2x512xf32, #tpu.memory_space<vmem>>, vector<1x16xf32>,
    %1078 = vector.extract_strided_slice %1000 {offsets = [14, 25], sizes = [1, 16], strides = [1, 1]} : vector<16x44xf32> to vector<1x16xf32>
    %c1_443 = arith.constant 1 : index
    %c224_444 = arith.constant 224 : index
    %1079 = vector.load %arg12[%c1_443, %c224_444] : memref<2x512xf32, #tpu.memory_space<vmem>>, vector<1x16xf32>
    tpu.vector_store %arg12[%c1_443, %c224_444], %1078 {strides = array<i32>} : memref<2x512xf32, #tpu.memory_space<vmem>>, vector<1x16xf32>,
    %1080 = vector.extract_strided_slice %1000 {offsets = [15, 25], sizes = [1, 16], strides = [1, 1]} : vector<16x44xf32> to vector<1x16xf32>
    %c1_445 = arith.constant 1 : index
    %c240_446 = arith.constant 240 : index
    %1081 = vector.load %arg12[%c1_445, %c240_446] : memref<2x512xf32, #tpu.memory_space<vmem>>, vector<1x16xf32>
    tpu.vector_store %arg12[%c1_445, %c240_446], %1080 {strides = array<i32>} : memref<2x512xf32, #tpu.memory_space<vmem>>, vector<1x16xf32>,
    %1082 = vector.extract_strided_slice %1017 {offsets = [0, 3], sizes = [1, 16], strides = [1, 1]} : vector<16x44xf32> to vector<1x16xf32>
    %c0_447 = arith.constant 0 : index
    %c256 = arith.constant 256 : index
    %1083 = vector.load %arg12[%c0_447, %c256] : memref<2x512xf32, #tpu.memory_space<vmem>>, vector<1x16xf32>
    tpu.vector_store %arg12[%c0_447, %c256], %1082 {strides = array<i32>} : memref<2x512xf32, #tpu.memory_space<vmem>>, vector<1x16xf32>,
    %1084 = vector.extract_strided_slice %1017 {offsets = [1, 3], sizes = [1, 16], strides = [1, 1]} : vector<16x44xf32> to vector<1x16xf32>
    %c0_448 = arith.constant 0 : index
    %c272 = arith.constant 272 : index
    %1085 = vector.load %arg12[%c0_448, %c272] : memref<2x512xf32, #tpu.memory_space<vmem>>, vector<1x16xf32>
    tpu.vector_store %arg12[%c0_448, %c272], %1084 {strides = array<i32>} : memref<2x512xf32, #tpu.memory_space<vmem>>, vector<1x16xf32>,
    %1086 = vector.extract_strided_slice %1017 {offsets = [2, 3], sizes = [1, 16], strides = [1, 1]} : vector<16x44xf32> to vector<1x16xf32>
    %c0_449 = arith.constant 0 : index
    %c288 = arith.constant 288 : index
    %1087 = vector.load %arg12[%c0_449, %c288] : memref<2x512xf32, #tpu.memory_space<vmem>>, vector<1x16xf32>
    tpu.vector_store %arg12[%c0_449, %c288], %1086 {strides = array<i32>} : memref<2x512xf32, #tpu.memory_space<vmem>>, vector<1x16xf32>,
    %1088 = vector.extract_strided_slice %1017 {offsets = [3, 3], sizes = [1, 16], strides = [1, 1]} : vector<16x44xf32> to vector<1x16xf32>
    %c0_450 = arith.constant 0 : index
    %c304 = arith.constant 304 : index
    %1089 = vector.load %arg12[%c0_450, %c304] : memref<2x512xf32, #tpu.memory_space<vmem>>, vector<1x16xf32>
    tpu.vector_store %arg12[%c0_450, %c304], %1088 {strides = array<i32>} : memref<2x512xf32, #tpu.memory_space<vmem>>, vector<1x16xf32>,
    %1090 = vector.extract_strided_slice %1017 {offsets = [4, 3], sizes = [1, 16], strides = [1, 1]} : vector<16x44xf32> to vector<1x16xf32>
    %c0_451 = arith.constant 0 : index
    %c320 = arith.constant 320 : index
    %1091 = vector.load %arg12[%c0_451, %c320] : memref<2x512xf32, #tpu.memory_space<vmem>>, vector<1x16xf32>
    tpu.vector_store %arg12[%c0_451, %c320], %1090 {strides = array<i32>} : memref<2x512xf32, #tpu.memory_space<vmem>>, vector<1x16xf32>,
    %1092 = vector.extract_strided_slice %1017 {offsets = [5, 3], sizes = [1, 16], strides = [1, 1]} : vector<16x44xf32> to vector<1x16xf32>
    %c0_452 = arith.constant 0 : index
    %c336 = arith.constant 336 : index
    %1093 = vector.load %arg12[%c0_452, %c336] : memref<2x512xf32, #tpu.memory_space<vmem>>, vector<1x16xf32>
    tpu.vector_store %arg12[%c0_452, %c336], %1092 {strides = array<i32>} : memref<2x512xf32, #tpu.memory_space<vmem>>, vector<1x16xf32>,
    %1094 = vector.extract_strided_slice %1017 {offsets = [6, 3], sizes = [1, 16], strides = [1, 1]} : vector<16x44xf32> to vector<1x16xf32>
    %c0_453 = arith.constant 0 : index
    %c352 = arith.constant 352 : index
    %1095 = vector.load %arg12[%c0_453, %c352] : memref<2x512xf32, #tpu.memory_space<vmem>>, vector<1x16xf32>
    tpu.vector_store %arg12[%c0_453, %c352], %1094 {strides = array<i32>} : memref<2x512xf32, #tpu.memory_space<vmem>>, vector<1x16xf32>,
    %1096 = vector.extract_strided_slice %1017 {offsets = [7, 3], sizes = [1, 16], strides = [1, 1]} : vector<16x44xf32> to vector<1x16xf32>
    %c0_454 = arith.constant 0 : index
    %c368 = arith.constant 368 : index
    %1097 = vector.load %arg12[%c0_454, %c368] : memref<2x512xf32, #tpu.memory_space<vmem>>, vector<1x16xf32>
    tpu.vector_store %arg12[%c0_454, %c368], %1096 {strides = array<i32>} : memref<2x512xf32, #tpu.memory_space<vmem>>, vector<1x16xf32>,
    %1098 = vector.extract_strided_slice %1017 {offsets = [8, 3], sizes = [1, 16], strides = [1, 1]} : vector<16x44xf32> to vector<1x16xf32>
    %c0_455 = arith.constant 0 : index
    %c384 = arith.constant 384 : index
    %1099 = vector.load %arg12[%c0_455, %c384] : memref<2x512xf32, #tpu.memory_space<vmem>>, vector<1x16xf32>
    tpu.vector_store %arg12[%c0_455, %c384], %1098 {strides = array<i32>} : memref<2x512xf32, #tpu.memory_space<vmem>>, vector<1x16xf32>,
    %1100 = vector.extract_strided_slice %1017 {offsets = [9, 3], sizes = [1, 16], strides = [1, 1]} : vector<16x44xf32> to vector<1x16xf32>
    %c0_456 = arith.constant 0 : index
    %c400 = arith.constant 400 : index
    %1101 = vector.load %arg12[%c0_456, %c400] : memref<2x512xf32, #tpu.memory_space<vmem>>, vector<1x16xf32>
    tpu.vector_store %arg12[%c0_456, %c400], %1100 {strides = array<i32>} : memref<2x512xf32, #tpu.memory_space<vmem>>, vector<1x16xf32>,
    %1102 = vector.extract_strided_slice %1017 {offsets = [10, 3], sizes = [1, 16], strides = [1, 1]} : vector<16x44xf32> to vector<1x16xf32>
    %c0_457 = arith.constant 0 : index
    %c416 = arith.constant 416 : index
    %1103 = vector.load %arg12[%c0_457, %c416] : memref<2x512xf32, #tpu.memory_space<vmem>>, vector<1x16xf32>
    tpu.vector_store %arg12[%c0_457, %c416], %1102 {strides = array<i32>} : memref<2x512xf32, #tpu.memory_space<vmem>>, vector<1x16xf32>,
    %1104 = vector.extract_strided_slice %1017 {offsets = [11, 3], sizes = [1, 16], strides = [1, 1]} : vector<16x44xf32> to vector<1x16xf32>
    %c0_458 = arith.constant 0 : index
    %c432 = arith.constant 432 : index
    %1105 = vector.load %arg12[%c0_458, %c432] : memref<2x512xf32, #tpu.memory_space<vmem>>, vector<1x16xf32>
    tpu.vector_store %arg12[%c0_458, %c432], %1104 {strides = array<i32>} : memref<2x512xf32, #tpu.memory_space<vmem>>, vector<1x16xf32>,
    %1106 = vector.extract_strided_slice %1017 {offsets = [12, 3], sizes = [1, 16], strides = [1, 1]} : vector<16x44xf32> to vector<1x16xf32>
    %c0_459 = arith.constant 0 : index
    %c448 = arith.constant 448 : index
    %1107 = vector.load %arg12[%c0_459, %c448] : memref<2x512xf32, #tpu.memory_space<vmem>>, vector<1x16xf32>
    tpu.vector_store %arg12[%c0_459, %c448], %1106 {strides = array<i32>} : memref<2x512xf32, #tpu.memory_space<vmem>>, vector<1x16xf32>,
    %1108 = vector.extract_strided_slice %1017 {offsets = [13, 3], sizes = [1, 16], strides = [1, 1]} : vector<16x44xf32> to vector<1x16xf32>
    %c0_460 = arith.constant 0 : index
    %c464 = arith.constant 464 : index
    %1109 = vector.load %arg12[%c0_460, %c464] : memref<2x512xf32, #tpu.memory_space<vmem>>, vector<1x16xf32>
    tpu.vector_store %arg12[%c0_460, %c464], %1108 {strides = array<i32>} : memref<2x512xf32, #tpu.memory_space<vmem>>, vector<1x16xf32>,
    %1110 = vector.extract_strided_slice %1017 {offsets = [14, 3], sizes = [1, 16], strides = [1, 1]} : vector<16x44xf32> to vector<1x16xf32>
    %c0_461 = arith.constant 0 : index
    %c480 = arith.constant 480 : index
    %1111 = vector.load %arg12[%c0_461, %c480] : memref<2x512xf32, #tpu.memory_space<vmem>>, vector<1x16xf32>
    tpu.vector_store %arg12[%c0_461, %c480], %1110 {strides = array<i32>} : memref<2x512xf32, #tpu.memory_space<vmem>>, vector<1x16xf32>,
    %1112 = vector.extract_strided_slice %1017 {offsets = [15, 3], sizes = [1, 16], strides = [1, 1]} : vector<16x44xf32> to vector<1x16xf32>
    %c0_462 = arith.constant 0 : index
    %c496 = arith.constant 496 : index
    %1113 = vector.load %arg12[%c0_462, %c496] : memref<2x512xf32, #tpu.memory_space<vmem>>, vector<1x16xf32>
    tpu.vector_store %arg12[%c0_462, %c496], %1112 {strides = array<i32>} : memref<2x512xf32, #tpu.memory_space<vmem>>, vector<1x16xf32>,
    %1114 = vector.extract_strided_slice %1017 {offsets = [0, 25], sizes = [1, 16], strides = [1, 1]} : vector<16x44xf32> to vector<1x16xf32>
    %c1_463 = arith.constant 1 : index
    %c256_464 = arith.constant 256 : index
    %1115 = vector.load %arg12[%c1_463, %c256_464] : memref<2x512xf32, #tpu.memory_space<vmem>>, vector<1x16xf32>
    tpu.vector_store %arg12[%c1_463, %c256_464], %1114 {strides = array<i32>} : memref<2x512xf32, #tpu.memory_space<vmem>>, vector<1x16xf32>,
    %1116 = vector.extract_strided_slice %1017 {offsets = [1, 25], sizes = [1, 16], strides = [1, 1]} : vector<16x44xf32> to vector<1x16xf32>
    %c1_465 = arith.constant 1 : index
    %c272_466 = arith.constant 272 : index
    %1117 = vector.load %arg12[%c1_465, %c272_466] : memref<2x512xf32, #tpu.memory_space<vmem>>, vector<1x16xf32>
    tpu.vector_store %arg12[%c1_465, %c272_466], %1116 {strides = array<i32>} : memref<2x512xf32, #tpu.memory_space<vmem>>, vector<1x16xf32>,
    %1118 = vector.extract_strided_slice %1017 {offsets = [2, 25], sizes = [1, 16], strides = [1, 1]} : vector<16x44xf32> to vector<1x16xf32>
    %c1_467 = arith.constant 1 : index
    %c288_468 = arith.constant 288 : index
    %1119 = vector.load %arg12[%c1_467, %c288_468] : memref<2x512xf32, #tpu.memory_space<vmem>>, vector<1x16xf32>
    tpu.vector_store %arg12[%c1_467, %c288_468], %1118 {strides = array<i32>} : memref<2x512xf32, #tpu.memory_space<vmem>>, vector<1x16xf32>,
    %1120 = vector.extract_strided_slice %1017 {offsets = [3, 25], sizes = [1, 16], strides = [1, 1]} : vector<16x44xf32> to vector<1x16xf32>
    %c1_469 = arith.constant 1 : index
    %c304_470 = arith.constant 304 : index
    %1121 = vector.load %arg12[%c1_469, %c304_470] : memref<2x512xf32, #tpu.memory_space<vmem>>, vector<1x16xf32>
    tpu.vector_store %arg12[%c1_469, %c304_470], %1120 {strides = array<i32>} : memref<2x512xf32, #tpu.memory_space<vmem>>, vector<1x16xf32>,
    %1122 = vector.extract_strided_slice %1017 {offsets = [4, 25], sizes = [1, 16], strides = [1, 1]} : vector<16x44xf32> to vector<1x16xf32>
    %c1_471 = arith.constant 1 : index
    %c320_472 = arith.constant 320 : index
    %1123 = vector.load %arg12[%c1_471, %c320_472] : memref<2x512xf32, #tpu.memory_space<vmem>>, vector<1x16xf32>
    tpu.vector_store %arg12[%c1_471, %c320_472], %1122 {strides = array<i32>} : memref<2x512xf32, #tpu.memory_space<vmem>>, vector<1x16xf32>,
    %1124 = vector.extract_strided_slice %1017 {offsets = [5, 25], sizes = [1, 16], strides = [1, 1]} : vector<16x44xf32> to vector<1x16xf32>
    %c1_473 = arith.constant 1 : index
    %c336_474 = arith.constant 336 : index
    %1125 = vector.load %arg12[%c1_473, %c336_474] : memref<2x512xf32, #tpu.memory_space<vmem>>, vector<1x16xf32>
    tpu.vector_store %arg12[%c1_473, %c336_474], %1124 {strides = array<i32>} : memref<2x512xf32, #tpu.memory_space<vmem>>, vector<1x16xf32>,
    %1126 = vector.extract_strided_slice %1017 {offsets = [6, 25], sizes = [1, 16], strides = [1, 1]} : vector<16x44xf32> to vector<1x16xf32>
    %c1_475 = arith.constant 1 : index
    %c352_476 = arith.constant 352 : index
    %1127 = vector.load %arg12[%c1_475, %c352_476] : memref<2x512xf32, #tpu.memory_space<vmem>>, vector<1x16xf32>
    tpu.vector_store %arg12[%c1_475, %c352_476], %1126 {strides = array<i32>} : memref<2x512xf32, #tpu.memory_space<vmem>>, vector<1x16xf32>,
    %1128 = vector.extract_strided_slice %1017 {offsets = [7, 25], sizes = [1, 16], strides = [1, 1]} : vector<16x44xf32> to vector<1x16xf32>
    %c1_477 = arith.constant 1 : index
    %c368_478 = arith.constant 368 : index
    %1129 = vector.load %arg12[%c1_477, %c368_478] : memref<2x512xf32, #tpu.memory_space<vmem>>, vector<1x16xf32>
    tpu.vector_store %arg12[%c1_477, %c368_478], %1128 {strides = array<i32>} : memref<2x512xf32, #tpu.memory_space<vmem>>, vector<1x16xf32>,
    %1130 = vector.extract_strided_slice %1017 {offsets = [8, 25], sizes = [1, 16], strides = [1, 1]} : vector<16x44xf32> to vector<1x16xf32>
    %c1_479 = arith.constant 1 : index
    %c384_480 = arith.constant 384 : index
    %1131 = vector.load %arg12[%c1_479, %c384_480] : memref<2x512xf32, #tpu.memory_space<vmem>>, vector<1x16xf32>
    tpu.vector_store %arg12[%c1_479, %c384_480], %1130 {strides = array<i32>} : memref<2x512xf32, #tpu.memory_space<vmem>>, vector<1x16xf32>,
    %1132 = vector.extract_strided_slice %1017 {offsets = [9, 25], sizes = [1, 16], strides = [1, 1]} : vector<16x44xf32> to vector<1x16xf32>
    %c1_481 = arith.constant 1 : index
    %c400_482 = arith.constant 400 : index
    %1133 = vector.load %arg12[%c1_481, %c400_482] : memref<2x512xf32, #tpu.memory_space<vmem>>, vector<1x16xf32>
    tpu.vector_store %arg12[%c1_481, %c400_482], %1132 {strides = array<i32>} : memref<2x512xf32, #tpu.memory_space<vmem>>, vector<1x16xf32>,
    %1134 = vector.extract_strided_slice %1017 {offsets = [10, 25], sizes = [1, 16], strides = [1, 1]} : vector<16x44xf32> to vector<1x16xf32>
    %c1_483 = arith.constant 1 : index
    %c416_484 = arith.constant 416 : index
    %1135 = vector.load %arg12[%c1_483, %c416_484] : memref<2x512xf32, #tpu.memory_space<vmem>>, vector<1x16xf32>
    tpu.vector_store %arg12[%c1_483, %c416_484], %1134 {strides = array<i32>} : memref<2x512xf32, #tpu.memory_space<vmem>>, vector<1x16xf32>,
    %1136 = vector.extract_strided_slice %1017 {offsets = [11, 25], sizes = [1, 16], strides = [1, 1]} : vector<16x44xf32> to vector<1x16xf32>
    %c1_485 = arith.constant 1 : index
    %c432_486 = arith.constant 432 : index
    %1137 = vector.load %arg12[%c1_485, %c432_486] : memref<2x512xf32, #tpu.memory_space<vmem>>, vector<1x16xf32>
    tpu.vector_store %arg12[%c1_485, %c432_486], %1136 {strides = array<i32>} : memref<2x512xf32, #tpu.memory_space<vmem>>, vector<1x16xf32>,
    %1138 = vector.extract_strided_slice %1017 {offsets = [12, 25], sizes = [1, 16], strides = [1, 1]} : vector<16x44xf32> to vector<1x16xf32>
    %c1_487 = arith.constant 1 : index
    %c448_488 = arith.constant 448 : index
    %1139 = vector.load %arg12[%c1_487, %c448_488] : memref<2x512xf32, #tpu.memory_space<vmem>>, vector<1x16xf32>
    tpu.vector_store %arg12[%c1_487, %c448_488], %1138 {strides = array<i32>} : memref<2x512xf32, #tpu.memory_space<vmem>>, vector<1x16xf32>,
    %1140 = vector.extract_strided_slice %1017 {offsets = [13, 25], sizes = [1, 16], strides = [1, 1]} : vector<16x44xf32> to vector<1x16xf32>
    %c1_489 = arith.constant 1 : index
    %c464_490 = arith.constant 464 : index
    %1141 = vector.load %arg12[%c1_489, %c464_490] : memref<2x512xf32, #tpu.memory_space<vmem>>, vector<1x16xf32>
    tpu.vector_store %arg12[%c1_489, %c464_490], %1140 {strides = array<i32>} : memref<2x512xf32, #tpu.memory_space<vmem>>, vector<1x16xf32>,
    %1142 = vector.extract_strided_slice %1017 {offsets = [14, 25], sizes = [1, 16], strides = [1, 1]} : vector<16x44xf32> to vector<1x16xf32>
    %c1_491 = arith.constant 1 : index
    %c480_492 = arith.constant 480 : index
    %1143 = vector.load %arg12[%c1_491, %c480_492] : memref<2x512xf32, #tpu.memory_space<vmem>>, vector<1x16xf32>
    tpu.vector_store %arg12[%c1_491, %c480_492], %1142 {strides = array<i32>} : memref<2x512xf32, #tpu.memory_space<vmem>>, vector<1x16xf32>,
    %1144 = vector.extract_strided_slice %1017 {offsets = [15, 25], sizes = [1, 16], strides = [1, 1]} : vector<16x44xf32> to vector<1x16xf32>
    %c1_493 = arith.constant 1 : index
    %c496_494 = arith.constant 496 : index
    %1145 = vector.load %arg12[%c1_493, %c496_494] : memref<2x512xf32, #tpu.memory_space<vmem>>, vector<1x16xf32>
    tpu.vector_store %arg12[%c1_493, %c496_494], %1144 {strides = array<i32>} : memref<2x512xf32, #tpu.memory_space<vmem>>, vector<1x16xf32>,
    tpu.wait_dma2 semaphore(%arg14 : memref<!tpu.dma_semaphore, #tpu.memory_space<semaphore_mem>>) src(%arg9 : memref<512x32xf32, #tpu.memory_space<any>>) dst(%arg13 : memref<512x32xf32, #tpu.memory_space<vmem>>)
    %c0_495 = arith.constant 0 : index
    %c0_496 = arith.constant 0 : index
    %1146 = vector.load %arg12[%c0_495, %c0_496] : memref<2x512xf32, #tpu.memory_space<vmem>>, vector<2x512xf32>
    %c0_497 = arith.constant 0 : index
    %c0_498 = arith.constant 0 : index
    %1147 = vector.load %arg13[%c0_497, %c0_498] : memref<512x32xf32, #tpu.memory_space<vmem>>, vector<512x32xf32>
    %cst_499 = arith.constant dense<0.000000e+00> : vector<2x32xf32>
    %1148 = tpu.matmul %1146, %1147, %cst_499 {dimension_numbers = #tpu.dot_dimension_numbers<[1], [0], [0], [1], [0, 0, 1, 1], [], []>} : vector<2x512xf32>, vector<512x32xf32>, vector<2x32xf32> -> vector<2x32xf32>
    %c0_500 = arith.constant 0 : index
    %c0_501 = arith.constant 0 : index
    %1149 = vector.load %arg8[%c0_500, %c0_501] : memref<1x32xf32, #tpu.memory_space<vmem>>, vector<1x32xf32>
    %1150 = vector.broadcast %1149 : vector<1x32xf32> to vector<2x32xf32>
    %1151 = arith.addf %1148, %1150 : vector<2x32xf32>
    %cst_502 = arith.constant 0.000000e+00 : f32
    %1152 = vector.broadcast %cst_502 : f32 to vector<2x32xf32>
    %1153 = arith.subf %1152, %1151 : vector<2x32xf32>
    %1154 = math.exp %1153 : vector<2x32xf32>
    %cst_503 = arith.constant 1.000000e+00 : f32
    %1155 = vector.broadcast %cst_503 : f32 to vector<2x32xf32>
    %1156 = arith.addf %1155, %1154 : vector<2x32xf32>
    %1157 = tpu.reciprocal %1156 {approx = true} : vector<2x32xf32> -> vector<2x32xf32>
    %c0_504 = arith.constant 0 : index
    %c0_505 = arith.constant 0 : index
    %1158 = vector.load %arg10[%c0_504, %c0_505] : memref<2x32xf32, #tpu.memory_space<vmem>>, vector<2x32xf32>
    tpu.vector_store %arg10[%c0_504, %c0_505], %1157 {strides = array<i32>} : memref<2x32xf32, #tpu.memory_space<vmem>>, vector<2x32xf32>,
    return
  }
}

</mosaic_0001>

<llo_original>
// kernel: custom-call.1
$region0: #{custom-call.1}
  %s0 = inlined_call_operand.hbm [shape: c64[2,16,16], index: 0, kind: input, shape index: {}]
  %s1 = inlined_call_operand.vmem [shape: f32[2,16,16], index: 1, kind: output, shape index: {}]
  %s2 = scalar_lea.hbm %s0, 512
  $region1: #{custom-call.1} parent=0
    #allocation0 [shape = 's32[1]{0}', space=sflag, size = 0x4, scoped, tag = 'scoped memory for custom-call.1']
    %3 = vsyncpa [#allocation0], 0
    %s4 = sshll.u32 %s1, 4
    %s5 = int_to_ptr.vmem [resolvable:$true] %s4
    %7 = dma.hbm_to_vmem [thread:$0]  %s2, 512, %s5, [#allocation0]
    %8 = dma.done [#allocation0], 512
    %9 = vsyncpa [#allocation0], 1

// kernel: custom-call
$region0: #{custom-call}
  %s0 = inlined_call_operand.hbm [shape: c64[2,16,16], index: 0, kind: input, shape index: {}]
  %s1 = inlined_call_operand.vmem [shape: f32[2,16,16], index: 1, kind: output, shape index: {}]
  $region1: #{custom-call} parent=0
    #allocation0 [shape = 's32[1]{0}', space=sflag, size = 0x4, scoped, tag = 'scoped memory for custom-call']
    %2 = vsyncpa [#allocation0], 0
    %s3 = sshll.u32 %s1, 4
    %s4 = int_to_ptr.vmem [resolvable:$true] %s3
    %6 = dma.hbm_to_vmem [thread:$0]  %s0, 512, %s4, [#allocation0]
    %7 = dma.done [#allocation0], 512
    %8 = vsyncpa [#allocation0], 1

// kernel: task2_encoder_forward.1
$region0: #{task2_encoder_forward.1}
  #allocation0 [shape = 'u32[]', space=smem, size = 0x4, offset = 0x4, fixed_abs, tag = 'smem constant byte address 0x4 - core index']
  #allocation1 [shape = 'u32[144,128]{1,0:T(1,128)}', space=vmem, size = 0x12000, scoped, tag = 'internal scratch']
  #allocation2 [shape = 'f32[22,100]{1,0:T(8,128)}', space=vmem, size = 0x3000, scoped, tag = 'scratch operand']
  #allocation3 [shape = 'f32[2,512]{1,0:T(2,128)}', space=vmem, size = 0x1000, scoped, tag = 'scratch operand']
  #allocation4 [shape = 'f32[512,32]{1,0:T(8,128)}', space=vmem, size = 0x40000, scoped, tag = 'scratch operand']
  #allocation5 [shape = 's32[1]{0}', space=sflag, size = 0x4, scoped, tag = 'scratch operand']
  #allocation15 [shape = 's32[]', space=sflag, size = 0x4, offset = 0, fixed_abs, tag = 'sflag constant byte address 0x0 - dummy sync flag']
  %s0 = inlined_call_operand.vmem [shape: f32[2,16,16], index: 0, kind: input, shape index: {}]
  %s1 = inlined_call_operand.vmem [shape: f32[2,16,16], index: 1, kind: input, shape index: {}]
  %s2 = inlined_call_operand.vmem [shape: f32[98,94], index: 2, kind: input, shape index: {}]
  %s3 = inlined_call_operand.vmem [shape: f32[98,94], index: 3, kind: input, shape index: {}]
  %s4 = inlined_call_operand.vmem [shape: f32[2], index: 4, kind: input, shape index: {}]
  %s5 = inlined_call_operand.vmem [shape: f32[2], index: 5, kind: input, shape index: {}]
  %s6 = inlined_call_operand.vmem [shape: f32[2], index: 6, kind: input, shape index: {}]
  %s7 = inlined_call_operand.vmem [shape: f32[2], index: 7, kind: input, shape index: {}]
  %s8 = inlined_call_operand.vmem [shape: f32[1,32], index: 8, kind: input, shape index: {}]
  %s9 = inlined_call_operand.vmem [shape: f32[512,32], index: 9, kind: input, shape index: {}]
  %s10 = inlined_call_operand.hbm [shape: f32[2,32], index: 10, kind: output, shape index: {}]
  %s11 = sld [smem:[#allocation0]]
  $region96: #{task2_encoder_forward.1} parent=0
    _
  %s13 = ssub.s32 1, %s11
  %s14 = scalar_select 0, %s13, %s11
  $region1: #{task2_encoder_forward.1} parent=0
    #allocation6 [shape = 'u8[512]{0}', space=smem, size = 0x200, scoped, tag = 'input window, operand 4, single buffered']
    #allocation7 [shape = 's32[1]{0}', space=sflag, size = 0x4, scoped, tag = 'scoped memory for task2_encoder_forward.1']
    #allocation8 [shape = 's32[1]{0}', space=sflag, size = 0x4, scoped, tag = 'scoped memory for task2_encoder_forward.1']
    #allocation9 [shape = 'u8[512]{0}', space=smem, size = 0x200, scoped, tag = 'input window, operand 5, single buffered']
    #allocation10 [shape = 's32[1]{0}', space=sflag, size = 0x4, scoped, tag = 'scoped memory for task2_encoder_forward.1']
    #allocation11 [shape = 'u8[512]{0}', space=smem, size = 0x200, scoped, tag = 'input window, operand 6, single buffered']
    #allocation12 [shape = 'u8[512]{0}', space=smem, size = 0x200, scoped, tag = 'input window, operand 7, single buffered']
    #allocation13 [shape = 's32[1]{0}', space=sflag, size = 0x4, scoped, tag = 'scoped memory for task2_encoder_forward.1']
    #allocation14 [shape = 'u8[1024]{0}', space=vmem, size = 0x400, scoped, tag = 'output window, operand 0, single buffered']
    %15 = vsyncpa [#allocation8], 0
    %16 = vsyncpa [#allocation10], 0
    %17 = vsyncpa [#allocation13], 0
    %18 = vsyncpa [#allocation7], 0
    // Predicated region
    $region2: #{task2_encoder_forward.1} parent=1 // pred_check
      _
    $region3: #{task2_encoder_forward.1} parent=1 // pred_check_branch
      %20 = sbr.rel (0) target = $region5
    $region4: #{task2_encoder_forward.1} parent=1 // pred_region
      _
    $region5: #{task2_encoder_forward.1} parent=1 // pred_fallthru
      _
    // Predicated region
    $region6: #{task2_encoder_forward.1} parent=1 // pred_check
      _
    $region7: #{task2_encoder_forward.1} parent=1 // pred_check_branch
      %22 = sbr.rel (0) target = $region9
    $region8: #{task2_encoder_forward.1} parent=1 // pred_region
      _
    $region9: #{task2_encoder_forward.1} parent=1 // pred_fallthru
      _
    // Predicated region
    $region10: #{task2_encoder_forward.1} parent=1 // pred_check
      _
    $region11: #{task2_encoder_forward.1} parent=1 // pred_check_branch
      %24 = sbr.rel (0) target = $region13
    $region12: #{task2_encoder_forward.1} parent=1 // pred_region
      _
    $region13: #{task2_encoder_forward.1} parent=1 // pred_fallthru
      _
    // Predicated region
    $region14: #{task2_encoder_forward.1} parent=1 // pred_check
      _
    $region15: #{task2_encoder_forward.1} parent=1 // pred_check_branch
      %26 = sbr.rel (0) target = $region17
    $region16: #{task2_encoder_forward.1} parent=1 // pred_region
      _
    $region17: #{task2_encoder_forward.1} parent=1 // pred_fallthru
      _
    // Predicated region
    $region18: #{task2_encoder_forward.1} parent=1 // pred_check
      _
    $region19: #{task2_encoder_forward.1} parent=1 // pred_check_branch
      %28 = sbr.rel (0) target = $region21
    $region20: #{task2_encoder_forward.1} parent=1 // pred_region
      %s30 = ssub.s32 16, 16
      %31 = vsyncadd [#allocation8], %s30
      %s33 = sshll.u32 %s4, 4
      %s34 = int_to_ptr.vmem [resolvable:$true] %s33
      %36 = dma.vmem_to_smem %s34, 16, [#allocation6], [#allocation8]
    $region21: #{task2_encoder_forward.1} parent=1 // pred_fallthru
      _
    // Predicated region
    $region22: #{task2_encoder_forward.1} parent=1 // pred_check
      _
    $region23: #{task2_encoder_forward.1} parent=1 // pred_check_branch
      %38 = sbr.rel (0) target = $region25
    $region24: #{task2_encoder_forward.1} parent=1 // pred_region
      %s40 = ssub.s32 16, 16
      %41 = vsyncadd [#allocation10], %s40
      %s43 = sshll.u32 %s5, 4
      %s44 = int_to_ptr.vmem [resolvable:$true] %s43
      %46 = dma.vmem_to_smem %s44, 16, [#allocation9], [#allocation10]
    $region25: #{task2_encoder_forward.1} parent=1 // pred_fallthru
      _
    // Predicated region
    $region26: #{task2_encoder_forward.1} parent=1 // pred_check
      _
    $region27: #{task2_encoder_forward.1} parent=1 // pred_check_branch
      %48 = sbr.rel (0) target = $region29
    $region28: #{task2_encoder_forward.1} parent=1 // pred_region
      %s50 = ssub.s32 16, 16
      %51 = vsyncadd [#allocation10], %s50
      %s53 = sshll.u32 %s6, 4
      %s54 = int_to_ptr.vmem [resolvable:$true] %s53
      %56 = dma.vmem_to_smem %s54, 16, [#allocation11], [#allocation10]
    $region29: #{task2_encoder_forward.1} parent=1 // pred_fallthru
      _
    // Predicated region
    $region30: #{task2_encoder_forward.1} parent=1 // pred_check
      _
    $region31: #{task2_encoder_forward.1} parent=1 // pred_check_branch
      %58 = sbr.rel (0) target = $region33
    $region32: #{task2_encoder_forward.1} parent=1 // pred_region
      %s60 = ssub.s32 16, 16
      %61 = vsyncadd [#allocation13], %s60
      %s63 = sshll.u32 %s7, 4
      %s64 = int_to_ptr.vmem [resolvable:$true] %s63
      %66 = dma.vmem_to_smem %s64, 16, [#allocation12], [#allocation13]
    $region33: #{task2_encoder_forward.1} parent=1 // pred_fallthru
      _
    // Predicated region
    $region34: #{task2_encoder_forward.1} parent=1 // pred_check
      _
    $region35: #{task2_encoder_forward.1} parent=1 // pred_check_branch
      %68 = sbr.rel (0) target = $region37
    $region36: #{task2_encoder_forward.1} parent=1 // pred_region
      _
    $region37: #{task2_encoder_forward.1} parent=1 // pred_fallthru
      _
    // Predicated region
    $region38: #{task2_encoder_forward.1} parent=1 // pred_check
      _
    $region39: #{task2_encoder_forward.1} parent=1 // pred_check_branch
      %70 = sbr.rel (0) target = $region41
    $region40: #{task2_encoder_forward.1} parent=1 // pred_region
      %71 = dma.done [#allocation8], 16
    $region41: #{task2_encoder_forward.1} parent=1 // pred_fallthru
      _
    // Predicated region
    $region42: #{task2_encoder_forward.1} parent=1 // pred_check
      _
    $region43: #{task2_encoder_forward.1} parent=1 // pred_check_branch
      %73 = sbr.rel (0) target = $region45
    $region44: #{task2_encoder_forward.1} parent=1 // pred_region
      %74 = dma.done [#allocation10], 16
    $region45: #{task2_encoder_forward.1} parent=1 // pred_fallthru
      _
    // Predicated region
    $region46: #{task2_encoder_forward.1} parent=1 // pred_check
      _
    $region47: #{task2_encoder_forward.1} parent=1 // pred_check_branch
      %76 = sbr.rel (0) target = $region49
    $region48: #{task2_encoder_forward.1} parent=1 // pred_region
      %77 = dma.done [#allocation10], 16
    $region49: #{task2_encoder_forward.1} parent=1 // pred_fallthru
      _
    // Predicated region
    $region50: #{task2_encoder_forward.1} parent=1 // pred_check
      _
    $region51: #{task2_encoder_forward.1} parent=1 // pred_check_branch
      %79 = sbr.rel (0) target = $region53
    $region52: #{task2_encoder_forward.1} parent=1 // pred_region
      %80 = dma.done [#allocation13], 16
    $region53: #{task2_encoder_forward.1} parent=1 // pred_fallthru
      _
    %81 = sfence
    %p83 = scmp.lt.u32.totalorder 512, 8
    %p84 = pneg %p83
    // Predicated region
    $region54: #{task2_encoder_forward.1} parent=1 // pred_check
      _
    $region55: #{task2_encoder_forward.1} parent=1 // pred_check_branch
      %86 = sbr.rel (%p83) target = $region57
    $region56: #{task2_encoder_forward.1} parent=1 // pred_region
      %s101 = sand.u32 512, 7
      %p102 = scmp.eq.s32.totalorder %s101, 0
      // Predicated region
      $region69: #{task2_encoder_forward.1} parent=56 // pred_check
        %p103 = pneg %p102
      $region70: #{task2_encoder_forward.1} parent=56 // pred_check_branch
        %105 = sbr.rel (%p103) target = $region72
      $region71: #{task2_encoder_forward.1} parent=56 // pred_region
        loop: start=0, step=1, limit=1
        $region73: #{task2_encoder_forward.1} parent=71 // loop_pre_header
          _
        $region74: #{task2_encoder_forward.1} parent=71 // loop_header
          %s107 = sphi 0, %s111
          %p108 = scmp.ge.s32.totalorder %s107, 1
          %s112 = sphi %s9, %s9
          %s113 = sphi [#allocation4], [#allocation4]
        $region75: #{task2_encoder_forward.1} parent=71 // loop_header_branch
          %110 = sbr.rel (%p108) target = $region79
        $region76: #{task2_encoder_forward.1} parent=71 // loop_body
          %v114 = vld [vmem:[%s112] sm:$0xff]
          %115 = vst [vmem:[%s113] sm:$0xff] %v114
          %v116 = vld [vmem:[%s112 + $0x8] sm:$0xff]
          %117 = vst [vmem:[%s113 + $0x8] sm:$0xff] %v116
          %v118 = vld [vmem:[%s112 + $0x10] sm:$0xff]
          %119 = vst [vmem:[%s113 + $0x10] sm:$0xff] %v118
          %v120 = vld [vmem:[%s112 + $0x18] sm:$0xff]
          %121 = vst [vmem:[%s113 + $0x18] sm:$0xff] %v120
          %v122 = vld [vmem:[%s112 + $0x20] sm:$0xff]
          %123 = vst [vmem:[%s113 + $0x20] sm:$0xff] %v122
          %v124 = vld [vmem:[%s112 + $0x28] sm:$0xff]
          %125 = vst [vmem:[%s113 + $0x28] sm:$0xff] %v124
          %v126 = vld [vmem:[%s112 + $0x30] sm:$0xff]
          %127 = vst [vmem:[%s113 + $0x30] sm:$0xff] %v126
          %v128 = vld [vmem:[%s112 + $0x38] sm:$0xff]
          %129 = vst [vmem:[%s113 + $0x38] sm:$0xff] %v128
          %v130 = vld [vmem:[%s112 + $0x40] sm:$0xff]
          %131 = vst [vmem:[%s113 + $0x40] sm:$0xff] %v130
          %v132 = vld [vmem:[%s112 + $0x48] sm:$0xff]
          %133 = vst [vmem:[%s113 + $0x48] sm:$0xff] %v132
          %v134 = vld [vmem:[%s112 + $0x50] sm:$0xff]
          %135 = vst [vmem:[%s113 + $0x50] sm:$0xff] %v134
          %v136 = vld [vmem:[%s112 + $0x58] sm:$0xff]
          %137 = vst [vmem:[%s113 + $0x58] sm:$0xff] %v136
          %v138 = vld [vmem:[%s112 + $0x60] sm:$0xff]
          %139 = vst [vmem:[%s113 + $0x60] sm:$0xff] %v138
          %v140 = vld [vmem:[%s112 + $0x68] sm:$0xff]
          %141 = vst [vmem:[%s113 + $0x68] sm:$0xff] %v140
          %v142 = vld [vmem:[%s112 + $0x70] sm:$0xff]
          %143 = vst [vmem:[%s113 + $0x70] sm:$0xff] %v142
          %v144 = vld [vmem:[%s112 + $0x78] sm:$0xff]
          %145 = vst [vmem:[%s113 + $0x78] sm:$0xff] %v144
          %v146 = vld [vmem:[%s112 + $0x80] sm:$0xff]
          %147 = vst [vmem:[%s113 + $0x80] sm:$0xff] %v146
          %v148 = vld [vmem:[%s112 + $0x88] sm:$0xff]
          %149 = vst [vmem:[%s113 + $0x88] sm:$0xff] %v148
          %v150 = vld [vmem:[%s112 + $0x90] sm:$0xff]
          %151 = vst [vmem:[%s113 + $0x90] sm:$0xff] %v150
          %v152 = vld [vmem:[%s112 + $0x98] sm:$0xff]
          %153 = vst [vmem:[%s113 + $0x98] sm:$0xff] %v152
          %v154 = vld [vmem:[%s112 + $0xa0] sm:$0xff]
          %155 = vst [vmem:[%s113 + $0xa0] sm:$0xff] %v154
          %v156 = vld [vmem:[%s112 + $0xa8] sm:$0xff]
          %157 = vst [vmem:[%s113 + $0xa8] sm:$0xff] %v156
          %v158 = vld [vmem:[%s112 + $0xb0] sm:$0xff]
          %159 = vst [vmem:[%s113 + $0xb0] sm:$0xff] %v158
          %v160 = vld [vmem:[%s112 + $0xb8] sm:$0xff]
          %161 = vst [vmem:[%s113 + $0xb8] sm:$0xff] %v160
          %v162 = vld [vmem:[%s112 + $0xc0] sm:$0xff]
          %163 = vst [vmem:[%s113 + $0xc0] sm:$0xff] %v162
          %v164 = vld [vmem:[%s112 + $0xc8] sm:$0xff]
          %165 = vst [vmem:[%s113 + $0xc8] sm:$0xff] %v164
          %v166 = vld [vmem:[%s112 + $0xd0] sm:$0xff]
          %167 = vst [vmem:[%s113 + $0xd0] sm:$0xff] %v166
          %v168 = vld [vmem:[%s112 + $0xd8] sm:$0xff]
          %169 = vst [vmem:[%s113 + $0xd8] sm:$0xff] %v168
          %v170 = vld [vmem:[%s112 + $0xe0] sm:$0xff]
          %171 = vst [vmem:[%s113 + $0xe0] sm:$0xff] %v170
          %v172 = vld [vmem:[%s112 + $0xe8] sm:$0xff]
          %173 = vst [vmem:[%s113 + $0xe8] sm:$0xff] %v172
          %v174 = vld [vmem:[%s112 + $0xf0] sm:$0xff]
          %175 = vst [vmem:[%s113 + $0xf0] sm:$0xff] %v174
          %v176 = vld [vmem:[%s112 + $0xf8] sm:$0xff]
          %177 = vst [vmem:[%s113 + $0xf8] sm:$0xff] %v176
          %v178 = vld [vmem:[%s112 + $0x100] sm:$0xff]
          %179 = vst [vmem:[%s113 + $0x100] sm:$0xff] %v178
          %v180 = vld [vmem:[%s112 + $0x108] sm:$0xff]
          %181 = vst [vmem:[%s113 + $0x108] sm:$0xff] %v180
          %v182 = vld [vmem:[%s112 + $0x110] sm:$0xff]
          %183 = vst [vmem:[%s113 + $0x110] sm:$0xff] %v182
          %v184 = vld [vmem:[%s112 + $0x118] sm:$0xff]
          %185 = vst [vmem:[%s113 + $0x118] sm:$0xff] %v184
          %v186 = vld [vmem:[%s112 + $0x120] sm:$0xff]
          %187 = vst [vmem:[%s113 + $0x120] sm:$0xff] %v186
          %v188 = vld [vmem:[%s112 + $0x128] sm:$0xff]
          %189 = vst [vmem:[%s113 + $0x128] sm:$0xff] %v188
          %v190 = vld [vmem:[%s112 + $0x130] sm:$0xff]
          %191 = vst [vmem:[%s113 + $0x130] sm:$0xff] %v190
          %v192 = vld [vmem:[%s112 + $0x138] sm:$0xff]
          %193 = vst [vmem:[%s113 + $0x138] sm:$0xff] %v192
          %v194 = vld [vmem:[%s112 + $0x140] sm:$0xff]
          %195 = vst [vmem:[%s113 + $0x140] sm:$0xff] %v194
          %v196 = vld [vmem:[%s112 + $0x148] sm:$0xff]
          %197 = vst [vmem:[%s113 + $0x148] sm:$0xff] %v196
          %v198 = vld [vmem:[%s112 + $0x150] sm:$0xff]
          %199 = vst [vmem:[%s113 + $0x150] sm:$0xff] %v198
          %v200 = vld [vmem:[%s112 + $0x158] sm:$0xff]
          %201 = vst [vmem:[%s113 + $0x158] sm:$0xff] %v200
          %v202 = vld [vmem:[%s112 + $0x160] sm:$0xff]
          %203 = vst [vmem:[%s113 + $0x160] sm:$0xff] %v202
          %v204 = vld [vmem:[%s112 + $0x168] sm:$0xff]
          %205 = vst [vmem:[%s113 + $0x168] sm:$0xff] %v204
          %v206 = vld [vmem:[%s112 + $0x170] sm:$0xff]
          %207 = vst [vmem:[%s113 + $0x170] sm:$0xff] %v206
          %v208 = vld [vmem:[%s112 + $0x178] sm:$0xff]
          %209 = vst [vmem:[%s113 + $0x178] sm:$0xff] %v208
          %v210 = vld [vmem:[%s112 + $0x180] sm:$0xff]
          %211 = vst [vmem:[%s113 + $0x180] sm:$0xff] %v210
          %v212 = vld [vmem:[%s112 + $0x188] sm:$0xff]
          %213 = vst [vmem:[%s113 + $0x188] sm:$0xff] %v212
          %v214 = vld [vmem:[%s112 + $0x190] sm:$0xff]
          %215 = vst [vmem:[%s113 + $0x190] sm:$0xff] %v214
          %v216 = vld [vmem:[%s112 + $0x198] sm:$0xff]
          %217 = vst [vmem:[%s113 + $0x198] sm:$0xff] %v216
          %v218 = vld [vmem:[%s112 + $0x1a0] sm:$0xff]
          %219 = vst [vmem:[%s113 + $0x1a0] sm:$0xff] %v218
          %v220 = vld [vmem:[%s112 + $0x1a8] sm:$0xff]
          %221 = vst [vmem:[%s113 + $0x1a8] sm:$0xff] %v220
          %v222 = vld [vmem:[%s112 + $0x1b0] sm:$0xff]
          %223 = vst [vmem:[%s113 + $0x1b0] sm:$0xff] %v222
          %v224 = vld [vmem:[%s112 + $0x1b8] sm:$0xff]
          %225 = vst [vmem:[%s113 + $0x1b8] sm:$0xff] %v224
          %v226 = vld [vmem:[%s112 + $0x1c0] sm:$0xff]
          %227 = vst [vmem:[%s113 + $0x1c0] sm:$0xff] %v226
          %v228 = vld [vmem:[%s112 + $0x1c8] sm:$0xff]
          %229 = vst [vmem:[%s113 + $0x1c8] sm:$0xff] %v228
          %v230 = vld [vmem:[%s112 + $0x1d0] sm:$0xff]
          %231 = vst [vmem:[%s113 + $0x1d0] sm:$0xff] %v230
          %v232 = vld [vmem:[%s112 + $0x1d8] sm:$0xff]
          %233 = vst [vmem:[%s113 + $0x1d8] sm:$0xff] %v232
          %v234 = vld [vmem:[%s112 + $0x1e0] sm:$0xff]
          %235 = vst [vmem:[%s113 + $0x1e0] sm:$0xff] %v234
          %v236 = vld [vmem:[%s112 + $0x1e8] sm:$0xff]
          %237 = vst [vmem:[%s113 + $0x1e8] sm:$0xff] %v236
          %v238 = vld [vmem:[%s112 + $0x1f0] sm:$0xff]
          %239 = vst [vmem:[%s113 + $0x1f0] sm:$0xff] %v238
          %v240 = vld [vmem:[%s112 + $0x1f8] sm:$0xff]
          %241 = vst [vmem:[%s113 + $0x1f8] sm:$0xff] %v240
        $region77: #{task2_encoder_forward.1} parent=71 // loop_footer
          %s111 = sadd.s32 1, %s107
        $region78: #{task2_encoder_forward.1} parent=71 // loop_footer_branch
          %106 = sbr.rel target = $region74
        $region79: #{task2_encoder_forward.1} parent=71 // loop_exit
          _
      $region72: #{task2_encoder_forward.1} parent=56 // pred_fallthru
        _
      %p242 = pneg %p102
      // Predicated region
      $region80: #{task2_encoder_forward.1} parent=56 // pred_check
        _
      $region81: #{task2_encoder_forward.1} parent=56 // pred_check_branch
        %244 = sbr.rel (%p102) target = $region83
      $region82: #{task2_encoder_forward.1} parent=56 // pred_region
        %s245 = sand.u32 512, 7
      $region83: #{task2_encoder_forward.1} parent=56 // pred_fallthru
        _
    $region57: #{task2_encoder_forward.1} parent=1 // pred_fallthru
      _
    // Predicated region
    $region58: #{task2_encoder_forward.1} parent=1 // pred_check
      %p87 = pneg %p83
    $region59: #{task2_encoder_forward.1} parent=1 // pred_check_branch
      %89 = sbr.rel (%p87) target = $region61
    $region60: #{task2_encoder_forward.1} parent=1 // pred_region
      %s90 = sshllo.u32 0, 512
      loop: start=0, step=1, limit=1
      $region62: #{task2_encoder_forward.1} parent=60 // loop_pre_header
        _
      $region63: #{task2_encoder_forward.1} parent=60 // loop_header
        %s92 = sphi 0, %s96
        %p93 = scmp.ge.s32.totalorder %s92, 1
        %s97 = sphi %s9, %s9
        %s98 = sphi [#allocation4], [#allocation4]
      $region64: #{task2_encoder_forward.1} parent=60 // loop_header_branch
        %95 = sbr.rel (%p93) target = $region68
      $region65: #{task2_encoder_forward.1} parent=60 // loop_body
        %v99 = vld [vmem:[%s97] sm:%s90]
        %100 = vst [vmem:[%s98] sm:%s90] %v99
      $region66: #{task2_encoder_forward.1} parent=60 // loop_footer
        %s96 = sadd.s32 1, %s92
      $region67: #{task2_encoder_forward.1} parent=60 // loop_footer_branch
        %91 = sbr.rel target = $region63
      $region68: #{task2_encoder_forward.1} parent=60 // loop_exit
        _
    $region61: #{task2_encoder_forward.1} parent=1 // pred_fallthru
      _
    // Predicated region
    $region84: #{task2_encoder_forward.1} parent=1 // pred_check
      _
    $region85: #{task2_encoder_forward.1} parent=1 // pred_check_branch
      %248 = sbr.rel (0) target = $region87
    $region86: #{task2_encoder_forward.1} parent=1 // pred_region
      %249 = vsyncadd [#allocation5], 8192
    $region87: #{task2_encoder_forward.1} parent=1 // pred_fallthru
      _
    %vm250 = vcmask 818176
    %251 = vst.msk [vmem:[#allocation2] sm:$0xff] %vm250, 0.0
    %252 = vst.msk [vmem:[#allocation2 + $0x8] sm:$0xff] %vm250, 0.0
    %vm253 = vcmask 816128
    %254 = vst.msk [vmem:[#allocation2 + $0x10] sm:$0x3f] %vm253, 0.0
    %v255 = vld [vmem:[%s0] sm:$0xff]
    %v256 = vld [vmem:[%s0 + $0x8] sm:$0xff]
    %v257 = vsub.f32 %v255, 0.1
    %v258 = vsub.f32 %v256, 0.1
    %v259 = vmul.f32 %v257, 0.8333333
    %v260 = vmul.f32 %v258, 0.8333333
    %263 = vrot.lane.b32.xlu0 %v259, 6
    %v264 = vpop.permute.xlu0 %263
    %265 = vrot.lane.b32.xlu0 %v260, 6
    %v266 = vpop.permute.xlu0 %265
    %vm269 = vcmask 179248
    %270 = vst.msk [vmem:[#allocation2 + $0x3] sm:$0xff] %vm269, %v264
    %271 = vst.msk [vmem:[#allocation2 + $0xb] sm:$0xff] %vm269, %v266
    %v272 = vld [vmem:[%s1] sm:$0xff]
    %v273 = vld [vmem:[%s1 + $0x8] sm:$0xff]
    %v274 = vsub.f32 %v272, -0.05
    %v275 = vsub.f32 %v273, -0.05
    %v276 = vmul.f32 %v274, 1.1111112
    %v277 = vmul.f32 %v275, 1.1111112
    %280 = vrot.lane.b32.xlu0 %v276, 56
    %v281 = vpop.permute.xlu0 %280
    %282 = vrot.lane.b32.xlu0 %v277, 56
    %v283 = vpop.permute.xlu0 %282
    %vm286 = vcmask 589248
    %287 = vst.msk [vmem:[#allocation2 + $0x3] sm:$0xff] %vm286, %v281
    %288 = vst.msk [vmem:[#allocation2 + $0xb] sm:$0xff] %vm286, %v283
    %s289 = scalar_lea.vmem %s0, 16
    %v290 = vld [vmem:[%s289] sm:$0xff]
    %v291 = vld [vmem:[%s289 + $0x8] sm:$0xff]
    %v292 = vsub.f32 %v290, 0.1
    %v293 = vsub.f32 %v291, 0.1
    %v294 = vmul.f32 %v292, 0.8333333
    %v295 = vmul.f32 %v293, 0.8333333
    %298 = vrot.lane.b32.xlu0 %v294, 28
    %v299 = vpop.permute.xlu0 %298
    %300 = vrot.lane.b32.xlu0 %v295, 28
    %v301 = vpop.permute.xlu0 %300
    %vm304 = vcmask 359648
    %305 = vst.msk [vmem:[#allocation2 + $0x3] sm:$0xff] %vm304, %v299
    %306 = vst.msk [vmem:[#allocation2 + $0xb] sm:$0xff] %vm304, %v301
    %s307 = scalar_lea.vmem %s1, 16
    %v308 = vld [vmem:[%s307] sm:$0xff]
    %v309 = vld [vmem:[%s307 + $0x8] sm:$0xff]
    %v310 = vsub.f32 %v308, -0.05
    %v311 = vsub.f32 %v309, -0.05
    %v312 = vmul.f32 %v310, 1.1111112
    %v313 = vmul.f32 %v311, 1.1111112
    %316 = vrot.lane.b32.xlu0 %v312, 78
    %v317 = vpop.permute.xlu0 %316
    %318 = vrot.lane.b32.xlu0 %v313, 78
    %v319 = vpop.permute.xlu0 %318
    %vm322 = vcmask 769648
    %323 = vst.msk [vmem:[#allocation2 + $0x3] sm:$0xff] %vm322, %v317
    %324 = vst.msk [vmem:[#allocation2 + $0xb] sm:$0xff] %vm322, %v319
    %v325 = vld [vmem:[#allocation2] sm:$0xff]
    %v326 = vld [vmem:[#allocation2 + $0x8] sm:$0xff]
    %v327 = vld [vmem:[%s2] sm:$0x1]
    %v328 = vlaneseq
    %v329 = vshrl.u32 %v328, 7
    %v330 = vsub.s32 0, %v329
    %v331 = vrot.slane %v327, %v330
    %v332 = vmul.f32 %v331, %v325
    %v333 = vmul.f32 %v331, %v326
    %v334 = vadd.f32 %v332, 0.0
    %v335 = vadd.f32 %v333, 0.0
    %v336 = vld [vmem:[%s2 + $0x31] sm:$0x1]
    %v337 = vlaneseq
    %v338 = vshrl.u32 %v337, 7
    %v339 = vsub.s32 0, %v338
    %v340 = vrot.slane %v336, %v339
    %v341 = vmul.f32 %v340, %v325
    %v342 = vmul.f32 %v340, %v326
    %v343 = vadd.f32 %v341, 0.0
    %v344 = vadd.f32 %v342, 0.0
    %v345 = vld [vmem:[%s2 + $0x1] sm:$0x1]
    %v346 = vlaneseq
    %v347 = vshrl.u32 %v346, 7
    %v348 = vsub.s32 0, %v347
    %v349 = vrot.slane %v345, %v348
    %352 = vrot.lane.b32.xlu0 %v325, 127
    %v353 = vpop.permute.xlu0 %352
    %354 = vrot.lane.b32.xlu0 %v326, 127
    %v355 = vpop.permute.xlu0 %354
    %v358 = vmul.f32 %v349, %v353
    %v359 = vmul.f32 %v349, %v355
    %v360 = vadd.f32 %v358, 0.0
    %v361 = vadd.f32 %v359, 0.0
    %v362 = vld [vmem:[%s2 + $0x32] sm:$0x1]
    %v363 = vlaneseq
    %v364 = vshrl.u32 %v363, 7
    %v365 = vsub.s32 0, %v364
    %v366 = vrot.slane %v362, %v365
    %v367 = vmul.f32 %v366, %v353
    %v368 = vmul.f32 %v366, %v355
    %v369 = vadd.f32 %v367, 0.0
    %v370 = vadd.f32 %v368, 0.0
    %v371 = vld [vmem:[%s2 + $0x2] sm:$0x1]
    %v372 = vlaneseq
    %v373 = vshrl.u32 %v372, 7
    %v374 = vsub.s32 0, %v373
    %v375 = vrot.slane %v371, %v374
    %376 = vrot.lane.b32.xlu0 %v325, 126
    %v377 = vpop.permute.xlu0 %376
    %378 = vrot.lane.b32.xlu0 %v326, 126
    %v379 = vpop.permute.xlu0 %378
    %v382 = vmul.f32 %v375, %v377
    %v383 = vmul.f32 %v375, %v379
    %v384 = vadd.f32 %v382, 0.0
    %v385 = vadd.f32 %v383, 0.0
    %v386 = vld [vmem:[%s2 + $0x33] sm:$0x1]
    %v387 = vlaneseq
    %v388 = vshrl.u32 %v387, 7
    %v389 = vsub.s32 0, %v388
    %v390 = vrot.slane %v386, %v389
    %v391 = vmul.f32 %v390, %v377
    %v392 = vmul.f32 %v390, %v379
    %v393 = vadd.f32 %v391, 0.0
    %v394 = vadd.f32 %v392, 0.0
    %v395 = vld [vmem:[%s2 + $0x3] sm:$0x1]
    %v396 = vlaneseq
    %v397 = vshrl.u32 %v396, 7
    %v398 = vsub.s32 0, %v397
    %v399 = vrot.slane %v395, %v398
    %400 = vrot.lane.b32.xlu0 %v325, 125
    %v401 = vpop.permute.xlu0 %400
    %402 = vrot.lane.b32.xlu0 %v326, 125
    %v403 = vpop.permute.xlu0 %402
    %v406 = vmul.f32 %v399, %v401
    %v407 = vmul.f32 %v399, %v403
    %v408 = vadd.f32 %v406, 0.0
    %v409 = vadd.f32 %v407, 0.0
    %v410 = vld [vmem:[%s2 + $0x34] sm:$0x1]
    %v411 = vlaneseq
    %v412 = vshrl.u32 %v411, 7
    %v413 = vsub.s32 0, %v412
    %v414 = vrot.slane %v410, %v413
    %v415 = vmul.f32 %v414, %v401
    %v416 = vmul.f32 %v414, %v403
    %v417 = vadd.f32 %v415, 0.0
    %v418 = vadd.f32 %v416, 0.0
    %v419 = vld [vmem:[%s2 + $0x4] sm:$0x1]
    %v420 = vlaneseq
    %v421 = vshrl.u32 %v420, 7
    %v422 = vsub.s32 0, %v421
    %v423 = vrot.slane %v419, %v422
    %424 = vrot.lane.b32.xlu0 %v325, 124
    %v425 = vpop.permute.xlu0 %424
    %426 = vrot.lane.b32.xlu0 %v326, 124
    %v427 = vpop.permute.xlu0 %426
    %v430 = vmul.f32 %v423, %v425
    %v431 = vmul.f32 %v423, %v427
    %v432 = vadd.f32 %v334, %v430
    %v433 = vadd.f32 %v335, %v431
    %v434 = vld [vmem:[%s2 + $0x35] sm:$0x1]
    %v435 = vlaneseq
    %v436 = vshrl.u32 %v435, 7
    %v437 = vsub.s32 0, %v436
    %v438 = vrot.slane %v434, %v437
    %v439 = vmul.f32 %v438, %v425
    %v440 = vmul.f32 %v438, %v427
    %v441 = vadd.f32 %v343, %v439
    %v442 = vadd.f32 %v344, %v440
    %v443 = vld [vmem:[%s2 + $0x5] sm:$0x1]
    %v444 = vlaneseq
    %v445 = vshrl.u32 %v444, 7
    %v446 = vsub.s32 0, %v445
    %v447 = vrot.slane %v443, %v446
    %448 = vrot.lane.b32.xlu0 %v325, 123
    %v449 = vpop.permute.xlu0 %448
    %450 = vrot.lane.b32.xlu0 %v326, 123
    %v451 = vpop.permute.xlu0 %450
    %v454 = vmul.f32 %v447, %v449
    %v455 = vmul.f32 %v447, %v451
    %v456 = vadd.f32 %v360, %v454
    %v457 = vadd.f32 %v361, %v455
    %v458 = vld [vmem:[%s2 + $0x36] sm:$0x1]
    %v459 = vlaneseq
    %v460 = vshrl.u32 %v459, 7
    %v461 = vsub.s32 0, %v460
    %v462 = vrot.slane %v458, %v461
    %v463 = vmul.f32 %v462, %v449
    %v464 = vmul.f32 %v462, %v451
    %v465 = vadd.f32 %v369, %v463
    %v466 = vadd.f32 %v370, %v464
    %v467 = vld [vmem:[%s2 + $0x6] sm:$0x1]
    %v468 = vlaneseq
    %v469 = vshrl.u32 %v468, 7
    %v470 = vsub.s32 0, %v469
    %v471 = vrot.slane %v467, %v470
    %472 = vrot.lane.b32.xlu0 %v325, 122
    %v473 = vpop.permute.xlu0 %472
    %474 = vrot.lane.b32.xlu0 %v326, 122
    %v475 = vpop.permute.xlu0 %474
    %v478 = vmul.f32 %v471, %v473
    %v479 = vmul.f32 %v471, %v475
    %v480 = vadd.f32 %v384, %v478
    %v481 = vadd.f32 %v385, %v479
    %v482 = vld [vmem:[%s2 + $0x37] sm:$0x1]
    %v483 = vlaneseq
    %v484 = vshrl.u32 %v483, 7
    %v485 = vsub.s32 0, %v484
    %v486 = vrot.slane %v482, %v485
    %v487 = vmul.f32 %v486, %v473
    %v488 = vmul.f32 %v486, %v475
    %v489 = vadd.f32 %v393, %v487
    %v490 = vadd.f32 %v394, %v488
    %v491 = vld [vmem:[#allocation2 + $0x1] sm:$0xff]
    %v492 = vld [vmem:[#allocation2 + $0x9] sm:$0xff]
    %v493 = vld [vmem:[%s2 + $0x7] sm:$0x1]
    %v494 = vlaneseq
    %v495 = vshrl.u32 %v494, 7
    %v496 = vsub.s32 0, %v495
    %v497 = vrot.slane %v493, %v496
    %v498 = vmul.f32 %v497, %v491
    %v499 = vmul.f32 %v497, %v492
    %v500 = vadd.f32 %v408, %v498
    %v501 = vadd.f32 %v409, %v499
    %v502 = vld [vmem:[%s2 + $0x38] sm:$0x1]
    %v503 = vlaneseq
    %v504 = vshrl.u32 %v503, 7
    %v505 = vsub.s32 0, %v504
    %v506 = vrot.slane %v502, %v505
    %v507 = vmul.f32 %v506, %v491
    %v508 = vmul.f32 %v506, %v492
    %v509 = vadd.f32 %v417, %v507
    %v510 = vadd.f32 %v418, %v508
    %v511 = vld [vmem:[%s2 + $0x8] sm:$0x1]
    %v512 = vlaneseq
    %v513 = vshrl.u32 %v512, 7
    %v514 = vsub.s32 0, %v513
    %v515 = vrot.slane %v511, %v514
    %518 = vrot.lane.b32.xlu0 %v491, 127
    %v519 = vpop.permute.xlu0 %518
    %520 = vrot.lane.b32.xlu0 %v492, 127
    %v521 = vpop.permute.xlu0 %520
    %v524 = vmul.f32 %v515, %v519
    %v525 = vmul.f32 %v515, %v521
    %v526 = vadd.f32 %v432, %v524
    %v527 = vadd.f32 %v433, %v525
    %v528 = vld [vmem:[%s2 + $0x39] sm:$0x1]
    %v529 = vlaneseq
    %v530 = vshrl.u32 %v529, 7
    %v531 = vsub.s32 0, %v530
    %v532 = vrot.slane %v528, %v531
    %v533 = vmul.f32 %v532, %v519
    %v534 = vmul.f32 %v532, %v521
    %v535 = vadd.f32 %v441, %v533
    %v536 = vadd.f32 %v442, %v534
    %v537 = vld [vmem:[%s2 + $0x9] sm:$0x1]
    %v538 = vlaneseq
    %v539 = vshrl.u32 %v538, 7
    %v540 = vsub.s32 0, %v539
    %v541 = vrot.slane %v537, %v540
    %542 = vrot.lane.b32.xlu0 %v491, 126
    %v543 = vpop.permute.xlu0 %542
    %544 = vrot.lane.b32.xlu0 %v492, 126
    %v545 = vpop.permute.xlu0 %544
    %v548 = vmul.f32 %v541, %v543
    %v549 = vmul.f32 %v541, %v545
    %v550 = vadd.f32 %v456, %v548
    %v551 = vadd.f32 %v457, %v549
    %v552 = vld [vmem:[%s2 + $0x3a] sm:$0x1]
    %v553 = vlaneseq
    %v554 = vshrl.u32 %v553, 7
    %v555 = vsub.s32 0, %v554
    %v556 = vrot.slane %v552, %v555
    %v557 = vmul.f32 %v556, %v543
    %v558 = vmul.f32 %v556, %v545
    %v559 = vadd.f32 %v465, %v557
    %v560 = vadd.f32 %v466, %v558
    %v561 = vld [vmem:[%s2 + $0xa] sm:$0x1]
    %v562 = vlaneseq
    %v563 = vshrl.u32 %v562, 7
    %v564 = vsub.s32 0, %v563
    %v565 = vrot.slane %v561, %v564
    %566 = vrot.lane.b32.xlu0 %v491, 125
    %v567 = vpop.permute.xlu0 %566
    %568 = vrot.lane.b32.xlu0 %v492, 125
    %v569 = vpop.permute.xlu0 %568
    %v572 = vmul.f32 %v565, %v567
    %v573 = vmul.f32 %v565, %v569
    %v574 = vadd.f32 %v480, %v572
    %v575 = vadd.f32 %v481, %v573
    %v576 = vld [vmem:[%s2 + $0x3b] sm:$0x1]
    %v577 = vlaneseq
    %v578 = vshrl.u32 %v577, 7
    %v579 = vsub.s32 0, %v578
    %v580 = vrot.slane %v576, %v579
    %v581 = vmul.f32 %v580, %v567
    %v582 = vmul.f32 %v580, %v569
    %v583 = vadd.f32 %v489, %v581
    %v584 = vadd.f32 %v490, %v582
    %v585 = vld [vmem:[%s2 + $0xb] sm:$0x1]
    %v586 = vlaneseq
    %v587 = vshrl.u32 %v586, 7
    %v588 = vsub.s32 0, %v587
    %v589 = vrot.slane %v585, %v588
    %590 = vrot.lane.b32.xlu0 %v491, 124
    %v591 = vpop.permute.xlu0 %590
    %592 = vrot.lane.b32.xlu0 %v492, 124
    %v593 = vpop.permute.xlu0 %592
    %v596 = vmul.f32 %v589, %v591
    %v597 = vmul.f32 %v589, %v593
    %v598 = vadd.f32 %v500, %v596
    %v599 = vadd.f32 %v501, %v597
    %v600 = vld [vmem:[%s2 + $0x3c] sm:$0x1]
    %v601 = vlaneseq
    %v602 = vshrl.u32 %v601, 7
    %v603 = vsub.s32 0, %v602
    %v604 = vrot.slane %v600, %v603
    %v605 = vmul.f32 %v604, %v591
    %v606 = vmul.f32 %v604, %v593
    %v607 = vadd.f32 %v509, %v605
    %v608 = vadd.f32 %v510, %v606
    %v609 = vld [vmem:[%s2 + $0xc] sm:$0x1]
    %v610 = vlaneseq
    %v611 = vshrl.u32 %v610, 7
    %v612 = vsub.s32 0, %v611
    %v613 = vrot.slane %v609, %v612
    %614 = vrot.lane.b32.xlu0 %v491, 123
    %v615 = vpop.permute.xlu0 %614
    %616 = vrot.lane.b32.xlu0 %v492, 123
    %v617 = vpop.permute.xlu0 %616
    %v620 = vmul.f32 %v613, %v615
    %v621 = vmul.f32 %v613, %v617
    %v622 = vadd.f32 %v526, %v620
    %v623 = vadd.f32 %v527, %v621
    %v624 = vld [vmem:[%s2 + $0x3d] sm:$0x1]
    %v625 = vlaneseq
    %v626 = vshrl.u32 %v625, 7
    %v627 = vsub.s32 0, %v626
    %v628 = vrot.slane %v624, %v627
    %v629 = vmul.f32 %v628, %v615
    %v630 = vmul.f32 %v628, %v617
    %v631 = vadd.f32 %v535, %v629
    %v632 = vadd.f32 %v536, %v630
    %v633 = vld [vmem:[%s2 + $0xd] sm:$0x1]
    %v634 = vlaneseq
    %v635 = vshrl.u32 %v634, 7
    %v636 = vsub.s32 0, %v635
    %v637 = vrot.slane %v633, %v636
    %638 = vrot.lane.b32.xlu0 %v491, 122
    %v639 = vpop.permute.xlu0 %638
    %640 = vrot.lane.b32.xlu0 %v492, 122
    %v641 = vpop.permute.xlu0 %640
    %v644 = vmul.f32 %v637, %v639
    %v645 = vmul.f32 %v637, %v641
    %v646 = vadd.f32 %v550, %v644
    %v647 = vadd.f32 %v551, %v645
    %v648 = vld [vmem:[%s2 + $0x3e] sm:$0x1]
    %v649 = vlaneseq
    %v650 = vshrl.u32 %v649, 7
    %v651 = vsub.s32 0, %v650
    %v652 = vrot.slane %v648, %v651
    %v653 = vmul.f32 %v652, %v639
    %v654 = vmul.f32 %v652, %v641
    %v655 = vadd.f32 %v559, %v653
    %v656 = vadd.f32 %v560, %v654
    %v657 = vld [vmem:[#allocation2 + $0x2] sm:$0xff]
    %v658 = vld [vmem:[#allocation2 + $0xa] sm:$0xff]
    %v659 = vld [vmem:[%s2 + $0xe] sm:$0x1]
    %v660 = vlaneseq
    %v661 = vshrl.u32 %v660, 7
    %v662 = vsub.s32 0, %v661
    %v663 = vrot.slane %v659, %v662
    %v664 = vmul.f32 %v663, %v657
    %v665 = vmul.f32 %v663, %v658
    %v666 = vadd.f32 %v574, %v664
    %v667 = vadd.f32 %v575, %v665
    %v668 = vld [vmem:[%s2 + $0x3f] sm:$0x1]
    %v669 = vlaneseq
    %v670 = vshrl.u32 %v669, 7
    %v671 = vsub.s32 0, %v670
    %v672 = vrot.slane %v668, %v671
    %v673 = vmul.f32 %v672, %v657
    %v674 = vmul.f32 %v672, %v658
    %v675 = vadd.f32 %v583, %v673
    %v676 = vadd.f32 %v584, %v674
    %v677 = vld [vmem:[%s2 + $0xf] sm:$0x1]
    %v678 = vlaneseq
    %v679 = vshrl.u32 %v678, 7
    %v680 = vsub.s32 0, %v679
    %v681 = vrot.slane %v677, %v680
    %684 = vrot.lane.b32.xlu0 %v657, 127
    %v685 = vpop.permute.xlu0 %684
    %686 = vrot.lane.b32.xlu0 %v658, 127
    %v687 = vpop.permute.xlu0 %686
    %v690 = vmul.f32 %v681, %v685
    %v691 = vmul.f32 %v681, %v687
    %v692 = vadd.f32 %v598, %v690
    %v693 = vadd.f32 %v599, %v691
    %v694 = vld [vmem:[%s2 + $0x40] sm:$0x1]
    %v695 = vlaneseq
    %v696 = vshrl.u32 %v695, 7
    %v697 = vsub.s32 0, %v696
    %v698 = vrot.slane %v694, %v697
    %v699 = vmul.f32 %v698, %v685
    %v700 = vmul.f32 %v698, %v687
    %v701 = vadd.f32 %v607, %v699
    %v702 = vadd.f32 %v608, %v700
    %v703 = vld [vmem:[%s2 + $0x10] sm:$0x1]
    %v704 = vlaneseq
    %v705 = vshrl.u32 %v704, 7
    %v706 = vsub.s32 0, %v705
    %v707 = vrot.slane %v703, %v706
    %708 = vrot.lane.b32.xlu0 %v657, 126
    %v709 = vpop.permute.xlu0 %708
    %710 = vrot.lane.b32.xlu0 %v658, 126
    %v711 = vpop.permute.xlu0 %710
    %v714 = vmul.f32 %v707, %v709
    %v715 = vmul.f32 %v707, %v711
    %v716 = vadd.f32 %v622, %v714
    %v717 = vadd.f32 %v623, %v715
    %v718 = vld [vmem:[%s2 + $0x41] sm:$0x1]
    %v719 = vlaneseq
    %v720 = vshrl.u32 %v719, 7
    %v721 = vsub.s32 0, %v720
    %v722 = vrot.slane %v718, %v721
    %v723 = vmul.f32 %v722, %v709
    %v724 = vmul.f32 %v722, %v711
    %v725 = vadd.f32 %v631, %v723
    %v726 = vadd.f32 %v632, %v724
    %v727 = vld [vmem:[%s2 + $0x11] sm:$0x1]
    %v728 = vlaneseq
    %v729 = vshrl.u32 %v728, 7
    %v730 = vsub.s32 0, %v729
    %v731 = vrot.slane %v727, %v730
    %732 = vrot.lane.b32.xlu0 %v657, 125
    %v733 = vpop.permute.xlu0 %732
    %734 = vrot.lane.b32.xlu0 %v658, 125
    %v735 = vpop.permute.xlu0 %734
    %v738 = vmul.f32 %v731, %v733
    %v739 = vmul.f32 %v731, %v735
    %v740 = vadd.f32 %v646, %v738
    %v741 = vadd.f32 %v647, %v739
    %v742 = vld [vmem:[%s2 + $0x42] sm:$0x1]
    %v743 = vlaneseq
    %v744 = vshrl.u32 %v743, 7
    %v745 = vsub.s32 0, %v744
    %v746 = vrot.slane %v742, %v745
    %v747 = vmul.f32 %v746, %v733
    %v748 = vmul.f32 %v746, %v735
    %v749 = vadd.f32 %v655, %v747
    %v750 = vadd.f32 %v656, %v748
    %v751 = vld [vmem:[%s2 + $0x12] sm:$0x1]
    %v752 = vlaneseq
    %v753 = vshrl.u32 %v752, 7
    %v754 = vsub.s32 0, %v753
    %v755 = vrot.slane %v751, %v754
    %756 = vrot.lane.b32.xlu0 %v657, 124
    %v757 = vpop.permute.xlu0 %756
    %758 = vrot.lane.b32.xlu0 %v658, 124
    %v759 = vpop.permute.xlu0 %758
    %v762 = vmul.f32 %v755, %v757
    %v763 = vmul.f32 %v755, %v759
    %v764 = vadd.f32 %v666, %v762
    %v765 = vadd.f32 %v667, %v763
    %v766 = vld [vmem:[%s2 + $0x43] sm:$0x1]
    %v767 = vlaneseq
    %v768 = vshrl.u32 %v767, 7
    %v769 = vsub.s32 0, %v768
    %v770 = vrot.slane %v766, %v769
    %v771 = vmul.f32 %v770, %v757
    %v772 = vmul.f32 %v770, %v759
    %v773 = vadd.f32 %v675, %v771
    %v774 = vadd.f32 %v676, %v772
    %v775 = vld [vmem:[%s2 + $0x13] sm:$0x1]
    %v776 = vlaneseq
    %v777 = vshrl.u32 %v776, 7
    %v778 = vsub.s32 0, %v777
    %v779 = vrot.slane %v775, %v778
    %780 = vrot.lane.b32.xlu0 %v657, 123
    %v781 = vpop.permute.xlu0 %780
    %782 = vrot.lane.b32.xlu0 %v658, 123
    %v783 = vpop.permute.xlu0 %782
    %v786 = vmul.f32 %v779, %v781
    %v787 = vmul.f32 %v779, %v783
    %v788 = vadd.f32 %v692, %v786
    %v789 = vadd.f32 %v693, %v787
    %v790 = vld [vmem:[%s2 + $0x44] sm:$0x1]
    %v791 = vlaneseq
    %v792 = vshrl.u32 %v791, 7
    %v793 = vsub.s32 0, %v792
    %v794 = vrot.slane %v790, %v793
    %v795 = vmul.f32 %v794, %v781
    %v796 = vmul.f32 %v794, %v783
    %v797 = vadd.f32 %v701, %v795
    %v798 = vadd.f32 %v702, %v796
    %v799 = vld [vmem:[%s2 + $0x14] sm:$0x1]
    %v800 = vlaneseq
    %v801 = vshrl.u32 %v800, 7
    %v802 = vsub.s32 0, %v801
    %v803 = vrot.slane %v799, %v802
    %804 = vrot.lane.b32.xlu0 %v657, 122
    %v805 = vpop.permute.xlu0 %804
    %806 = vrot.lane.b32.xlu0 %v658, 122
    %v807 = vpop.permute.xlu0 %806
    %v810 = vmul.f32 %v803, %v805
    %v811 = vmul.f32 %v803, %v807
    %v812 = vadd.f32 %v716, %v810
    %v813 = vadd.f32 %v717, %v811
    %v814 = vld [vmem:[%s2 + $0x45] sm:$0x1]
    %v815 = vlaneseq
    %v816 = vshrl.u32 %v815, 7
    %v817 = vsub.s32 0, %v816
    %v818 = vrot.slane %v814, %v817
    %v819 = vmul.f32 %v818, %v805
    %v820 = vmul.f32 %v818, %v807
    %v821 = vadd.f32 %v725, %v819
    %v822 = vadd.f32 %v726, %v820
    %v823 = vld [vmem:[#allocation2 + $0x3] sm:$0xff]
    %v824 = vld [vmem:[#allocation2 + $0xb] sm:$0xff]
    %v825 = vld [vmem:[%s2 + $0x15] sm:$0x1]
    %v826 = vlaneseq
    %v827 = vshrl.u32 %v826, 7
    %v828 = vsub.s32 0, %v827
    %v829 = vrot.slane %v825, %v828
    %v830 = vmul.f32 %v829, %v823
    %v831 = vmul.f32 %v829, %v824
    %v832 = vadd.f32 %v740, %v830
    %v833 = vadd.f32 %v741, %v831
    %v834 = vld [vmem:[%s2 + $0x46] sm:$0x1]
    %v835 = vlaneseq
    %v836 = vshrl.u32 %v835, 7
    %v837 = vsub.s32 0, %v836
    %v838 = vrot.slane %v834, %v837
    %v839 = vmul.f32 %v838, %v823
    %v840 = vmul.f32 %v838, %v824
    %v841 = vadd.f32 %v749, %v839
    %v842 = vadd.f32 %v750, %v840
    %v843 = vld [vmem:[%s2 + $0x16] sm:$0x1]
    %v844 = vlaneseq
    %v845 = vshrl.u32 %v844, 7
    %v846 = vsub.s32 0, %v845
    %v847 = vrot.slane %v843, %v846
    %850 = vrot.lane.b32.xlu0 %v823, 127
    %v851 = vpop.permute.xlu0 %850
    %852 = vrot.lane.b32.xlu0 %v824, 127
    %v853 = vpop.permute.xlu0 %852
    %v856 = vmul.f32 %v847, %v851
    %v857 = vmul.f32 %v847, %v853
    %v858 = vadd.f32 %v764, %v856
    %v859 = vadd.f32 %v765, %v857
    %v860 = vld [vmem:[%s2 + $0x47] sm:$0x1]
    %v861 = vlaneseq
    %v862 = vshrl.u32 %v861, 7
    %v863 = vsub.s32 0, %v862
    %v864 = vrot.slane %v860, %v863
    %v865 = vmul.f32 %v864, %v851
    %v866 = vmul.f32 %v864, %v853
    %v867 = vadd.f32 %v773, %v865
    %v868 = vadd.f32 %v774, %v866
    %v869 = vld [vmem:[%s2 + $0x17] sm:$0x1]
    %v870 = vlaneseq
    %v871 = vshrl.u32 %v870, 7
    %v872 = vsub.s32 0, %v871
    %v873 = vrot.slane %v869, %v872
    %874 = vrot.lane.b32.xlu0 %v823, 126
    %v875 = vpop.permute.xlu0 %874
    %876 = vrot.lane.b32.xlu0 %v824, 126
    %v877 = vpop.permute.xlu0 %876
    %v880 = vmul.f32 %v873, %v875
    %v881 = vmul.f32 %v873, %v877
    %v882 = vadd.f32 %v788, %v880
    %v883 = vadd.f32 %v789, %v881
    %v884 = vld [vmem:[%s2 + $0x48] sm:$0x1]
    %v885 = vlaneseq
    %v886 = vshrl.u32 %v885, 7
    %v887 = vsub.s32 0, %v886
    %v888 = vrot.slane %v884, %v887
    %v889 = vmul.f32 %v888, %v875
    %v890 = vmul.f32 %v888, %v877
    %v891 = vadd.f32 %v797, %v889
    %v892 = vadd.f32 %v798, %v890
    %v893 = vld [vmem:[%s2 + $0x18] sm:$0x1]
    %v894 = vlaneseq
    %v895 = vshrl.u32 %v894, 7
    %v896 = vsub.s32 0, %v895
    %v897 = vrot.slane %v893, %v896
    %898 = vrot.lane.b32.xlu0 %v823, 125
    %v899 = vpop.permute.xlu0 %898
    %900 = vrot.lane.b32.xlu0 %v824, 125
    %v901 = vpop.permute.xlu0 %900
    %v904 = vmul.f32 %v897, %v899
    %v905 = vmul.f32 %v897, %v901
    %v906 = vadd.f32 %v812, %v904
    %v907 = vadd.f32 %v813, %v905
    %v908 = vld [vmem:[%s2 + $0x49] sm:$0x1]
    %v909 = vlaneseq
    %v910 = vshrl.u32 %v909, 7
    %v911 = vsub.s32 0, %v910
    %v912 = vrot.slane %v908, %v911
    %v913 = vmul.f32 %v912, %v899
    %v914 = vmul.f32 %v912, %v901
    %v915 = vadd.f32 %v821, %v913
    %v916 = vadd.f32 %v822, %v914
    %v917 = vld [vmem:[%s2 + $0x19] sm:$0x1]
    %v918 = vlaneseq
    %v919 = vshrl.u32 %v918, 7
    %v920 = vsub.s32 0, %v919
    %v921 = vrot.slane %v917, %v920
    %922 = vrot.lane.b32.xlu0 %v823, 124
    %v923 = vpop.permute.xlu0 %922
    %924 = vrot.lane.b32.xlu0 %v824, 124
    %v925 = vpop.permute.xlu0 %924
    %v928 = vmul.f32 %v921, %v923
    %v929 = vmul.f32 %v921, %v925
    %v930 = vadd.f32 %v832, %v928
    %v931 = vadd.f32 %v833, %v929
    %v932 = vld [vmem:[%s2 + $0x4a] sm:$0x1]
    %v933 = vlaneseq
    %v934 = vshrl.u32 %v933, 7
    %v935 = vsub.s32 0, %v934
    %v936 = vrot.slane %v932, %v935
    %v937 = vmul.f32 %v936, %v923
    %v938 = vmul.f32 %v936, %v925
    %v939 = vadd.f32 %v841, %v937
    %v940 = vadd.f32 %v842, %v938
    %v941 = vld [vmem:[%s2 + $0x1a] sm:$0x1]
    %v942 = vlaneseq
    %v943 = vshrl.u32 %v942, 7
    %v944 = vsub.s32 0, %v943
    %v945 = vrot.slane %v941, %v944
    %946 = vrot.lane.b32.xlu0 %v823, 123
    %v947 = vpop.permute.xlu0 %946
    %948 = vrot.lane.b32.xlu0 %v824, 123
    %v949 = vpop.permute.xlu0 %948
    %v952 = vmul.f32 %v945, %v947
    %v953 = vmul.f32 %v945, %v949
    %v954 = vadd.f32 %v858, %v952
    %v955 = vadd.f32 %v859, %v953
    %v956 = vld [vmem:[%s2 + $0x4b] sm:$0x1]
    %v957 = vlaneseq
    %v958 = vshrl.u32 %v957, 7
    %v959 = vsub.s32 0, %v958
    %v960 = vrot.slane %v956, %v959
    %v961 = vmul.f32 %v960, %v947
    %v962 = vmul.f32 %v960, %v949
    %v963 = vadd.f32 %v867, %v961
    %v964 = vadd.f32 %v868, %v962
    %v965 = vld [vmem:[%s2 + $0x1b] sm:$0x1]
    %v966 = vlaneseq
    %v967 = vshrl.u32 %v966, 7
    %v968 = vsub.s32 0, %v967
    %v969 = vrot.slane %v965, %v968
    %970 = vrot.lane.b32.xlu0 %v823, 122
    %v971 = vpop.permute.xlu0 %970
    %972 = vrot.lane.b32.xlu0 %v824, 122
    %v973 = vpop.permute.xlu0 %972
    %v976 = vmul.f32 %v969, %v971
    %v977 = vmul.f32 %v969, %v973
    %v978 = vadd.f32 %v882, %v976
    %v979 = vadd.f32 %v883, %v977
    %v980 = vld [vmem:[%s2 + $0x4c] sm:$0x1]
    %v981 = vlaneseq
    %v982 = vshrl.u32 %v981, 7
    %v983 = vsub.s32 0, %v982
    %v984 = vrot.slane %v980, %v983
    %v985 = vmul.f32 %v984, %v971
    %v986 = vmul.f32 %v984, %v973
    %v987 = vadd.f32 %v891, %v985
    %v988 = vadd.f32 %v892, %v986
    %v989 = vld [vmem:[#allocation2 + $0x4] sm:$0xff]
    %v990 = vld [vmem:[#allocation2 + $0xc] sm:$0xff]
    %v991 = vld [vmem:[%s2 + $0x1c] sm:$0x1]
    %v992 = vlaneseq
    %v993 = vshrl.u32 %v992, 7
    %v994 = vsub.s32 0, %v993
    %v995 = vrot.slane %v991, %v994
    %v996 = vmul.f32 %v995, %v989
    %v997 = vmul.f32 %v995, %v990
    %v998 = vadd.f32 %v906, %v996
    %v999 = vadd.f32 %v907, %v997
    %v1000 = vld [vmem:[%s2 + $0x4d] sm:$0x1]
    %v1001 = vlaneseq
    %v1002 = vshrl.u32 %v1001, 7
    %v1003 = vsub.s32 0, %v1002
    %v1004 = vrot.slane %v1000, %v1003
    %v1005 = vmul.f32 %v1004, %v989
    %v1006 = vmul.f32 %v1004, %v990
    %v1007 = vadd.f32 %v915, %v1005
    %v1008 = vadd.f32 %v916, %v1006
    %v1009 = vld [vmem:[%s2 + $0x1d] sm:$0x1]
    %v1010 = vlaneseq
    %v1011 = vshrl.u32 %v1010, 7
    %v1012 = vsub.s32 0, %v1011
    %v1013 = vrot.slane %v1009, %v1012
    %1016 = vrot.lane.b32.xlu0 %v989, 127
    %v1017 = vpop.permute.xlu0 %1016
    %1018 = vrot.lane.b32.xlu0 %v990, 127
    %v1019 = vpop.permute.xlu0 %1018
    %v1022 = vmul.f32 %v1013, %v1017
    %v1023 = vmul.f32 %v1013, %v1019
    %v1024 = vadd.f32 %v930, %v1022
    %v1025 = vadd.f32 %v931, %v1023
    %v1026 = vld [vmem:[%s2 + $0x4e] sm:$0x1]
    %v1027 = vlaneseq
    %v1028 = vshrl.u32 %v1027, 7
    %v1029 = vsub.s32 0, %v1028
    %v1030 = vrot.slane %v1026, %v1029
    %v1031 = vmul.f32 %v1030, %v1017
    %v1032 = vmul.f32 %v1030, %v1019
    %v1033 = vadd.f32 %v939, %v1031
    %v1034 = vadd.f32 %v940, %v1032
    %v1035 = vld [vmem:[%s2 + $0x1e] sm:$0x1]
    %v1036 = vlaneseq
    %v1037 = vshrl.u32 %v1036, 7
    %v1038 = vsub.s32 0, %v1037
    %v1039 = vrot.slane %v1035, %v1038
    %1040 = vrot.lane.b32.xlu0 %v989, 126
    %v1041 = vpop.permute.xlu0 %1040
    %1042 = vrot.lane.b32.xlu0 %v990, 126
    %v1043 = vpop.permute.xlu0 %1042
    %v1046 = vmul.f32 %v1039, %v1041
    %v1047 = vmul.f32 %v1039, %v1043
    %v1048 = vadd.f32 %v954, %v1046
    %v1049 = vadd.f32 %v955, %v1047
    %v1050 = vld [vmem:[%s2 + $0x4f] sm:$0x1]
    %v1051 = vlaneseq
    %v1052 = vshrl.u32 %v1051, 7
    %v1053 = vsub.s32 0, %v1052
    %v1054 = vrot.slane %v1050, %v1053
    %v1055 = vmul.f32 %v1054, %v1041
    %v1056 = vmul.f32 %v1054, %v1043
    %v1057 = vadd.f32 %v963, %v1055
    %v1058 = vadd.f32 %v964, %v1056
    %v1059 = vld [vmem:[%s2 + $0x1f] sm:$0x1]
    %v1060 = vlaneseq
    %v1061 = vshrl.u32 %v1060, 7
    %v1062 = vsub.s32 0, %v1061
    %v1063 = vrot.slane %v1059, %v1062
    %1064 = vrot.lane.b32.xlu0 %v989, 125
    %v1065 = vpop.permute.xlu0 %1064
    %1066 = vrot.lane.b32.xlu0 %v990, 125
    %v1067 = vpop.permute.xlu0 %1066
    %v1070 = vmul.f32 %v1063, %v1065
    %v1071 = vmul.f32 %v1063, %v1067
    %v1072 = vadd.f32 %v978, %v1070
    %v1073 = vadd.f32 %v979, %v1071
    %v1074 = vld [vmem:[%s2 + $0x50] sm:$0x1]
    %v1075 = vlaneseq
    %v1076 = vshrl.u32 %v1075, 7
    %v1077 = vsub.s32 0, %v1076
    %v1078 = vrot.slane %v1074, %v1077
    %v1079 = vmul.f32 %v1078, %v1065
    %v1080 = vmul.f32 %v1078, %v1067
    %v1081 = vadd.f32 %v987, %v1079
    %v1082 = vadd.f32 %v988, %v1080
    %v1083 = vld [vmem:[%s2 + $0x20] sm:$0x1]
    %v1084 = vlaneseq
    %v1085 = vshrl.u32 %v1084, 7
    %v1086 = vsub.s32 0, %v1085
    %v1087 = vrot.slane %v1083, %v1086
    %1088 = vrot.lane.b32.xlu0 %v989, 124
    %v1089 = vpop.permute.xlu0 %1088
    %1090 = vrot.lane.b32.xlu0 %v990, 124
    %v1091 = vpop.permute.xlu0 %1090
    %v1094 = vmul.f32 %v1087, %v1089
    %v1095 = vmul.f32 %v1087, %v1091
    %v1096 = vadd.f32 %v998, %v1094
    %v1097 = vadd.f32 %v999, %v1095
    %v1098 = vld [vmem:[%s2 + $0x51] sm:$0x1]
    %v1099 = vlaneseq
    %v1100 = vshrl.u32 %v1099, 7
    %v1101 = vsub.s32 0, %v1100
    %v1102 = vrot.slane %v1098, %v1101
    %v1103 = vmul.f32 %v1102, %v1089
    %v1104 = vmul.f32 %v1102, %v1091
    %v1105 = vadd.f32 %v1007, %v1103
    %v1106 = vadd.f32 %v1008, %v1104
    %v1107 = vld [vmem:[%s2 + $0x21] sm:$0x1]
    %v1108 = vlaneseq
    %v1109 = vshrl.u32 %v1108, 7
    %v1110 = vsub.s32 0, %v1109
    %v1111 = vrot.slane %v1107, %v1110
    %1112 = vrot.lane.b32.xlu0 %v989, 123
    %v1113 = vpop.permute.xlu0 %1112
    %1114 = vrot.lane.b32.xlu0 %v990, 123
    %v1115 = vpop.permute.xlu0 %1114
    %v1118 = vmul.f32 %v1111, %v1113
    %v1119 = vmul.f32 %v1111, %v1115
    %v1120 = vadd.f32 %v1024, %v1118
    %v1121 = vadd.f32 %v1025, %v1119
    %v1122 = vld [vmem:[%s2 + $0x52] sm:$0x1]
    %v1123 = vlaneseq
    %v1124 = vshrl.u32 %v1123, 7
    %v1125 = vsub.s32 0, %v1124
    %v1126 = vrot.slane %v1122, %v1125
    %v1127 = vmul.f32 %v1126, %v1113
    %v1128 = vmul.f32 %v1126, %v1115
    %v1129 = vadd.f32 %v1033, %v1127
    %v1130 = vadd.f32 %v1034, %v1128
    %v1131 = vld [vmem:[%s2 + $0x22] sm:$0x1]
    %v1132 = vlaneseq
    %v1133 = vshrl.u32 %v1132, 7
    %v1134 = vsub.s32 0, %v1133
    %v1135 = vrot.slane %v1131, %v1134
    %1136 = vrot.lane.b32.xlu0 %v989, 122
    %v1137 = vpop.permute.xlu0 %1136
    %1138 = vrot.lane.b32.xlu0 %v990, 122
    %v1139 = vpop.permute.xlu0 %1138
    %v1142 = vmul.f32 %v1135, %v1137
    %v1143 = vmul.f32 %v1135, %v1139
    %v1144 = vadd.f32 %v1048, %v1142
    %v1145 = vadd.f32 %v1049, %v1143
    %v1146 = vld [vmem:[%s2 + $0x53] sm:$0x1]
    %v1147 = vlaneseq
    %v1148 = vshrl.u32 %v1147, 7
    %v1149 = vsub.s32 0, %v1148
    %v1150 = vrot.slane %v1146, %v1149
    %v1151 = vmul.f32 %v1150, %v1137
    %v1152 = vmul.f32 %v1150, %v1139
    %v1153 = vadd.f32 %v1057, %v1151
    %v1154 = vadd.f32 %v1058, %v1152
    %v1155 = vld [vmem:[#allocation2 + $0x5] sm:$0xff]
    %v1156 = vld [vmem:[#allocation2 + $0xd] sm:$0xff]
    %v1157 = vld [vmem:[%s2 + $0x23] sm:$0x1]
    %v1158 = vlaneseq
    %v1159 = vshrl.u32 %v1158, 7
    %v1160 = vsub.s32 0, %v1159
    %v1161 = vrot.slane %v1157, %v1160
    %v1162 = vmul.f32 %v1161, %v1155
    %v1163 = vmul.f32 %v1161, %v1156
    %v1164 = vadd.f32 %v1072, %v1162
    %v1165 = vadd.f32 %v1073, %v1163
    %v1166 = vld [vmem:[%s2 + $0x54] sm:$0x1]
    %v1167 = vlaneseq
    %v1168 = vshrl.u32 %v1167, 7
    %v1169 = vsub.s32 0, %v1168
    %v1170 = vrot.slane %v1166, %v1169
    %v1171 = vmul.f32 %v1170, %v1155
    %v1172 = vmul.f32 %v1170, %v1156
    %v1173 = vadd.f32 %v1081, %v1171
    %v1174 = vadd.f32 %v1082, %v1172
    %v1175 = vld [vmem:[%s2 + $0x24] sm:$0x1]
    %v1176 = vlaneseq
    %v1177 = vshrl.u32 %v1176, 7
    %v1178 = vsub.s32 0, %v1177
    %v1179 = vrot.slane %v1175, %v1178
    %1182 = vrot.lane.b32.xlu0 %v1155, 127
    %v1183 = vpop.permute.xlu0 %1182
    %1184 = vrot.lane.b32.xlu0 %v1156, 127
    %v1185 = vpop.permute.xlu0 %1184
    %v1188 = vmul.f32 %v1179, %v1183
    %v1189 = vmul.f32 %v1179, %v1185
    %v1190 = vadd.f32 %v1096, %v1188
    %v1191 = vadd.f32 %v1097, %v1189
    %v1192 = vld [vmem:[%s2 + $0x55] sm:$0x1]
    %v1193 = vlaneseq
    %v1194 = vshrl.u32 %v1193, 7
    %v1195 = vsub.s32 0, %v1194
    %v1196 = vrot.slane %v1192, %v1195
    %v1197 = vmul.f32 %v1196, %v1183
    %v1198 = vmul.f32 %v1196, %v1185
    %v1199 = vadd.f32 %v1105, %v1197
    %v1200 = vadd.f32 %v1106, %v1198
    %v1201 = vld [vmem:[%s2 + $0x25] sm:$0x1]
    %v1202 = vlaneseq
    %v1203 = vshrl.u32 %v1202, 7
    %v1204 = vsub.s32 0, %v1203
    %v1205 = vrot.slane %v1201, %v1204
    %1206 = vrot.lane.b32.xlu0 %v1155, 126
    %v1207 = vpop.permute.xlu0 %1206
    %1208 = vrot.lane.b32.xlu0 %v1156, 126
    %v1209 = vpop.permute.xlu0 %1208
    %v1212 = vmul.f32 %v1205, %v1207
    %v1213 = vmul.f32 %v1205, %v1209
    %v1214 = vadd.f32 %v1120, %v1212
    %v1215 = vadd.f32 %v1121, %v1213
    %v1216 = vld [vmem:[%s2 + $0x56] sm:$0x1]
    %v1217 = vlaneseq
    %v1218 = vshrl.u32 %v1217, 7
    %v1219 = vsub.s32 0, %v1218
    %v1220 = vrot.slane %v1216, %v1219
    %v1221 = vmul.f32 %v1220, %v1207
    %v1222 = vmul.f32 %v1220, %v1209
    %v1223 = vadd.f32 %v1129, %v1221
    %v1224 = vadd.f32 %v1130, %v1222
    %v1225 = vld [vmem:[%s2 + $0x26] sm:$0x1]
    %v1226 = vlaneseq
    %v1227 = vshrl.u32 %v1226, 7
    %v1228 = vsub.s32 0, %v1227
    %v1229 = vrot.slane %v1225, %v1228
    %1230 = vrot.lane.b32.xlu0 %v1155, 125
    %v1231 = vpop.permute.xlu0 %1230
    %1232 = vrot.lane.b32.xlu0 %v1156, 125
    %v1233 = vpop.permute.xlu0 %1232
    %v1236 = vmul.f32 %v1229, %v1231
    %v1237 = vmul.f32 %v1229, %v1233
    %v1238 = vadd.f32 %v1144, %v1236
    %v1239 = vadd.f32 %v1145, %v1237
    %v1240 = vld [vmem:[%s2 + $0x57] sm:$0x1]
    %v1241 = vlaneseq
    %v1242 = vshrl.u32 %v1241, 7
    %v1243 = vsub.s32 0, %v1242
    %v1244 = vrot.slane %v1240, %v1243
    %v1245 = vmul.f32 %v1244, %v1231
    %v1246 = vmul.f32 %v1244, %v1233
    %v1247 = vadd.f32 %v1153, %v1245
    %v1248 = vadd.f32 %v1154, %v1246
    %v1249 = vld [vmem:[%s2 + $0x27] sm:$0x1]
    %v1250 = vlaneseq
    %v1251 = vshrl.u32 %v1250, 7
    %v1252 = vsub.s32 0, %v1251
    %v1253 = vrot.slane %v1249, %v1252
    %1254 = vrot.lane.b32.xlu0 %v1155, 124
    %v1255 = vpop.permute.xlu0 %1254
    %1256 = vrot.lane.b32.xlu0 %v1156, 124
    %v1257 = vpop.permute.xlu0 %1256
    %v1260 = vmul.f32 %v1253, %v1255
    %v1261 = vmul.f32 %v1253, %v1257
    %v1262 = vadd.f32 %v1164, %v1260
    %v1263 = vadd.f32 %v1165, %v1261
    %v1264 = vld [vmem:[%s2 + $0x58] sm:$0x1]
    %v1265 = vlaneseq
    %v1266 = vshrl.u32 %v1265, 7
    %v1267 = vsub.s32 0, %v1266
    %v1268 = vrot.slane %v1264, %v1267
    %v1269 = vmul.f32 %v1268, %v1255
    %v1270 = vmul.f32 %v1268, %v1257
    %v1271 = vadd.f32 %v1173, %v1269
    %v1272 = vadd.f32 %v1174, %v1270
    %v1273 = vld [vmem:[%s2 + $0x28] sm:$0x1]
    %v1274 = vlaneseq
    %v1275 = vshrl.u32 %v1274, 7
    %v1276 = vsub.s32 0, %v1275
    %v1277 = vrot.slane %v1273, %v1276
    %1278 = vrot.lane.b32.xlu0 %v1155, 123
    %v1279 = vpop.permute.xlu0 %1278
    %1280 = vrot.lane.b32.xlu0 %v1156, 123
    %v1281 = vpop.permute.xlu0 %1280
    %v1284 = vmul.f32 %v1277, %v1279
    %v1285 = vmul.f32 %v1277, %v1281
    %v1286 = vadd.f32 %v1190, %v1284
    %v1287 = vadd.f32 %v1191, %v1285
    %v1288 = vld [vmem:[%s2 + $0x59] sm:$0x1]
    %v1289 = vlaneseq
    %v1290 = vshrl.u32 %v1289, 7
    %v1291 = vsub.s32 0, %v1290
    %v1292 = vrot.slane %v1288, %v1291
    %v1293 = vmul.f32 %v1292, %v1279
    %v1294 = vmul.f32 %v1292, %v1281
    %v1295 = vadd.f32 %v1199, %v1293
    %v1296 = vadd.f32 %v1200, %v1294
    %v1297 = vld [vmem:[%s2 + $0x29] sm:$0x1]
    %v1298 = vlaneseq
    %v1299 = vshrl.u32 %v1298, 7
    %v1300 = vsub.s32 0, %v1299
    %v1301 = vrot.slane %v1297, %v1300
    %1302 = vrot.lane.b32.xlu0 %v1155, 122
    %v1303 = vpop.permute.xlu0 %1302
    %1304 = vrot.lane.b32.xlu0 %v1156, 122
    %v1305 = vpop.permute.xlu0 %1304
    %v1308 = vmul.f32 %v1301, %v1303
    %v1309 = vmul.f32 %v1301, %v1305
    %v1310 = vadd.f32 %v1214, %v1308
    %v1311 = vadd.f32 %v1215, %v1309
    %v1312 = vld [vmem:[%s2 + $0x5a] sm:$0x1]
    %v1313 = vlaneseq
    %v1314 = vshrl.u32 %v1313, 7
    %v1315 = vsub.s32 0, %v1314
    %v1316 = vrot.slane %v1312, %v1315
    %v1317 = vmul.f32 %v1316, %v1303
    %v1318 = vmul.f32 %v1316, %v1305
    %v1319 = vadd.f32 %v1223, %v1317
    %v1320 = vadd.f32 %v1224, %v1318
    %v1321 = vld [vmem:[#allocation2 + $0x6] sm:$0xff]
    %v1322 = vld [vmem:[#allocation2 + $0xe] sm:$0xff]
    %v1323 = vld [vmem:[%s2 + $0x2a] sm:$0x1]
    %v1324 = vlaneseq
    %v1325 = vshrl.u32 %v1324, 7
    %v1326 = vsub.s32 0, %v1325
    %v1327 = vrot.slane %v1323, %v1326
    %v1328 = vmul.f32 %v1327, %v1321
    %v1329 = vmul.f32 %v1327, %v1322
    %v1330 = vadd.f32 %v1238, %v1328
    %v1331 = vadd.f32 %v1239, %v1329
    %v1332 = vld [vmem:[%s2 + $0x5b] sm:$0x1]
    %v1333 = vlaneseq
    %v1334 = vshrl.u32 %v1333, 7
    %v1335 = vsub.s32 0, %v1334
    %v1336 = vrot.slane %v1332, %v1335
    %v1337 = vmul.f32 %v1336, %v1321
    %v1338 = vmul.f32 %v1336, %v1322
    %v1339 = vadd.f32 %v1247, %v1337
    %v1340 = vadd.f32 %v1248, %v1338
    %v1341 = vld [vmem:[%s2 + $0x2b] sm:$0x1]
    %v1342 = vlaneseq
    %v1343 = vshrl.u32 %v1342, 7
    %v1344 = vsub.s32 0, %v1343
    %v1345 = vrot.slane %v1341, %v1344
    %1348 = vrot.lane.b32.xlu0 %v1321, 127
    %v1349 = vpop.permute.xlu0 %1348
    %1350 = vrot.lane.b32.xlu0 %v1322, 127
    %v1351 = vpop.permute.xlu0 %1350
    %v1354 = vmul.f32 %v1345, %v1349
    %v1355 = vmul.f32 %v1345, %v1351
    %v1356 = vadd.f32 %v1262, %v1354
    %v1357 = vadd.f32 %v1263, %v1355
    %v1358 = vld [vmem:[%s2 + $0x5c] sm:$0x1]
    %v1359 = vlaneseq
    %v1360 = vshrl.u32 %v1359, 7
    %v1361 = vsub.s32 0, %v1360
    %v1362 = vrot.slane %v1358, %v1361
    %v1363 = vmul.f32 %v1362, %v1349
    %v1364 = vmul.f32 %v1362, %v1351
    %v1365 = vadd.f32 %v1271, %v1363
    %v1366 = vadd.f32 %v1272, %v1364
    %v1367 = vld [vmem:[%s2 + $0x2c] sm:$0x1]
    %v1368 = vlaneseq
    %v1369 = vshrl.u32 %v1368, 7
    %v1370 = vsub.s32 0, %v1369
    %v1371 = vrot.slane %v1367, %v1370
    %1372 = vrot.lane.b32.xlu0 %v1321, 126
    %v1373 = vpop.permute.xlu0 %1372
    %1374 = vrot.lane.b32.xlu0 %v1322, 126
    %v1375 = vpop.permute.xlu0 %1374
    %v1378 = vmul.f32 %v1371, %v1373
    %v1379 = vmul.f32 %v1371, %v1375
    %v1380 = vadd.f32 %v1286, %v1378
    %v1381 = vadd.f32 %v1287, %v1379
    %v1382 = vld [vmem:[%s2 + $0x5d] sm:$0x1]
    %v1383 = vlaneseq
    %v1384 = vshrl.u32 %v1383, 7
    %v1385 = vsub.s32 0, %v1384
    %v1386 = vrot.slane %v1382, %v1385
    %v1387 = vmul.f32 %v1386, %v1373
    %v1388 = vmul.f32 %v1386, %v1375
    %v1389 = vadd.f32 %v1295, %v1387
    %v1390 = vadd.f32 %v1296, %v1388
    %v1391 = vld [vmem:[%s2 + $0x2d] sm:$0x1]
    %v1392 = vlaneseq
    %v1393 = vshrl.u32 %v1392, 7
    %v1394 = vsub.s32 0, %v1393
    %v1395 = vrot.slane %v1391, %v1394
    %1396 = vrot.lane.b32.xlu0 %v1321, 125
    %v1397 = vpop.permute.xlu0 %1396
    %1398 = vrot.lane.b32.xlu0 %v1322, 125
    %v1399 = vpop.permute.xlu0 %1398
    %v1402 = vmul.f32 %v1395, %v1397
    %v1403 = vmul.f32 %v1395, %v1399
    %v1404 = vadd.f32 %v1310, %v1402
    %v1405 = vadd.f32 %v1311, %v1403
    %v1406 = vld [vmem:[%s2 + $0x5e] sm:$0x1]
    %v1407 = vlaneseq
    %v1408 = vshrl.u32 %v1407, 7
    %v1409 = vsub.s32 0, %v1408
    %v1410 = vrot.slane %v1406, %v1409
    %v1411 = vmul.f32 %v1410, %v1397
    %v1412 = vmul.f32 %v1410, %v1399
    %v1413 = vadd.f32 %v1319, %v1411
    %v1414 = vadd.f32 %v1320, %v1412
    %v1415 = vld [vmem:[%s2 + $0x2e] sm:$0x1]
    %v1416 = vlaneseq
    %v1417 = vshrl.u32 %v1416, 7
    %v1418 = vsub.s32 0, %v1417
    %v1419 = vrot.slane %v1415, %v1418
    %1420 = vrot.lane.b32.xlu0 %v1321, 124
    %v1421 = vpop.permute.xlu0 %1420
    %1422 = vrot.lane.b32.xlu0 %v1322, 124
    %v1423 = vpop.permute.xlu0 %1422
    %v1426 = vmul.f32 %v1419, %v1421
    %v1427 = vmul.f32 %v1419, %v1423
    %v1428 = vadd.f32 %v1330, %v1426
    %v1429 = vadd.f32 %v1331, %v1427
    %v1430 = vld [vmem:[%s2 + $0x5f] sm:$0x1]
    %v1431 = vlaneseq
    %v1432 = vshrl.u32 %v1431, 7
    %v1433 = vsub.s32 0, %v1432
    %v1434 = vrot.slane %v1430, %v1433
    %v1435 = vmul.f32 %v1434, %v1421
    %v1436 = vmul.f32 %v1434, %v1423
    %v1437 = vadd.f32 %v1339, %v1435
    %v1438 = vadd.f32 %v1340, %v1436
    %v1439 = vld [vmem:[%s2 + $0x2f] sm:$0x1]
    %v1440 = vlaneseq
    %v1441 = vshrl.u32 %v1440, 7
    %v1442 = vsub.s32 0, %v1441
    %v1443 = vrot.slane %v1439, %v1442
    %1444 = vrot.lane.b32.xlu0 %v1321, 123
    %v1445 = vpop.permute.xlu0 %1444
    %1446 = vrot.lane.b32.xlu0 %v1322, 123
    %v1447 = vpop.permute.xlu0 %1446
    %v1450 = vmul.f32 %v1443, %v1445
    %v1451 = vmul.f32 %v1443, %v1447
    %v1452 = vadd.f32 %v1356, %v1450
    %v1453 = vadd.f32 %v1357, %v1451
    %v1454 = vld [vmem:[%s2 + $0x60] sm:$0x1]
    %v1455 = vlaneseq
    %v1456 = vshrl.u32 %v1455, 7
    %v1457 = vsub.s32 0, %v1456
    %v1458 = vrot.slane %v1454, %v1457
    %v1459 = vmul.f32 %v1458, %v1445
    %v1460 = vmul.f32 %v1458, %v1447
    %v1461 = vadd.f32 %v1365, %v1459
    %v1462 = vadd.f32 %v1366, %v1460
    %v1463 = vld [vmem:[%s2 + $0x30] sm:$0x1]
    %v1464 = vlaneseq
    %v1465 = vshrl.u32 %v1464, 7
    %v1466 = vsub.s32 0, %v1465
    %v1467 = vrot.slane %v1463, %v1466
    %1468 = vrot.lane.b32.xlu0 %v1321, 122
    %v1469 = vpop.permute.xlu0 %1468
    %1470 = vrot.lane.b32.xlu0 %v1322, 122
    %v1471 = vpop.permute.xlu0 %1470
    %v1474 = vmul.f32 %v1467, %v1469
    %v1475 = vmul.f32 %v1467, %v1471
    %v1476 = vadd.f32 %v1380, %v1474
    %v1477 = vadd.f32 %v1381, %v1475
    %v1478 = vld [vmem:[%s2 + $0x61] sm:$0x1]
    %v1479 = vlaneseq
    %v1480 = vshrl.u32 %v1479, 7
    %v1481 = vsub.s32 0, %v1480
    %v1482 = vrot.slane %v1478, %v1481
    %v1483 = vmul.f32 %v1482, %v1469
    %v1484 = vmul.f32 %v1482, %v1471
    %v1485 = vadd.f32 %v1389, %v1483
    %v1486 = vadd.f32 %v1390, %v1484
    %v1487 = vadd.f32 %v1476, %v1404
    %v1488 = vadd.f32 %v1477, %v1405
    %v1489 = vadd.f32 %v1428, %v1452
    %v1490 = vadd.f32 %v1429, %v1453
    %v1491 = vadd.f32 %v1487, %v1489
    %v1492 = vadd.f32 %v1488, %v1490
    %1495 = vrot.lane.b32.xlu0 %v1491, 78
    %v1496 = vpop.permute.xlu0 %1495
    %1497 = vrot.lane.b32.xlu0 %v1492, 78
    %v1498 = vpop.permute.xlu0 %1497
    %v1501 = vadd.f32 %v1491, %v1496
    %v1502 = vadd.f32 %v1492, %v1498
    %s1503 = sld [smem:[#allocation6]]
    %v1504 = vstv %s1503
    %v1505 = vmul.f32 %v1501, %v1504
    %v1506 = vmul.f32 %v1502, %v1504
    %s1507 = sld [smem:[#allocation9]]
    %v1508 = vstv %s1507
    %v1509 = vadd.f32 %v1505, %v1508
    %v1510 = vadd.f32 %v1506, %v1508
    %vm1511 = vcmp.ge.f32.partialorder %v1509, 0.0
    %vm1512 = vcmp.ge.f32.partialorder %v1510, 0.0
    %v1513 = vmul.f32 %v1509, 0.3
    %v1514 = vmul.f32 %v1510, 0.3
    %v1515 = vsel %vm1511, %v1509, %v1513
    %v1516 = vsel %vm1512, %v1510, %v1514
    %v1517 = vadd.f32 %v1485, %v1413
    %v1518 = vadd.f32 %v1486, %v1414
    %v1519 = vadd.f32 %v1437, %v1461
    %v1520 = vadd.f32 %v1438, %v1462
    %v1521 = vadd.f32 %v1517, %v1519
    %v1522 = vadd.f32 %v1518, %v1520
    %1525 = vrot.lane.b32.xlu0 %v1521, 78
    %v1526 = vpop.permute.xlu0 %1525
    %1527 = vrot.lane.b32.xlu0 %v1522, 78
    %v1528 = vpop.permute.xlu0 %1527
    %v1531 = vadd.f32 %v1521, %v1526
    %v1532 = vadd.f32 %v1522, %v1528
    %s1533 = sld [smem:[#allocation6 + $0x1]]
    %v1534 = vstv %s1533
    %v1535 = vmul.f32 %v1531, %v1534
    %v1536 = vmul.f32 %v1532, %v1534
    %s1537 = sld [smem:[#allocation9 + $0x1]]
    %v1538 = vstv %s1537
    %v1539 = vadd.f32 %v1535, %v1538
    %v1540 = vadd.f32 %v1536, %v1538
    %vm1541 = vcmp.ge.f32.partialorder %v1539, 0.0
    %vm1542 = vcmp.ge.f32.partialorder %v1540, 0.0
    %v1543 = vmul.f32 %v1539, 0.3
    %v1544 = vmul.f32 %v1540, 0.3
    %v1545 = vsel %vm1541, %v1539, %v1543
    %v1546 = vsel %vm1542, %v1540, %v1544
    %1549 = vrot.lane.b32.xlu0 %v1515, 3
    %v1550 = vpop.permute.xlu0 %1549
    %1551 = vrot.lane.b32.xlu0 %v1516, 3
    %v1552 = vpop.permute.xlu0 %1551
    %1555 = vst.msk [vmem:[#allocation2 + $0x3] sm:$0xff] %vm269, %v1550
    %1556 = vst.msk [vmem:[#allocation2 + $0xb] sm:$0xff] %vm269, %v1552
    %1557 = vst.msk [vmem:[#allocation2 + $0x3] sm:$0xff] %vm304, %v1550
    %1558 = vst.msk [vmem:[#allocation2 + $0xb] sm:$0xff] %vm304, %v1552
    %1561 = vrot.lane.b32.xlu0 %v1545, 53
    %v1562 = vpop.permute.xlu0 %1561
    %1563 = vrot.lane.b32.xlu0 %v1546, 53
    %v1564 = vpop.permute.xlu0 %1563
    %1567 = vst.msk [vmem:[#allocation2 + $0x3] sm:$0xff] %vm286, %v1562
    %1568 = vst.msk [vmem:[#allocation2 + $0xb] sm:$0xff] %vm286, %v1564
    %1569 = vst.msk [vmem:[#allocation2 + $0x3] sm:$0xff] %vm322, %v1562
    %1570 = vst.msk [vmem:[#allocation2 + $0xb] sm:$0xff] %vm322, %v1564
    %v1571 = vld [vmem:[#allocation2] sm:$0xff]
    %v1572 = vld [vmem:[#allocation2 + $0x8] sm:$0xff]
    %v1573 = vld [vmem:[%s3] sm:$0x1]
    %v1574 = vlaneseq
    %v1575 = vshrl.u32 %v1574, 7
    %v1576 = vsub.s32 0, %v1575
    %v1577 = vrot.slane %v1573, %v1576
    %v1578 = vmul.f32 %v1577, %v1571
    %v1579 = vmul.f32 %v1577, %v1572
    %v1580 = vadd.f32 %v1578, 0.0
    %v1581 = vadd.f32 %v1579, 0.0
    %v1582 = vld [vmem:[%s3 + $0x31] sm:$0x1]
    %v1583 = vlaneseq
    %v1584 = vshrl.u32 %v1583, 7
    %v1585 = vsub.s32 0, %v1584
    %v1586 = vrot.slane %v1582, %v1585
    %v1587 = vmul.f32 %v1586, %v1571
    %v1588 = vmul.f32 %v1586, %v1572
    %v1589 = vadd.f32 %v1587, 0.0
    %v1590 = vadd.f32 %v1588, 0.0
    %v1591 = vld [vmem:[%s3 + $0x1] sm:$0x1]
    %v1592 = vlaneseq
    %v1593 = vshrl.u32 %v1592, 7
    %v1594 = vsub.s32 0, %v1593
    %v1595 = vrot.slane %v1591, %v1594
    %1598 = vrot.lane.b32.xlu0 %v1571, 127
    %v1599 = vpop.permute.xlu0 %1598
    %1600 = vrot.lane.b32.xlu0 %v1572, 127
    %v1601 = vpop.permute.xlu0 %1600
    %v1604 = vmul.f32 %v1595, %v1599
    %v1605 = vmul.f32 %v1595, %v1601
    %v1606 = vadd.f32 %v1604, 0.0
    %v1607 = vadd.f32 %v1605, 0.0
    %v1608 = vld [vmem:[%s3 + $0x32] sm:$0x1]
    %v1609 = vlaneseq
    %v1610 = vshrl.u32 %v1609, 7
    %v1611 = vsub.s32 0, %v1610
    %v1612 = vrot.slane %v1608, %v1611
    %v1613 = vmul.f32 %v1612, %v1599
    %v1614 = vmul.f32 %v1612, %v1601
    %v1615 = vadd.f32 %v1613, 0.0
    %v1616 = vadd.f32 %v1614, 0.0
    %v1617 = vld [vmem:[%s3 + $0x2] sm:$0x1]
    %v1618 = vlaneseq
    %v1619 = vshrl.u32 %v1618, 7
    %v1620 = vsub.s32 0, %v1619
    %v1621 = vrot.slane %v1617, %v1620
    %1622 = vrot.lane.b32.xlu0 %v1571, 126
    %v1623 = vpop.permute.xlu0 %1622
    %1624 = vrot.lane.b32.xlu0 %v1572, 126
    %v1625 = vpop.permute.xlu0 %1624
    %v1628 = vmul.f32 %v1621, %v1623
    %v1629 = vmul.f32 %v1621, %v1625
    %v1630 = vadd.f32 %v1628, 0.0
    %v1631 = vadd.f32 %v1629, 0.0
    %v1632 = vld [vmem:[%s3 + $0x33] sm:$0x1]
    %v1633 = vlaneseq
    %v1634 = vshrl.u32 %v1633, 7
    %v1635 = vsub.s32 0, %v1634
    %v1636 = vrot.slane %v1632, %v1635
    %v1637 = vmul.f32 %v1636, %v1623
    %v1638 = vmul.f32 %v1636, %v1625
    %v1639 = vadd.f32 %v1637, 0.0
    %v1640 = vadd.f32 %v1638, 0.0
    %v1641 = vld [vmem:[%s3 + $0x3] sm:$0x1]
    %v1642 = vlaneseq
    %v1643 = vshrl.u32 %v1642, 7
    %v1644 = vsub.s32 0, %v1643
    %v1645 = vrot.slane %v1641, %v1644
    %1646 = vrot.lane.b32.xlu0 %v1571, 125
    %v1647 = vpop.permute.xlu0 %1646
    %1648 = vrot.lane.b32.xlu0 %v1572, 125
    %v1649 = vpop.permute.xlu0 %1648
    %v1652 = vmul.f32 %v1645, %v1647
    %v1653 = vmul.f32 %v1645, %v1649
    %v1654 = vadd.f32 %v1652, 0.0
    %v1655 = vadd.f32 %v1653, 0.0
    %v1656 = vld [vmem:[%s3 + $0x34] sm:$0x1]
    %v1657 = vlaneseq
    %v1658 = vshrl.u32 %v1657, 7
    %v1659 = vsub.s32 0, %v1658
    %v1660 = vrot.slane %v1656, %v1659
    %v1661 = vmul.f32 %v1660, %v1647
    %v1662 = vmul.f32 %v1660, %v1649
    %v1663 = vadd.f32 %v1661, 0.0
    %v1664 = vadd.f32 %v1662, 0.0
    %v1665 = vld [vmem:[%s3 + $0x4] sm:$0x1]
    %v1666 = vlaneseq
    %v1667 = vshrl.u32 %v1666, 7
    %v1668 = vsub.s32 0, %v1667
    %v1669 = vrot.slane %v1665, %v1668
    %1670 = vrot.lane.b32.xlu0 %v1571, 124
    %v1671 = vpop.permute.xlu0 %1670
    %1672 = vrot.lane.b32.xlu0 %v1572, 124
    %v1673 = vpop.permute.xlu0 %1672
    %v1676 = vmul.f32 %v1669, %v1671
    %v1677 = vmul.f32 %v1669, %v1673
    %v1678 = vadd.f32 %v1580, %v1676
    %v1679 = vadd.f32 %v1581, %v1677
    %v1680 = vld [vmem:[%s3 + $0x35] sm:$0x1]
    %v1681 = vlaneseq
    %v1682 = vshrl.u32 %v1681, 7
    %v1683 = vsub.s32 0, %v1682
    %v1684 = vrot.slane %v1680, %v1683
    %v1685 = vmul.f32 %v1684, %v1671
    %v1686 = vmul.f32 %v1684, %v1673
    %v1687 = vadd.f32 %v1589, %v1685
    %v1688 = vadd.f32 %v1590, %v1686
    %v1689 = vld [vmem:[%s3 + $0x5] sm:$0x1]
    %v1690 = vlaneseq
    %v1691 = vshrl.u32 %v1690, 7
    %v1692 = vsub.s32 0, %v1691
    %v1693 = vrot.slane %v1689, %v1692
    %1694 = vrot.lane.b32.xlu0 %v1571, 123
    %v1695 = vpop.permute.xlu0 %1694
    %1696 = vrot.lane.b32.xlu0 %v1572, 123
    %v1697 = vpop.permute.xlu0 %1696
    %v1700 = vmul.f32 %v1693, %v1695
    %v1701 = vmul.f32 %v1693, %v1697
    %v1702 = vadd.f32 %v1606, %v1700
    %v1703 = vadd.f32 %v1607, %v1701
    %v1704 = vld [vmem:[%s3 + $0x36] sm:$0x1]
    %v1705 = vlaneseq
    %v1706 = vshrl.u32 %v1705, 7
    %v1707 = vsub.s32 0, %v1706
    %v1708 = vrot.slane %v1704, %v1707
    %v1709 = vmul.f32 %v1708, %v1695
    %v1710 = vmul.f32 %v1708, %v1697
    %v1711 = vadd.f32 %v1615, %v1709
    %v1712 = vadd.f32 %v1616, %v1710
    %v1713 = vld [vmem:[%s3 + $0x6] sm:$0x1]
    %v1714 = vlaneseq
    %v1715 = vshrl.u32 %v1714, 7
    %v1716 = vsub.s32 0, %v1715
    %v1717 = vrot.slane %v1713, %v1716
    %1718 = vrot.lane.b32.xlu0 %v1571, 122
    %v1719 = vpop.permute.xlu0 %1718
    %1720 = vrot.lane.b32.xlu0 %v1572, 122
    %v1721 = vpop.permute.xlu0 %1720
    %v1724 = vmul.f32 %v1717, %v1719
    %v1725 = vmul.f32 %v1717, %v1721
    %v1726 = vadd.f32 %v1630, %v1724
    %v1727 = vadd.f32 %v1631, %v1725
    %v1728 = vld [vmem:[%s3 + $0x37] sm:$0x1]
    %v1729 = vlaneseq
    %v1730 = vshrl.u32 %v1729, 7
    %v1731 = vsub.s32 0, %v1730
    %v1732 = vrot.slane %v1728, %v1731
    %v1733 = vmul.f32 %v1732, %v1719
    %v1734 = vmul.f32 %v1732, %v1721
    %v1735 = vadd.f32 %v1639, %v1733
    %v1736 = vadd.f32 %v1640, %v1734
    %v1737 = vld [vmem:[#allocation2 + $0x1] sm:$0xff]
    %v1738 = vld [vmem:[#allocation2 + $0x9] sm:$0xff]
    %v1739 = vld [vmem:[%s3 + $0x7] sm:$0x1]
    %v1740 = vlaneseq
    %v1741 = vshrl.u32 %v1740, 7
    %v1742 = vsub.s32 0, %v1741
    %v1743 = vrot.slane %v1739, %v1742
    %v1744 = vmul.f32 %v1743, %v1737
    %v1745 = vmul.f32 %v1743, %v1738
    %v1746 = vadd.f32 %v1654, %v1744
    %v1747 = vadd.f32 %v1655, %v1745
    %v1748 = vld [vmem:[%s3 + $0x38] sm:$0x1]
    %v1749 = vlaneseq
    %v1750 = vshrl.u32 %v1749, 7
    %v1751 = vsub.s32 0, %v1750
    %v1752 = vrot.slane %v1748, %v1751
    %v1753 = vmul.f32 %v1752, %v1737
    %v1754 = vmul.f32 %v1752, %v1738
    %v1755 = vadd.f32 %v1663, %v1753
    %v1756 = vadd.f32 %v1664, %v1754
    %v1757 = vld [vmem:[%s3 + $0x8] sm:$0x1]
    %v1758 = vlaneseq
    %v1759 = vshrl.u32 %v1758, 7
    %v1760 = vsub.s32 0, %v1759
    %v1761 = vrot.slane %v1757, %v1760
    %1764 = vrot.lane.b32.xlu0 %v1737, 127
    %v1765 = vpop.permute.xlu0 %1764
    %1766 = vrot.lane.b32.xlu0 %v1738, 127
    %v1767 = vpop.permute.xlu0 %1766
    %v1770 = vmul.f32 %v1761, %v1765
    %v1771 = vmul.f32 %v1761, %v1767
    %v1772 = vadd.f32 %v1678, %v1770
    %v1773 = vadd.f32 %v1679, %v1771
    %v1774 = vld [vmem:[%s3 + $0x39] sm:$0x1]
    %v1775 = vlaneseq
    %v1776 = vshrl.u32 %v1775, 7
    %v1777 = vsub.s32 0, %v1776
    %v1778 = vrot.slane %v1774, %v1777
    %v1779 = vmul.f32 %v1778, %v1765
    %v1780 = vmul.f32 %v1778, %v1767
    %v1781 = vadd.f32 %v1687, %v1779
    %v1782 = vadd.f32 %v1688, %v1780
    %v1783 = vld [vmem:[%s3 + $0x9] sm:$0x1]
    %v1784 = vlaneseq
    %v1785 = vshrl.u32 %v1784, 7
    %v1786 = vsub.s32 0, %v1785
    %v1787 = vrot.slane %v1783, %v1786
    %1788 = vrot.lane.b32.xlu0 %v1737, 126
    %v1789 = vpop.permute.xlu0 %1788
    %1790 = vrot.lane.b32.xlu0 %v1738, 126
    %v1791 = vpop.permute.xlu0 %1790
    %v1794 = vmul.f32 %v1787, %v1789
    %v1795 = vmul.f32 %v1787, %v1791
    %v1796 = vadd.f32 %v1702, %v1794
    %v1797 = vadd.f32 %v1703, %v1795
    %v1798 = vld [vmem:[%s3 + $0x3a] sm:$0x1]
    %v1799 = vlaneseq
    %v1800 = vshrl.u32 %v1799, 7
    %v1801 = vsub.s32 0, %v1800
    %v1802 = vrot.slane %v1798, %v1801
    %v1803 = vmul.f32 %v1802, %v1789
    %v1804 = vmul.f32 %v1802, %v1791
    %v1805 = vadd.f32 %v1711, %v1803
    %v1806 = vadd.f32 %v1712, %v1804
    %v1807 = vld [vmem:[%s3 + $0xa] sm:$0x1]
    %v1808 = vlaneseq
    %v1809 = vshrl.u32 %v1808, 7
    %v1810 = vsub.s32 0, %v1809
    %v1811 = vrot.slane %v1807, %v1810
    %1812 = vrot.lane.b32.xlu0 %v1737, 125
    %v1813 = vpop.permute.xlu0 %1812
    %1814 = vrot.lane.b32.xlu0 %v1738, 125
    %v1815 = vpop.permute.xlu0 %1814
    %v1818 = vmul.f32 %v1811, %v1813
    %v1819 = vmul.f32 %v1811, %v1815
    %v1820 = vadd.f32 %v1726, %v1818
    %v1821 = vadd.f32 %v1727, %v1819
    %v1822 = vld [vmem:[%s3 + $0x3b] sm:$0x1]
    %v1823 = vlaneseq
    %v1824 = vshrl.u32 %v1823, 7
    %v1825 = vsub.s32 0, %v1824
    %v1826 = vrot.slane %v1822, %v1825
    %v1827 = vmul.f32 %v1826, %v1813
    %v1828 = vmul.f32 %v1826, %v1815
    %v1829 = vadd.f32 %v1735, %v1827
    %v1830 = vadd.f32 %v1736, %v1828
    %v1831 = vld [vmem:[%s3 + $0xb] sm:$0x1]
    %v1832 = vlaneseq
    %v1833 = vshrl.u32 %v1832, 7
    %v1834 = vsub.s32 0, %v1833
    %v1835 = vrot.slane %v1831, %v1834
    %1836 = vrot.lane.b32.xlu0 %v1737, 124
    %v1837 = vpop.permute.xlu0 %1836
    %1838 = vrot.lane.b32.xlu0 %v1738, 124
    %v1839 = vpop.permute.xlu0 %1838
    %v1842 = vmul.f32 %v1835, %v1837
    %v1843 = vmul.f32 %v1835, %v1839
    %v1844 = vadd.f32 %v1746, %v1842
    %v1845 = vadd.f32 %v1747, %v1843
    %v1846 = vld [vmem:[%s3 + $0x3c] sm:$0x1]
    %v1847 = vlaneseq
    %v1848 = vshrl.u32 %v1847, 7
    %v1849 = vsub.s32 0, %v1848
    %v1850 = vrot.slane %v1846, %v1849
    %v1851 = vmul.f32 %v1850, %v1837
    %v1852 = vmul.f32 %v1850, %v1839
    %v1853 = vadd.f32 %v1755, %v1851
    %v1854 = vadd.f32 %v1756, %v1852
    %v1855 = vld [vmem:[%s3 + $0xc] sm:$0x1]
    %v1856 = vlaneseq
    %v1857 = vshrl.u32 %v1856, 7
    %v1858 = vsub.s32 0, %v1857
    %v1859 = vrot.slane %v1855, %v1858
    %1860 = vrot.lane.b32.xlu0 %v1737, 123
    %v1861 = vpop.permute.xlu0 %1860
    %1862 = vrot.lane.b32.xlu0 %v1738, 123
    %v1863 = vpop.permute.xlu0 %1862
    %v1866 = vmul.f32 %v1859, %v1861
    %v1867 = vmul.f32 %v1859, %v1863
    %v1868 = vadd.f32 %v1772, %v1866
    %v1869 = vadd.f32 %v1773, %v1867
    %v1870 = vld [vmem:[%s3 + $0x3d] sm:$0x1]
    %v1871 = vlaneseq
    %v1872 = vshrl.u32 %v1871, 7
    %v1873 = vsub.s32 0, %v1872
    %v1874 = vrot.slane %v1870, %v1873
    %v1875 = vmul.f32 %v1874, %v1861
    %v1876 = vmul.f32 %v1874, %v1863
    %v1877 = vadd.f32 %v1781, %v1875
    %v1878 = vadd.f32 %v1782, %v1876
    %v1879 = vld [vmem:[%s3 + $0xd] sm:$0x1]
    %v1880 = vlaneseq
    %v1881 = vshrl.u32 %v1880, 7
    %v1882 = vsub.s32 0, %v1881
    %v1883 = vrot.slane %v1879, %v1882
    %1884 = vrot.lane.b32.xlu0 %v1737, 122
    %v1885 = vpop.permute.xlu0 %1884
    %1886 = vrot.lane.b32.xlu0 %v1738, 122
    %v1887 = vpop.permute.xlu0 %1886
    %v1890 = vmul.f32 %v1883, %v1885
    %v1891 = vmul.f32 %v1883, %v1887
    %v1892 = vadd.f32 %v1796, %v1890
    %v1893 = vadd.f32 %v1797, %v1891
    %v1894 = vld [vmem:[%s3 + $0x3e] sm:$0x1]
    %v1895 = vlaneseq
    %v1896 = vshrl.u32 %v1895, 7
    %v1897 = vsub.s32 0, %v1896
    %v1898 = vrot.slane %v1894, %v1897
    %v1899 = vmul.f32 %v1898, %v1885
    %v1900 = vmul.f32 %v1898, %v1887
    %v1901 = vadd.f32 %v1805, %v1899
    %v1902 = vadd.f32 %v1806, %v1900
    %v1903 = vld [vmem:[#allocation2 + $0x2] sm:$0xff]
    %v1904 = vld [vmem:[#allocation2 + $0xa] sm:$0xff]
    %v1905 = vld [vmem:[%s3 + $0xe] sm:$0x1]
    %v1906 = vlaneseq
    %v1907 = vshrl.u32 %v1906, 7
    %v1908 = vsub.s32 0, %v1907
    %v1909 = vrot.slane %v1905, %v1908
    %v1910 = vmul.f32 %v1909, %v1903
    %v1911 = vmul.f32 %v1909, %v1904
    %v1912 = vadd.f32 %v1820, %v1910
    %v1913 = vadd.f32 %v1821, %v1911
    %v1914 = vld [vmem:[%s3 + $0x3f] sm:$0x1]
    %v1915 = vlaneseq
    %v1916 = vshrl.u32 %v1915, 7
    %v1917 = vsub.s32 0, %v1916
    %v1918 = vrot.slane %v1914, %v1917
    %v1919 = vmul.f32 %v1918, %v1903
    %v1920 = vmul.f32 %v1918, %v1904
    %v1921 = vadd.f32 %v1829, %v1919
    %v1922 = vadd.f32 %v1830, %v1920
    %v1923 = vld [vmem:[%s3 + $0xf] sm:$0x1]
    %v1924 = vlaneseq
    %v1925 = vshrl.u32 %v1924, 7
    %v1926 = vsub.s32 0, %v1925
    %v1927 = vrot.slane %v1923, %v1926
    %1930 = vrot.lane.b32.xlu0 %v1903, 127
    %v1931 = vpop.permute.xlu0 %1930
    %1932 = vrot.lane.b32.xlu0 %v1904, 127
    %v1933 = vpop.permute.xlu0 %1932
    %v1936 = vmul.f32 %v1927, %v1931
    %v1937 = vmul.f32 %v1927, %v1933
    %v1938 = vadd.f32 %v1844, %v1936
    %v1939 = vadd.f32 %v1845, %v1937
    %v1940 = vld [vmem:[%s3 + $0x40] sm:$0x1]
    %v1941 = vlaneseq
    %v1942 = vshrl.u32 %v1941, 7
    %v1943 = vsub.s32 0, %v1942
    %v1944 = vrot.slane %v1940, %v1943
    %v1945 = vmul.f32 %v1944, %v1931
    %v1946 = vmul.f32 %v1944, %v1933
    %v1947 = vadd.f32 %v1853, %v1945
    %v1948 = vadd.f32 %v1854, %v1946
    %v1949 = vld [vmem:[%s3 + $0x10] sm:$0x1]
    %v1950 = vlaneseq
    %v1951 = vshrl.u32 %v1950, 7
    %v1952 = vsub.s32 0, %v1951
    %v1953 = vrot.slane %v1949, %v1952
    %1954 = vrot.lane.b32.xlu0 %v1903, 126
    %v1955 = vpop.permute.xlu0 %1954
    %1956 = vrot.lane.b32.xlu0 %v1904, 126
    %v1957 = vpop.permute.xlu0 %1956
    %v1960 = vmul.f32 %v1953, %v1955
    %v1961 = vmul.f32 %v1953, %v1957
    %v1962 = vadd.f32 %v1868, %v1960
    %v1963 = vadd.f32 %v1869, %v1961
    %v1964 = vld [vmem:[%s3 + $0x41] sm:$0x1]
    %v1965 = vlaneseq
    %v1966 = vshrl.u32 %v1965, 7
    %v1967 = vsub.s32 0, %v1966
    %v1968 = vrot.slane %v1964, %v1967
    %v1969 = vmul.f32 %v1968, %v1955
    %v1970 = vmul.f32 %v1968, %v1957
    %v1971 = vadd.f32 %v1877, %v1969
    %v1972 = vadd.f32 %v1878, %v1970
    %v1973 = vld [vmem:[%s3 + $0x11] sm:$0x1]
    %v1974 = vlaneseq
    %v1975 = vshrl.u32 %v1974, 7
    %v1976 = vsub.s32 0, %v1975
    %v1977 = vrot.slane %v1973, %v1976
    %1978 = vrot.lane.b32.xlu0 %v1903, 125
    %v1979 = vpop.permute.xlu0 %1978
    %1980 = vrot.lane.b32.xlu0 %v1904, 125
    %v1981 = vpop.permute.xlu0 %1980
    %v1984 = vmul.f32 %v1977, %v1979
    %v1985 = vmul.f32 %v1977, %v1981
    %v1986 = vadd.f32 %v1892, %v1984
    %v1987 = vadd.f32 %v1893, %v1985
    %v1988 = vld [vmem:[%s3 + $0x42] sm:$0x1]
    %v1989 = vlaneseq
    %v1990 = vshrl.u32 %v1989, 7
    %v1991 = vsub.s32 0, %v1990
    %v1992 = vrot.slane %v1988, %v1991
    %v1993 = vmul.f32 %v1992, %v1979
    %v1994 = vmul.f32 %v1992, %v1981
    %v1995 = vadd.f32 %v1901, %v1993
    %v1996 = vadd.f32 %v1902, %v1994
    %v1997 = vld [vmem:[%s3 + $0x12] sm:$0x1]
    %v1998 = vlaneseq
    %v1999 = vshrl.u32 %v1998, 7
    %v2000 = vsub.s32 0, %v1999
    %v2001 = vrot.slane %v1997, %v2000
    %2002 = vrot.lane.b32.xlu0 %v1903, 124
    %v2003 = vpop.permute.xlu0 %2002
    %2004 = vrot.lane.b32.xlu0 %v1904, 124
    %v2005 = vpop.permute.xlu0 %2004
    %v2008 = vmul.f32 %v2001, %v2003
    %v2009 = vmul.f32 %v2001, %v2005
    %v2010 = vadd.f32 %v1912, %v2008
    %v2011 = vadd.f32 %v1913, %v2009
    %v2012 = vld [vmem:[%s3 + $0x43] sm:$0x1]
    %v2013 = vlaneseq
    %v2014 = vshrl.u32 %v2013, 7
    %v2015 = vsub.s32 0, %v2014
    %v2016 = vrot.slane %v2012, %v2015
    %v2017 = vmul.f32 %v2016, %v2003
    %v2018 = vmul.f32 %v2016, %v2005
    %v2019 = vadd.f32 %v1921, %v2017
    %v2020 = vadd.f32 %v1922, %v2018
    %v2021 = vld [vmem:[%s3 + $0x13] sm:$0x1]
    %v2022 = vlaneseq
    %v2023 = vshrl.u32 %v2022, 7
    %v2024 = vsub.s32 0, %v2023
    %v2025 = vrot.slane %v2021, %v2024
    %2026 = vrot.lane.b32.xlu0 %v1903, 123
    %v2027 = vpop.permute.xlu0 %2026
    %2028 = vrot.lane.b32.xlu0 %v1904, 123
    %v2029 = vpop.permute.xlu0 %2028
    %v2032 = vmul.f32 %v2025, %v2027
    %v2033 = vmul.f32 %v2025, %v2029
    %v2034 = vadd.f32 %v1938, %v2032
    %v2035 = vadd.f32 %v1939, %v2033
    %v2036 = vld [vmem:[%s3 + $0x44] sm:$0x1]
    %v2037 = vlaneseq
    %v2038 = vshrl.u32 %v2037, 7
    %v2039 = vsub.s32 0, %v2038
    %v2040 = vrot.slane %v2036, %v2039
    %v2041 = vmul.f32 %v2040, %v2027
    %v2042 = vmul.f32 %v2040, %v2029
    %v2043 = vadd.f32 %v1947, %v2041
    %v2044 = vadd.f32 %v1948, %v2042
    %v2045 = vld [vmem:[%s3 + $0x14] sm:$0x1]
    %v2046 = vlaneseq
    %v2047 = vshrl.u32 %v2046, 7
    %v2048 = vsub.s32 0, %v2047
    %v2049 = vrot.slane %v2045, %v2048
    %2050 = vrot.lane.b32.xlu0 %v1903, 122
    %v2051 = vpop.permute.xlu0 %2050
    %2052 = vrot.lane.b32.xlu0 %v1904, 122
    %v2053 = vpop.permute.xlu0 %2052
    %v2056 = vmul.f32 %v2049, %v2051
    %v2057 = vmul.f32 %v2049, %v2053
    %v2058 = vadd.f32 %v1962, %v2056
    %v2059 = vadd.f32 %v1963, %v2057
    %v2060 = vld [vmem:[%s3 + $0x45] sm:$0x1]
    %v2061 = vlaneseq
    %v2062 = vshrl.u32 %v2061, 7
    %v2063 = vsub.s32 0, %v2062
    %v2064 = vrot.slane %v2060, %v2063
    %v2065 = vmul.f32 %v2064, %v2051
    %v2066 = vmul.f32 %v2064, %v2053
    %v2067 = vadd.f32 %v1971, %v2065
    %v2068 = vadd.f32 %v1972, %v2066
    %v2069 = vld [vmem:[#allocation2 + $0x3] sm:$0xff]
    %v2070 = vld [vmem:[#allocation2 + $0xb] sm:$0xff]
    %v2071 = vld [vmem:[%s3 + $0x15] sm:$0x1]
    %v2072 = vlaneseq
    %v2073 = vshrl.u32 %v2072, 7
    %v2074 = vsub.s32 0, %v2073
    %v2075 = vrot.slane %v2071, %v2074
    %v2076 = vmul.f32 %v2075, %v2069
    %v2077 = vmul.f32 %v2075, %v2070
    %v2078 = vadd.f32 %v1986, %v2076
    %v2079 = vadd.f32 %v1987, %v2077
    %v2080 = vld [vmem:[%s3 + $0x46] sm:$0x1]
    %v2081 = vlaneseq
    %v2082 = vshrl.u32 %v2081, 7
    %v2083 = vsub.s32 0, %v2082
    %v2084 = vrot.slane %v2080, %v2083
    %v2085 = vmul.f32 %v2084, %v2069
    %v2086 = vmul.f32 %v2084, %v2070
    %v2087 = vadd.f32 %v1995, %v2085
    %v2088 = vadd.f32 %v1996, %v2086
    %v2089 = vld [vmem:[%s3 + $0x16] sm:$0x1]
    %v2090 = vlaneseq
    %v2091 = vshrl.u32 %v2090, 7
    %v2092 = vsub.s32 0, %v2091
    %v2093 = vrot.slane %v2089, %v2092
    %2096 = vrot.lane.b32.xlu0 %v2069, 127
    %v2097 = vpop.permute.xlu0 %2096
    %2098 = vrot.lane.b32.xlu0 %v2070, 127
    %v2099 = vpop.permute.xlu0 %2098
    %v2102 = vmul.f32 %v2093, %v2097
    %v2103 = vmul.f32 %v2093, %v2099
    %v2104 = vadd.f32 %v2010, %v2102
    %v2105 = vadd.f32 %v2011, %v2103
    %v2106 = vld [vmem:[%s3 + $0x47] sm:$0x1]
    %v2107 = vlaneseq
    %v2108 = vshrl.u32 %v2107, 7
    %v2109 = vsub.s32 0, %v2108
    %v2110 = vrot.slane %v2106, %v2109
    %v2111 = vmul.f32 %v2110, %v2097
    %v2112 = vmul.f32 %v2110, %v2099
    %v2113 = vadd.f32 %v2019, %v2111
    %v2114 = vadd.f32 %v2020, %v2112
    %v2115 = vld [vmem:[%s3 + $0x17] sm:$0x1]
    %v2116 = vlaneseq
    %v2117 = vshrl.u32 %v2116, 7
    %v2118 = vsub.s32 0, %v2117
    %v2119 = vrot.slane %v2115, %v2118
    %2120 = vrot.lane.b32.xlu0 %v2069, 126
    %v2121 = vpop.permute.xlu0 %2120
    %2122 = vrot.lane.b32.xlu0 %v2070, 126
    %v2123 = vpop.permute.xlu0 %2122
    %v2126 = vmul.f32 %v2119, %v2121
    %v2127 = vmul.f32 %v2119, %v2123
    %v2128 = vadd.f32 %v2034, %v2126
    %v2129 = vadd.f32 %v2035, %v2127
    %v2130 = vld [vmem:[%s3 + $0x48] sm:$0x1]
    %v2131 = vlaneseq
    %v2132 = vshrl.u32 %v2131, 7
    %v2133 = vsub.s32 0, %v2132
    %v2134 = vrot.slane %v2130, %v2133
    %v2135 = vmul.f32 %v2134, %v2121
    %v2136 = vmul.f32 %v2134, %v2123
    %v2137 = vadd.f32 %v2043, %v2135
    %v2138 = vadd.f32 %v2044, %v2136
    %v2139 = vld [vmem:[%s3 + $0x18] sm:$0x1]
    %v2140 = vlaneseq
    %v2141 = vshrl.u32 %v2140, 7
    %v2142 = vsub.s32 0, %v2141
    %v2143 = vrot.slane %v2139, %v2142
    %2144 = vrot.lane.b32.xlu0 %v2069, 125
    %v2145 = vpop.permute.xlu0 %2144
    %2146 = vrot.lane.b32.xlu0 %v2070, 125
    %v2147 = vpop.permute.xlu0 %2146
    %v2150 = vmul.f32 %v2143, %v2145
    %v2151 = vmul.f32 %v2143, %v2147
    %v2152 = vadd.f32 %v2058, %v2150
    %v2153 = vadd.f32 %v2059, %v2151
    %v2154 = vld [vmem:[%s3 + $0x49] sm:$0x1]
    %v2155 = vlaneseq
    %v2156 = vshrl.u32 %v2155, 7
    %v2157 = vsub.s32 0, %v2156
    %v2158 = vrot.slane %v2154, %v2157
    %v2159 = vmul.f32 %v2158, %v2145
    %v2160 = vmul.f32 %v2158, %v2147
    %v2161 = vadd.f32 %v2067, %v2159
    %v2162 = vadd.f32 %v2068, %v2160
    %v2163 = vld [vmem:[%s3 + $0x19] sm:$0x1]
    %v2164 = vlaneseq
    %v2165 = vshrl.u32 %v2164, 7
    %v2166 = vsub.s32 0, %v2165
    %v2167 = vrot.slane %v2163, %v2166
    %2168 = vrot.lane.b32.xlu0 %v2069, 124
    %v2169 = vpop.permute.xlu0 %2168
    %2170 = vrot.lane.b32.xlu0 %v2070, 124
    %v2171 = vpop.permute.xlu0 %2170
    %v2174 = vmul.f32 %v2167, %v2169
    %v2175 = vmul.f32 %v2167, %v2171
    %v2176 = vadd.f32 %v2078, %v2174
    %v2177 = vadd.f32 %v2079, %v2175
    %v2178 = vld [vmem:[%s3 + $0x4a] sm:$0x1]
    %v2179 = vlaneseq
    %v2180 = vshrl.u32 %v2179, 7
    %v2181 = vsub.s32 0, %v2180
    %v2182 = vrot.slane %v2178, %v2181
    %v2183 = vmul.f32 %v2182, %v2169
    %v2184 = vmul.f32 %v2182, %v2171
    %v2185 = vadd.f32 %v2087, %v2183
    %v2186 = vadd.f32 %v2088, %v2184
    %v2187 = vld [vmem:[%s3 + $0x1a] sm:$0x1]
    %v2188 = vlaneseq
    %v2189 = vshrl.u32 %v2188, 7
    %v2190 = vsub.s32 0, %v2189
    %v2191 = vrot.slane %v2187, %v2190
    %2192 = vrot.lane.b32.xlu0 %v2069, 123
    %v2193 = vpop.permute.xlu0 %2192
    %2194 = vrot.lane.b32.xlu0 %v2070, 123
    %v2195 = vpop.permute.xlu0 %2194
    %v2198 = vmul.f32 %v2191, %v2193
    %v2199 = vmul.f32 %v2191, %v2195
    %v2200 = vadd.f32 %v2104, %v2198
    %v2201 = vadd.f32 %v2105, %v2199
    %v2202 = vld [vmem:[%s3 + $0x4b] sm:$0x1]
    %v2203 = vlaneseq
    %v2204 = vshrl.u32 %v2203, 7
    %v2205 = vsub.s32 0, %v2204
    %v2206 = vrot.slane %v2202, %v2205
    %v2207 = vmul.f32 %v2206, %v2193
    %v2208 = vmul.f32 %v2206, %v2195
    %v2209 = vadd.f32 %v2113, %v2207
    %v2210 = vadd.f32 %v2114, %v2208
    %v2211 = vld [vmem:[%s3 + $0x1b] sm:$0x1]
    %v2212 = vlaneseq
    %v2213 = vshrl.u32 %v2212, 7
    %v2214 = vsub.s32 0, %v2213
    %v2215 = vrot.slane %v2211, %v2214
    %2216 = vrot.lane.b32.xlu0 %v2069, 122
    %v2217 = vpop.permute.xlu0 %2216
    %2218 = vrot.lane.b32.xlu0 %v2070, 122
    %v2219 = vpop.permute.xlu0 %2218
    %v2222 = vmul.f32 %v2215, %v2217
    %v2223 = vmul.f32 %v2215, %v2219
    %v2224 = vadd.f32 %v2128, %v2222
    %v2225 = vadd.f32 %v2129, %v2223
    %v2226 = vld [vmem:[%s3 + $0x4c] sm:$0x1]
    %v2227 = vlaneseq
    %v2228 = vshrl.u32 %v2227, 7
    %v2229 = vsub.s32 0, %v2228
    %v2230 = vrot.slane %v2226, %v2229
    %v2231 = vmul.f32 %v2230, %v2217
    %v2232 = vmul.f32 %v2230, %v2219
    %v2233 = vadd.f32 %v2137, %v2231
    %v2234 = vadd.f32 %v2138, %v2232
    %v2235 = vld [vmem:[#allocation2 + $0x4] sm:$0xff]
    %v2236 = vld [vmem:[#allocation2 + $0xc] sm:$0xff]
    %v2237 = vld [vmem:[%s3 + $0x1c] sm:$0x1]
    %v2238 = vlaneseq
    %v2239 = vshrl.u32 %v2238, 7
    %v2240 = vsub.s32 0, %v2239
    %v2241 = vrot.slane %v2237, %v2240
    %v2242 = vmul.f32 %v2241, %v2235
    %v2243 = vmul.f32 %v2241, %v2236
    %v2244 = vadd.f32 %v2152, %v2242
    %v2245 = vadd.f32 %v2153, %v2243
    %v2246 = vld [vmem:[%s3 + $0x4d] sm:$0x1]
    %v2247 = vlaneseq
    %v2248 = vshrl.u32 %v2247, 7
    %v2249 = vsub.s32 0, %v2248
    %v2250 = vrot.slane %v2246, %v2249
    %v2251 = vmul.f32 %v2250, %v2235
    %v2252 = vmul.f32 %v2250, %v2236
    %v2253 = vadd.f32 %v2161, %v2251
    %v2254 = vadd.f32 %v2162, %v2252
    %v2255 = vld [vmem:[%s3 + $0x1d] sm:$0x1]
    %v2256 = vlaneseq
    %v2257 = vshrl.u32 %v2256, 7
    %v2258 = vsub.s32 0, %v2257
    %v2259 = vrot.slane %v2255, %v2258
    %2262 = vrot.lane.b32.xlu0 %v2235, 127
    %v2263 = vpop.permute.xlu0 %2262
    %2264 = vrot.lane.b32.xlu0 %v2236, 127
    %v2265 = vpop.permute.xlu0 %2264
    %v2268 = vmul.f32 %v2259, %v2263
    %v2269 = vmul.f32 %v2259, %v2265
    %v2270 = vadd.f32 %v2176, %v2268
    %v2271 = vadd.f32 %v2177, %v2269
    %v2272 = vld [vmem:[%s3 + $0x4e] sm:$0x1]
    %v2273 = vlaneseq
    %v2274 = vshrl.u32 %v2273, 7
    %v2275 = vsub.s32 0, %v2274
    %v2276 = vrot.slane %v2272, %v2275
    %v2277 = vmul.f32 %v2276, %v2263
    %v2278 = vmul.f32 %v2276, %v2265
    %v2279 = vadd.f32 %v2185, %v2277
    %v2280 = vadd.f32 %v2186, %v2278
    %v2281 = vld [vmem:[%s3 + $0x1e] sm:$0x1]
    %v2282 = vlaneseq
    %v2283 = vshrl.u32 %v2282, 7
    %v2284 = vsub.s32 0, %v2283
    %v2285 = vrot.slane %v2281, %v2284
    %2286 = vrot.lane.b32.xlu0 %v2235, 126
    %v2287 = vpop.permute.xlu0 %2286
    %2288 = vrot.lane.b32.xlu0 %v2236, 126
    %v2289 = vpop.permute.xlu0 %2288
    %v2292 = vmul.f32 %v2285, %v2287
    %v2293 = vmul.f32 %v2285, %v2289
    %v2294 = vadd.f32 %v2200, %v2292
    %v2295 = vadd.f32 %v2201, %v2293
    %v2296 = vld [vmem:[%s3 + $0x4f] sm:$0x1]
    %v2297 = vlaneseq
    %v2298 = vshrl.u32 %v2297, 7
    %v2299 = vsub.s32 0, %v2298
    %v2300 = vrot.slane %v2296, %v2299
    %v2301 = vmul.f32 %v2300, %v2287
    %v2302 = vmul.f32 %v2300, %v2289
    %v2303 = vadd.f32 %v2209, %v2301
    %v2304 = vadd.f32 %v2210, %v2302
    %v2305 = vld [vmem:[%s3 + $0x1f] sm:$0x1]
    %v2306 = vlaneseq
    %v2307 = vshrl.u32 %v2306, 7
    %v2308 = vsub.s32 0, %v2307
    %v2309 = vrot.slane %v2305, %v2308
    %2310 = vrot.lane.b32.xlu0 %v2235, 125
    %v2311 = vpop.permute.xlu0 %2310
    %2312 = vrot.lane.b32.xlu0 %v2236, 125
    %v2313 = vpop.permute.xlu0 %2312
    %v2316 = vmul.f32 %v2309, %v2311
    %v2317 = vmul.f32 %v2309, %v2313
    %v2318 = vadd.f32 %v2224, %v2316
    %v2319 = vadd.f32 %v2225, %v2317
    %v2320 = vld [vmem:[%s3 + $0x50] sm:$0x1]
    %v2321 = vlaneseq
    %v2322 = vshrl.u32 %v2321, 7
    %v2323 = vsub.s32 0, %v2322
    %v2324 = vrot.slane %v2320, %v2323
    %v2325 = vmul.f32 %v2324, %v2311
    %v2326 = vmul.f32 %v2324, %v2313
    %v2327 = vadd.f32 %v2233, %v2325
    %v2328 = vadd.f32 %v2234, %v2326
    %v2329 = vld [vmem:[%s3 + $0x20] sm:$0x1]
    %v2330 = vlaneseq
    %v2331 = vshrl.u32 %v2330, 7
    %v2332 = vsub.s32 0, %v2331
    %v2333 = vrot.slane %v2329, %v2332
    %2334 = vrot.lane.b32.xlu0 %v2235, 124
    %v2335 = vpop.permute.xlu0 %2334
    %2336 = vrot.lane.b32.xlu0 %v2236, 124
    %v2337 = vpop.permute.xlu0 %2336
    %v2340 = vmul.f32 %v2333, %v2335
    %v2341 = vmul.f32 %v2333, %v2337
    %v2342 = vadd.f32 %v2244, %v2340
    %v2343 = vadd.f32 %v2245, %v2341
    %v2344 = vld [vmem:[%s3 + $0x51] sm:$0x1]
    %v2345 = vlaneseq
    %v2346 = vshrl.u32 %v2345, 7
    %v2347 = vsub.s32 0, %v2346
    %v2348 = vrot.slane %v2344, %v2347
    %v2349 = vmul.f32 %v2348, %v2335
    %v2350 = vmul.f32 %v2348, %v2337
    %v2351 = vadd.f32 %v2253, %v2349
    %v2352 = vadd.f32 %v2254, %v2350
    %v2353 = vld [vmem:[%s3 + $0x21] sm:$0x1]
    %v2354 = vlaneseq
    %v2355 = vshrl.u32 %v2354, 7
    %v2356 = vsub.s32 0, %v2355
    %v2357 = vrot.slane %v2353, %v2356
    %2358 = vrot.lane.b32.xlu0 %v2235, 123
    %v2359 = vpop.permute.xlu0 %2358
    %2360 = vrot.lane.b32.xlu0 %v2236, 123
    %v2361 = vpop.permute.xlu0 %2360
    %v2364 = vmul.f32 %v2357, %v2359
    %v2365 = vmul.f32 %v2357, %v2361
    %v2366 = vadd.f32 %v2270, %v2364
    %v2367 = vadd.f32 %v2271, %v2365
    %v2368 = vld [vmem:[%s3 + $0x52] sm:$0x1]
    %v2369 = vlaneseq
    %v2370 = vshrl.u32 %v2369, 7
    %v2371 = vsub.s32 0, %v2370
    %v2372 = vrot.slane %v2368, %v2371
    %v2373 = vmul.f32 %v2372, %v2359
    %v2374 = vmul.f32 %v2372, %v2361
    %v2375 = vadd.f32 %v2279, %v2373
    %v2376 = vadd.f32 %v2280, %v2374
    %v2377 = vld [vmem:[%s3 + $0x22] sm:$0x1]
    %v2378 = vlaneseq
    %v2379 = vshrl.u32 %v2378, 7
    %v2380 = vsub.s32 0, %v2379
    %v2381 = vrot.slane %v2377, %v2380
    %2382 = vrot.lane.b32.xlu0 %v2235, 122
    %v2383 = vpop.permute.xlu0 %2382
    %2384 = vrot.lane.b32.xlu0 %v2236, 122
    %v2385 = vpop.permute.xlu0 %2384
    %v2388 = vmul.f32 %v2381, %v2383
    %v2389 = vmul.f32 %v2381, %v2385
    %v2390 = vadd.f32 %v2294, %v2388
    %v2391 = vadd.f32 %v2295, %v2389
    %v2392 = vld [vmem:[%s3 + $0x53] sm:$0x1]
    %v2393 = vlaneseq
    %v2394 = vshrl.u32 %v2393, 7
    %v2395 = vsub.s32 0, %v2394
    %v2396 = vrot.slane %v2392, %v2395
    %v2397 = vmul.f32 %v2396, %v2383
    %v2398 = vmul.f32 %v2396, %v2385
    %v2399 = vadd.f32 %v2303, %v2397
    %v2400 = vadd.f32 %v2304, %v2398
    %v2401 = vld [vmem:[#allocation2 + $0x5] sm:$0xff]
    %v2402 = vld [vmem:[#allocation2 + $0xd] sm:$0xff]
    %v2403 = vld [vmem:[%s3 + $0x23] sm:$0x1]
    %v2404 = vlaneseq
    %v2405 = vshrl.u32 %v2404, 7
    %v2406 = vsub.s32 0, %v2405
    %v2407 = vrot.slane %v2403, %v2406
    %v2408 = vmul.f32 %v2407, %v2401
    %v2409 = vmul.f32 %v2407, %v2402
    %v2410 = vadd.f32 %v2318, %v2408
    %v2411 = vadd.f32 %v2319, %v2409
    %v2412 = vld [vmem:[%s3 + $0x54] sm:$0x1]
    %v2413 = vlaneseq
    %v2414 = vshrl.u32 %v2413, 7
    %v2415 = vsub.s32 0, %v2414
    %v2416 = vrot.slane %v2412, %v2415
    %v2417 = vmul.f32 %v2416, %v2401
    %v2418 = vmul.f32 %v2416, %v2402
    %v2419 = vadd.f32 %v2327, %v2417
    %v2420 = vadd.f32 %v2328, %v2418
    %v2421 = vld [vmem:[%s3 + $0x24] sm:$0x1]
    %v2422 = vlaneseq
    %v2423 = vshrl.u32 %v2422, 7
    %v2424 = vsub.s32 0, %v2423
    %v2425 = vrot.slane %v2421, %v2424
    %2428 = vrot.lane.b32.xlu0 %v2401, 127
    %v2429 = vpop.permute.xlu0 %2428
    %2430 = vrot.lane.b32.xlu0 %v2402, 127
    %v2431 = vpop.permute.xlu0 %2430
    %v2434 = vmul.f32 %v2425, %v2429
    %v2435 = vmul.f32 %v2425, %v2431
    %v2436 = vadd.f32 %v2342, %v2434
    %v2437 = vadd.f32 %v2343, %v2435
    %v2438 = vld [vmem:[%s3 + $0x55] sm:$0x1]
    %v2439 = vlaneseq
    %v2440 = vshrl.u32 %v2439, 7
    %v2441 = vsub.s32 0, %v2440
    %v2442 = vrot.slane %v2438, %v2441
    %v2443 = vmul.f32 %v2442, %v2429
    %v2444 = vmul.f32 %v2442, %v2431
    %v2445 = vadd.f32 %v2351, %v2443
    %v2446 = vadd.f32 %v2352, %v2444
    %v2447 = vld [vmem:[%s3 + $0x25] sm:$0x1]
    %v2448 = vlaneseq
    %v2449 = vshrl.u32 %v2448, 7
    %v2450 = vsub.s32 0, %v2449
    %v2451 = vrot.slane %v2447, %v2450
    %2452 = vrot.lane.b32.xlu0 %v2401, 126
    %v2453 = vpop.permute.xlu0 %2452
    %2454 = vrot.lane.b32.xlu0 %v2402, 126
    %v2455 = vpop.permute.xlu0 %2454
    %v2458 = vmul.f32 %v2451, %v2453
    %v2459 = vmul.f32 %v2451, %v2455
    %v2460 = vadd.f32 %v2366, %v2458
    %v2461 = vadd.f32 %v2367, %v2459
    %v2462 = vld [vmem:[%s3 + $0x56] sm:$0x1]
    %v2463 = vlaneseq
    %v2464 = vshrl.u32 %v2463, 7
    %v2465 = vsub.s32 0, %v2464
    %v2466 = vrot.slane %v2462, %v2465
    %v2467 = vmul.f32 %v2466, %v2453
    %v2468 = vmul.f32 %v2466, %v2455
    %v2469 = vadd.f32 %v2375, %v2467
    %v2470 = vadd.f32 %v2376, %v2468
    %v2471 = vld [vmem:[%s3 + $0x26] sm:$0x1]
    %v2472 = vlaneseq
    %v2473 = vshrl.u32 %v2472, 7
    %v2474 = vsub.s32 0, %v2473
    %v2475 = vrot.slane %v2471, %v2474
    %2476 = vrot.lane.b32.xlu0 %v2401, 125
    %v2477 = vpop.permute.xlu0 %2476
    %2478 = vrot.lane.b32.xlu0 %v2402, 125
    %v2479 = vpop.permute.xlu0 %2478
    %v2482 = vmul.f32 %v2475, %v2477
    %v2483 = vmul.f32 %v2475, %v2479
    %v2484 = vadd.f32 %v2390, %v2482
    %v2485 = vadd.f32 %v2391, %v2483
    %v2486 = vld [vmem:[%s3 + $0x57] sm:$0x1]
    %v2487 = vlaneseq
    %v2488 = vshrl.u32 %v2487, 7
    %v2489 = vsub.s32 0, %v2488
    %v2490 = vrot.slane %v2486, %v2489
    %v2491 = vmul.f32 %v2490, %v2477
    %v2492 = vmul.f32 %v2490, %v2479
    %v2493 = vadd.f32 %v2399, %v2491
    %v2494 = vadd.f32 %v2400, %v2492
    %v2495 = vld [vmem:[%s3 + $0x27] sm:$0x1]
    %v2496 = vlaneseq
    %v2497 = vshrl.u32 %v2496, 7
    %v2498 = vsub.s32 0, %v2497
    %v2499 = vrot.slane %v2495, %v2498
    %2500 = vrot.lane.b32.xlu0 %v2401, 124
    %v2501 = vpop.permute.xlu0 %2500
    %2502 = vrot.lane.b32.xlu0 %v2402, 124
    %v2503 = vpop.permute.xlu0 %2502
    %v2506 = vmul.f32 %v2499, %v2501
    %v2507 = vmul.f32 %v2499, %v2503
    %v2508 = vadd.f32 %v2410, %v2506
    %v2509 = vadd.f32 %v2411, %v2507
    %v2510 = vld [vmem:[%s3 + $0x58] sm:$0x1]
    %v2511 = vlaneseq
    %v2512 = vshrl.u32 %v2511, 7
    %v2513 = vsub.s32 0, %v2512
    %v2514 = vrot.slane %v2510, %v2513
    %v2515 = vmul.f32 %v2514, %v2501
    %v2516 = vmul.f32 %v2514, %v2503
    %v2517 = vadd.f32 %v2419, %v2515
    %v2518 = vadd.f32 %v2420, %v2516
    %v2519 = vld [vmem:[%s3 + $0x28] sm:$0x1]
    %v2520 = vlaneseq
    %v2521 = vshrl.u32 %v2520, 7
    %v2522 = vsub.s32 0, %v2521
    %v2523 = vrot.slane %v2519, %v2522
    %2524 = vrot.lane.b32.xlu0 %v2401, 123
    %v2525 = vpop.permute.xlu0 %2524
    %2526 = vrot.lane.b32.xlu0 %v2402, 123
    %v2527 = vpop.permute.xlu0 %2526
    %v2530 = vmul.f32 %v2523, %v2525
    %v2531 = vmul.f32 %v2523, %v2527
    %v2532 = vadd.f32 %v2436, %v2530
    %v2533 = vadd.f32 %v2437, %v2531
    %v2534 = vld [vmem:[%s3 + $0x59] sm:$0x1]
    %v2535 = vlaneseq
    %v2536 = vshrl.u32 %v2535, 7
    %v2537 = vsub.s32 0, %v2536
    %v2538 = vrot.slane %v2534, %v2537
    %v2539 = vmul.f32 %v2538, %v2525
    %v2540 = vmul.f32 %v2538, %v2527
    %v2541 = vadd.f32 %v2445, %v2539
    %v2542 = vadd.f32 %v2446, %v2540
    %v2543 = vld [vmem:[%s3 + $0x29] sm:$0x1]
    %v2544 = vlaneseq
    %v2545 = vshrl.u32 %v2544, 7
    %v2546 = vsub.s32 0, %v2545
    %v2547 = vrot.slane %v2543, %v2546
    %2548 = vrot.lane.b32.xlu0 %v2401, 122
    %v2549 = vpop.permute.xlu0 %2548
    %2550 = vrot.lane.b32.xlu0 %v2402, 122
    %v2551 = vpop.permute.xlu0 %2550
    %v2554 = vmul.f32 %v2547, %v2549
    %v2555 = vmul.f32 %v2547, %v2551
    %v2556 = vadd.f32 %v2460, %v2554
    %v2557 = vadd.f32 %v2461, %v2555
    %v2558 = vld [vmem:[%s3 + $0x5a] sm:$0x1]
    %v2559 = vlaneseq
    %v2560 = vshrl.u32 %v2559, 7
    %v2561 = vsub.s32 0, %v2560
    %v2562 = vrot.slane %v2558, %v2561
    %v2563 = vmul.f32 %v2562, %v2549
    %v2564 = vmul.f32 %v2562, %v2551
    %v2565 = vadd.f32 %v2469, %v2563
    %v2566 = vadd.f32 %v2470, %v2564
    %v2567 = vld [vmem:[#allocation2 + $0x6] sm:$0xff]
    %v2568 = vld [vmem:[#allocation2 + $0xe] sm:$0xff]
    %v2569 = vld [vmem:[%s3 + $0x2a] sm:$0x1]
    %v2570 = vlaneseq
    %v2571 = vshrl.u32 %v2570, 7
    %v2572 = vsub.s32 0, %v2571
    %v2573 = vrot.slane %v2569, %v2572
    %v2574 = vmul.f32 %v2573, %v2567
    %v2575 = vmul.f32 %v2573, %v2568
    %v2576 = vadd.f32 %v2484, %v2574
    %v2577 = vadd.f32 %v2485, %v2575
    %v2578 = vld [vmem:[%s3 + $0x5b] sm:$0x1]
    %v2579 = vlaneseq
    %v2580 = vshrl.u32 %v2579, 7
    %v2581 = vsub.s32 0, %v2580
    %v2582 = vrot.slane %v2578, %v2581
    %v2583 = vmul.f32 %v2582, %v2567
    %v2584 = vmul.f32 %v2582, %v2568
    %v2585 = vadd.f32 %v2493, %v2583
    %v2586 = vadd.f32 %v2494, %v2584
    %v2587 = vld [vmem:[%s3 + $0x2b] sm:$0x1]
    %v2588 = vlaneseq
    %v2589 = vshrl.u32 %v2588, 7
    %v2590 = vsub.s32 0, %v2589
    %v2591 = vrot.slane %v2587, %v2590
    %2594 = vrot.lane.b32.xlu0 %v2567, 127
    %v2595 = vpop.permute.xlu0 %2594
    %2596 = vrot.lane.b32.xlu0 %v2568, 127
    %v2597 = vpop.permute.xlu0 %2596
    %v2600 = vmul.f32 %v2591, %v2595
    %v2601 = vmul.f32 %v2591, %v2597
    %v2602 = vadd.f32 %v2508, %v2600
    %v2603 = vadd.f32 %v2509, %v2601
    %v2604 = vld [vmem:[%s3 + $0x5c] sm:$0x1]
    %v2605 = vlaneseq
    %v2606 = vshrl.u32 %v2605, 7
    %v2607 = vsub.s32 0, %v2606
    %v2608 = vrot.slane %v2604, %v2607
    %v2609 = vmul.f32 %v2608, %v2595
    %v2610 = vmul.f32 %v2608, %v2597
    %v2611 = vadd.f32 %v2517, %v2609
    %v2612 = vadd.f32 %v2518, %v2610
    %v2613 = vld [vmem:[%s3 + $0x2c] sm:$0x1]
    %v2614 = vlaneseq
    %v2615 = vshrl.u32 %v2614, 7
    %v2616 = vsub.s32 0, %v2615
    %v2617 = vrot.slane %v2613, %v2616
    %2618 = vrot.lane.b32.xlu0 %v2567, 126
    %v2619 = vpop.permute.xlu0 %2618
    %2620 = vrot.lane.b32.xlu0 %v2568, 126
    %v2621 = vpop.permute.xlu0 %2620
    %v2624 = vmul.f32 %v2617, %v2619
    %v2625 = vmul.f32 %v2617, %v2621
    %v2626 = vadd.f32 %v2532, %v2624
    %v2627 = vadd.f32 %v2533, %v2625
    %v2628 = vld [vmem:[%s3 + $0x5d] sm:$0x1]
    %v2629 = vlaneseq
    %v2630 = vshrl.u32 %v2629, 7
    %v2631 = vsub.s32 0, %v2630
    %v2632 = vrot.slane %v2628, %v2631
    %v2633 = vmul.f32 %v2632, %v2619
    %v2634 = vmul.f32 %v2632, %v2621
    %v2635 = vadd.f32 %v2541, %v2633
    %v2636 = vadd.f32 %v2542, %v2634
    %v2637 = vld [vmem:[%s3 + $0x2d] sm:$0x1]
    %v2638 = vlaneseq
    %v2639 = vshrl.u32 %v2638, 7
    %v2640 = vsub.s32 0, %v2639
    %v2641 = vrot.slane %v2637, %v2640
    %2642 = vrot.lane.b32.xlu0 %v2567, 125
    %v2643 = vpop.permute.xlu0 %2642
    %2644 = vrot.lane.b32.xlu0 %v2568, 125
    %v2645 = vpop.permute.xlu0 %2644
    %v2648 = vmul.f32 %v2641, %v2643
    %v2649 = vmul.f32 %v2641, %v2645
    %v2650 = vadd.f32 %v2556, %v2648
    %v2651 = vadd.f32 %v2557, %v2649
    %v2652 = vld [vmem:[%s3 + $0x5e] sm:$0x1]
    %v2653 = vlaneseq
    %v2654 = vshrl.u32 %v2653, 7
    %v2655 = vsub.s32 0, %v2654
    %v2656 = vrot.slane %v2652, %v2655
    %v2657 = vmul.f32 %v2656, %v2643
    %v2658 = vmul.f32 %v2656, %v2645
    %v2659 = vadd.f32 %v2565, %v2657
    %v2660 = vadd.f32 %v2566, %v2658
    %v2661 = vld [vmem:[%s3 + $0x2e] sm:$0x1]
    %v2662 = vlaneseq
    %v2663 = vshrl.u32 %v2662, 7
    %v2664 = vsub.s32 0, %v2663
    %v2665 = vrot.slane %v2661, %v2664
    %2666 = vrot.lane.b32.xlu0 %v2567, 124
    %v2667 = vpop.permute.xlu0 %2666
    %2668 = vrot.lane.b32.xlu0 %v2568, 124
    %v2669 = vpop.permute.xlu0 %2668
    %v2672 = vmul.f32 %v2665, %v2667
    %v2673 = vmul.f32 %v2665, %v2669
    %v2674 = vadd.f32 %v2576, %v2672
    %v2675 = vadd.f32 %v2577, %v2673
    %v2676 = vld [vmem:[%s3 + $0x5f] sm:$0x1]
    %v2677 = vlaneseq
    %v2678 = vshrl.u32 %v2677, 7
    %v2679 = vsub.s32 0, %v2678
    %v2680 = vrot.slane %v2676, %v2679
    %v2681 = vmul.f32 %v2680, %v2667
    %v2682 = vmul.f32 %v2680, %v2669
    %v2683 = vadd.f32 %v2585, %v2681
    %v2684 = vadd.f32 %v2586, %v2682
    %v2685 = vld [vmem:[%s3 + $0x2f] sm:$0x1]
    %v2686 = vlaneseq
    %v2687 = vshrl.u32 %v2686, 7
    %v2688 = vsub.s32 0, %v2687
    %v2689 = vrot.slane %v2685, %v2688
    %2690 = vrot.lane.b32.xlu0 %v2567, 123
    %v2691 = vpop.permute.xlu0 %2690
    %2692 = vrot.lane.b32.xlu0 %v2568, 123
    %v2693 = vpop.permute.xlu0 %2692
    %v2696 = vmul.f32 %v2689, %v2691
    %v2697 = vmul.f32 %v2689, %v2693
    %v2698 = vadd.f32 %v2602, %v2696
    %v2699 = vadd.f32 %v2603, %v2697
    %v2700 = vld [vmem:[%s3 + $0x60] sm:$0x1]
    %v2701 = vlaneseq
    %v2702 = vshrl.u32 %v2701, 7
    %v2703 = vsub.s32 0, %v2702
    %v2704 = vrot.slane %v2700, %v2703
    %v2705 = vmul.f32 %v2704, %v2691
    %v2706 = vmul.f32 %v2704, %v2693
    %v2707 = vadd.f32 %v2611, %v2705
    %v2708 = vadd.f32 %v2612, %v2706
    %v2709 = vld [vmem:[%s3 + $0x30] sm:$0x1]
    %v2710 = vlaneseq
    %v2711 = vshrl.u32 %v2710, 7
    %v2712 = vsub.s32 0, %v2711
    %v2713 = vrot.slane %v2709, %v2712
    %2714 = vrot.lane.b32.xlu0 %v2567, 122
    %v2715 = vpop.permute.xlu0 %2714
    %2716 = vrot.lane.b32.xlu0 %v2568, 122
    %v2717 = vpop.permute.xlu0 %2716
    %v2720 = vmul.f32 %v2713, %v2715
    %v2721 = vmul.f32 %v2713, %v2717
    %v2722 = vadd.f32 %v2626, %v2720
    %v2723 = vadd.f32 %v2627, %v2721
    %v2724 = vld [vmem:[%s3 + $0x61] sm:$0x1]
    %v2725 = vlaneseq
    %v2726 = vshrl.u32 %v2725, 7
    %v2727 = vsub.s32 0, %v2726
    %v2728 = vrot.slane %v2724, %v2727
    %v2729 = vmul.f32 %v2728, %v2715
    %v2730 = vmul.f32 %v2728, %v2717
    %v2731 = vadd.f32 %v2635, %v2729
    %v2732 = vadd.f32 %v2636, %v2730
    %v2733 = vadd.f32 %v2722, %v2650
    %v2734 = vadd.f32 %v2723, %v2651
    %v2735 = vadd.f32 %v2674, %v2698
    %v2736 = vadd.f32 %v2675, %v2699
    %v2737 = vadd.f32 %v2733, %v2735
    %v2738 = vadd.f32 %v2734, %v2736
    %2741 = vrot.lane.b32.xlu0 %v2737, 78
    %v2742 = vpop.permute.xlu0 %2741
    %2743 = vrot.lane.b32.xlu0 %v2738, 78
    %v2744 = vpop.permute.xlu0 %2743
    %v2747 = vadd.f32 %v2737, %v2742
    %v2748 = vadd.f32 %v2738, %v2744
    %s2749 = sld [smem:[#allocation11]]
    %v2750 = vstv %s2749
    %v2751 = vmul.f32 %v2747, %v2750
    %v2752 = vmul.f32 %v2748, %v2750
    %s2753 = sld [smem:[#allocation12]]
    %v2754 = vstv %s2753
    %v2755 = vadd.f32 %v2751, %v2754
    %v2756 = vadd.f32 %v2752, %v2754
    %vm2757 = vcmp.ge.f32.partialorder %v2755, 0.0
    %vm2758 = vcmp.ge.f32.partialorder %v2756, 0.0
    %v2759 = vmul.f32 %v2755, 0.3
    %v2760 = vmul.f32 %v2756, 0.3
    %v2761 = vsel %vm2757, %v2755, %v2759
    %v2762 = vsel %vm2758, %v2756, %v2760
    %v2763 = vadd.f32 %v2731, %v2659
    %v2764 = vadd.f32 %v2732, %v2660
    %v2765 = vadd.f32 %v2683, %v2707
    %v2766 = vadd.f32 %v2684, %v2708
    %v2767 = vadd.f32 %v2763, %v2765
    %v2768 = vadd.f32 %v2764, %v2766
    %2771 = vrot.lane.b32.xlu0 %v2767, 78
    %v2772 = vpop.permute.xlu0 %2771
    %2773 = vrot.lane.b32.xlu0 %v2768, 78
    %v2774 = vpop.permute.xlu0 %2773
    %v2777 = vadd.f32 %v2767, %v2772
    %v2778 = vadd.f32 %v2768, %v2774
    %s2779 = sld [smem:[#allocation11 + $0x1]]
    %v2780 = vstv %s2779
    %v2781 = vmul.f32 %v2777, %v2780
    %v2782 = vmul.f32 %v2778, %v2780
    %s2783 = sld [smem:[#allocation12 + $0x1]]
    %v2784 = vstv %s2783
    %v2785 = vadd.f32 %v2781, %v2784
    %v2786 = vadd.f32 %v2782, %v2784
    %vm2787 = vcmp.ge.f32.partialorder %v2785, 0.0
    %vm2788 = vcmp.ge.f32.partialorder %v2786, 0.0
    %v2789 = vmul.f32 %v2785, 0.3
    %v2790 = vmul.f32 %v2786, 0.3
    %v2791 = vsel %vm2787, %v2785, %v2789
    %v2792 = vsel %vm2788, %v2786, %v2790
    %v2795 = vunpack.c.l.s4 1983009808
    %v2796 = vunpack.c.0.s8 %v2795
    %v2797 = vlaneseq
    %v2798 = vshrl.u32 %v2797, 7
    %v2799 = vsub.s32 %v2796, %v2798
    %v2800 = vrot.slane %v2761, %v2799
    %2801 = vrot.lane.b32.xlu0 %v2800, 125
    %v2802 = vpop.permute.xlu0 %2801
    %vm2804 = vcmask 122880
    %2805 = vst.msk [vmem:[#allocation3] sm:$0x1] %vm2804, %v2802
    %v2806 = vrot.slane %v2800, 7
    %v2807 = vrot.slane %v2806, 2
    %2808 = vrot.lane.b32.xlu0 %v2807, 13
    %v2809 = vpop.permute.xlu0 %2808
    %vm2811 = vcmask 254080
    %2812 = vst.msk [vmem:[#allocation3] sm:$0x1] %vm2811, %v2809
    %v2813 = vcombine.high %v2800, %v2800
    %2814 = vrot.lane.b32.xlu0 %v2813, 29
    %v2815 = vpop.permute.xlu0 %2814
    %vm2817 = vcmask 385280
    %2818 = vst.msk [vmem:[#allocation3] sm:$0x1] %vm2817, %v2815
    %v2819 = vrot.slane %v2813, 7
    %v2820 = vrot.slane %v2819, 2
    %2821 = vrot.lane.b32.xlu0 %v2820, 45
    %v2822 = vpop.permute.xlu0 %2821
    %vm2824 = vcmask 516480
    %2825 = vst.msk [vmem:[#allocation3] sm:$0x1] %vm2824, %v2822
    %v2826 = vcombine.high %v2761, %v2761
    %v2828 = vunpack.c.l.s4 1983009808
    %v2829 = vunpack.c.0.s8 %v2828
    %v2830 = vlaneseq
    %v2831 = vshrl.u32 %v2830, 7
    %v2832 = vsub.s32 %v2829, %v2831
    %v2833 = vrot.slane %v2826, %v2832
    %2834 = vrot.lane.b32.xlu0 %v2833, 61
    %v2835 = vpop.permute.xlu0 %2834
    %vm2837 = vcmask 647680
    %2838 = vst.msk [vmem:[#allocation3] sm:$0x1] %vm2837, %v2835
    %v2839 = vrot.slane %v2833, 7
    %v2840 = vrot.slane %v2839, 2
    %2841 = vrot.lane.b32.xlu0 %v2840, 77
    %v2842 = vpop.permute.xlu0 %2841
    %vm2844 = vcmask 778880
    %2845 = vst.msk [vmem:[#allocation3] sm:$0x1] %vm2844, %v2842
    %v2846 = vcombine.high %v2833, %v2833
    %2847 = vrot.lane.b32.xlu0 %v2846, 93
    %v2848 = vpop.permute.xlu0 %2847
    %vm2850 = vcmask 910080
    %2851 = vst.msk [vmem:[#allocation3] sm:$0x1] %vm2850, %v2848
    %v2852 = vrot.slane %v2846, 7
    %v2853 = vrot.slane %v2852, 2
    %2854 = vrot.lane.b32.xlu0 %v2853, 109
    %v2855 = vpop.permute.xlu0 %2854
    %vm2857 = vcmask 1041280
    %2858 = vst.msk [vmem:[#allocation3] sm:$0x1] %vm2857, %v2855
    %v2861 = vunpack.c.l.s4 1983009808
    %v2862 = vunpack.c.0.s8 %v2861
    %v2863 = vlaneseq
    %v2864 = vshrl.u32 %v2863, 7
    %v2865 = vsub.s32 %v2862, %v2864
    %v2866 = vrot.slane %v2762, %v2865
    %2867 = vrot.lane.b32.xlu0 %v2866, 125
    %v2868 = vpop.permute.xlu0 %2867
    %2870 = vst.msk [vmem:[#allocation3 + $0x2] sm:$0x1] %vm2804, %v2868
    %v2871 = vrot.slane %v2866, 7
    %v2872 = vrot.slane %v2871, 2
    %2873 = vrot.lane.b32.xlu0 %v2872, 13
    %v2874 = vpop.permute.xlu0 %2873
    %2876 = vst.msk [vmem:[#allocation3 + $0x2] sm:$0x1] %vm2811, %v2874
    %v2877 = vcombine.high %v2866, %v2866
    %2878 = vrot.lane.b32.xlu0 %v2877, 29
    %v2879 = vpop.permute.xlu0 %2878
    %2881 = vst.msk [vmem:[#allocation3 + $0x2] sm:$0x1] %vm2817, %v2879
    %v2882 = vrot.slane %v2877, 7
    %v2883 = vrot.slane %v2882, 2
    %2884 = vrot.lane.b32.xlu0 %v2883, 45
    %v2885 = vpop.permute.xlu0 %2884
    %2887 = vst.msk [vmem:[#allocation3 + $0x2] sm:$0x1] %vm2824, %v2885
    %v2888 = vcombine.high %v2762, %v2762
    %v2890 = vunpack.c.l.s4 1983009808
    %v2891 = vunpack.c.0.s8 %v2890
    %v2892 = vlaneseq
    %v2893 = vshrl.u32 %v2892, 7
    %v2894 = vsub.s32 %v2891, %v2893
    %v2895 = vrot.slane %v2888, %v2894
    %2896 = vrot.lane.b32.xlu0 %v2895, 61
    %v2897 = vpop.permute.xlu0 %2896
    %2899 = vst.msk [vmem:[#allocation3 + $0x2] sm:$0x1] %vm2837, %v2897
    %v2900 = vrot.slane %v2895, 7
    %v2901 = vrot.slane %v2900, 2
    %2902 = vrot.lane.b32.xlu0 %v2901, 77
    %v2903 = vpop.permute.xlu0 %2902
    %2905 = vst.msk [vmem:[#allocation3 + $0x2] sm:$0x1] %vm2844, %v2903
    %v2906 = vcombine.high %v2895, %v2895
    %2907 = vrot.lane.b32.xlu0 %v2906, 93
    %v2908 = vpop.permute.xlu0 %2907
    %2910 = vst.msk [vmem:[#allocation3 + $0x2] sm:$0x1] %vm2850, %v2908
    %v2911 = vrot.slane %v2906, 7
    %v2912 = vrot.slane %v2911, 2
    %2913 = vrot.lane.b32.xlu0 %v2912, 109
    %v2914 = vpop.permute.xlu0 %2913
    %2916 = vst.msk [vmem:[#allocation3 + $0x2] sm:$0x1] %vm2857, %v2914
    %2917 = vrot.lane.b32.xlu0 %v2800, 103
    %v2918 = vpop.permute.xlu0 %2917
    %2920 = vst.msk [vmem:[#allocation3 + $0x1] sm:$0x1] %vm2804, %v2918
    %2921 = vrot.lane.b32.xlu0 %v2807, 119
    %v2922 = vpop.permute.xlu0 %2921
    %2924 = vst.msk [vmem:[#allocation3 + $0x1] sm:$0x1] %vm2811, %v2922
    %2925 = vrot.lane.b32.xlu0 %v2813, 7
    %v2926 = vpop.permute.xlu0 %2925
    %2928 = vst.msk [vmem:[#allocation3 + $0x1] sm:$0x1] %vm2817, %v2926
    %2929 = vrot.lane.b32.xlu0 %v2820, 23
    %v2930 = vpop.permute.xlu0 %2929
    %2932 = vst.msk [vmem:[#allocation3 + $0x1] sm:$0x1] %vm2824, %v2930
    %2933 = vrot.lane.b32.xlu0 %v2833, 39
    %v2934 = vpop.permute.xlu0 %2933
    %2936 = vst.msk [vmem:[#allocation3 + $0x1] sm:$0x1] %vm2837, %v2934
    %2937 = vrot.lane.b32.xlu0 %v2840, 55
    %v2938 = vpop.permute.xlu0 %2937
    %2940 = vst.msk [vmem:[#allocation3 + $0x1] sm:$0x1] %vm2844, %v2938
    %2941 = vrot.lane.b32.xlu0 %v2846, 71
    %v2942 = vpop.permute.xlu0 %2941
    %2944 = vst.msk [vmem:[#allocation3 + $0x1] sm:$0x1] %vm2850, %v2942
    %2945 = vrot.lane.b32.xlu0 %v2853, 87
    %v2946 = vpop.permute.xlu0 %2945
    %2948 = vst.msk [vmem:[#allocation3 + $0x1] sm:$0x1] %vm2857, %v2946
    %2949 = vrot.lane.b32.xlu0 %v2866, 103
    %v2950 = vpop.permute.xlu0 %2949
    %2952 = vst.msk [vmem:[#allocation3 + $0x3] sm:$0x1] %vm2804, %v2950
    %2953 = vrot.lane.b32.xlu0 %v2872, 119
    %v2954 = vpop.permute.xlu0 %2953
    %2956 = vst.msk [vmem:[#allocation3 + $0x3] sm:$0x1] %vm2811, %v2954
    %2957 = vrot.lane.b32.xlu0 %v2877, 7
    %v2958 = vpop.permute.xlu0 %2957
    %2960 = vst.msk [vmem:[#allocation3 + $0x3] sm:$0x1] %vm2817, %v2958
    %2961 = vrot.lane.b32.xlu0 %v2883, 23
    %v2962 = vpop.permute.xlu0 %2961
    %2964 = vst.msk [vmem:[#allocation3 + $0x3] sm:$0x1] %vm2824, %v2962
    %2965 = vrot.lane.b32.xlu0 %v2895, 39
    %v2966 = vpop.permute.xlu0 %2965
    %2968 = vst.msk [vmem:[#allocation3 + $0x3] sm:$0x1] %vm2837, %v2966
    %2969 = vrot.lane.b32.xlu0 %v2901, 55
    %v2970 = vpop.permute.xlu0 %2969
    %2972 = vst.msk [vmem:[#allocation3 + $0x3] sm:$0x1] %vm2844, %v2970
    %2973 = vrot.lane.b32.xlu0 %v2906, 71
    %v2974 = vpop.permute.xlu0 %2973
    %2976 = vst.msk [vmem:[#allocation3 + $0x3] sm:$0x1] %vm2850, %v2974
    %2977 = vrot.lane.b32.xlu0 %v2912, 87
    %v2978 = vpop.permute.xlu0 %2977
    %2980 = vst.msk [vmem:[#allocation3 + $0x3] sm:$0x1] %vm2857, %v2978
    %v2983 = vunpack.c.l.s4 1983009808
    %v2984 = vunpack.c.0.s8 %v2983
    %v2985 = vlaneseq
    %v2986 = vshrl.u32 %v2985, 7
    %v2987 = vsub.s32 %v2984, %v2986
    %v2988 = vrot.slane %v2791, %v2987
    %2989 = vrot.lane.b32.xlu0 %v2988, 125
    %v2990 = vpop.permute.xlu0 %2989
    %2992 = vst.msk [vmem:[#allocation3 + $0x4] sm:$0x1] %vm2804, %v2990
    %v2993 = vrot.slane %v2988, 7
    %v2994 = vrot.slane %v2993, 2
    %2995 = vrot.lane.b32.xlu0 %v2994, 13
    %v2996 = vpop.permute.xlu0 %2995
    %2998 = vst.msk [vmem:[#allocation3 + $0x4] sm:$0x1] %vm2811, %v2996
    %v2999 = vcombine.high %v2988, %v2988
    %3000 = vrot.lane.b32.xlu0 %v2999, 29
    %v3001 = vpop.permute.xlu0 %3000
    %3003 = vst.msk [vmem:[#allocation3 + $0x4] sm:$0x1] %vm2817, %v3001
    %v3004 = vrot.slane %v2999, 7
    %v3005 = vrot.slane %v3004, 2
    %3006 = vrot.lane.b32.xlu0 %v3005, 45
    %v3007 = vpop.permute.xlu0 %3006
    %3009 = vst.msk [vmem:[#allocation3 + $0x4] sm:$0x1] %vm2824, %v3007
    %v3010 = vcombine.high %v2791, %v2791
    %v3012 = vunpack.c.l.s4 1983009808
    %v3013 = vunpack.c.0.s8 %v3012
    %v3014 = vlaneseq
    %v3015 = vshrl.u32 %v3014, 7
    %v3016 = vsub.s32 %v3013, %v3015
    %v3017 = vrot.slane %v3010, %v3016
    %3018 = vrot.lane.b32.xlu0 %v3017, 61
    %v3019 = vpop.permute.xlu0 %3018
    %3021 = vst.msk [vmem:[#allocation3 + $0x4] sm:$0x1] %vm2837, %v3019
    %v3022 = vrot.slane %v3017, 7
    %v3023 = vrot.slane %v3022, 2
    %3024 = vrot.lane.b32.xlu0 %v3023, 77
    %v3025 = vpop.permute.xlu0 %3024
    %3027 = vst.msk [vmem:[#allocation3 + $0x4] sm:$0x1] %vm2844, %v3025
    %v3028 = vcombine.high %v3017, %v3017
    %3029 = vrot.lane.b32.xlu0 %v3028, 93
    %v3030 = vpop.permute.xlu0 %3029
    %3032 = vst.msk [vmem:[#allocation3 + $0x4] sm:$0x1] %vm2850, %v3030
    %v3033 = vrot.slane %v3028, 7
    %v3034 = vrot.slane %v3033, 2
    %3035 = vrot.lane.b32.xlu0 %v3034, 109
    %v3036 = vpop.permute.xlu0 %3035
    %3038 = vst.msk [vmem:[#allocation3 + $0x4] sm:$0x1] %vm2857, %v3036
    %v3041 = vunpack.c.l.s4 1983009808
    %v3042 = vunpack.c.0.s8 %v3041
    %v3043 = vlaneseq
    %v3044 = vshrl.u32 %v3043, 7
    %v3045 = vsub.s32 %v3042, %v3044
    %v3046 = vrot.slane %v2792, %v3045
    %3047 = vrot.lane.b32.xlu0 %v3046, 125
    %v3048 = vpop.permute.xlu0 %3047
    %3050 = vst.msk [vmem:[#allocation3 + $0x6] sm:$0x1] %vm2804, %v3048
    %v3051 = vrot.slane %v3046, 7
    %v3052 = vrot.slane %v3051, 2
    %3053 = vrot.lane.b32.xlu0 %v3052, 13
    %v3054 = vpop.permute.xlu0 %3053
    %3056 = vst.msk [vmem:[#allocation3 + $0x6] sm:$0x1] %vm2811, %v3054
    %v3057 = vcombine.high %v3046, %v3046
    %3058 = vrot.lane.b32.xlu0 %v3057, 29
    %v3059 = vpop.permute.xlu0 %3058
    %3061 = vst.msk [vmem:[#allocation3 + $0x6] sm:$0x1] %vm2817, %v3059
    %v3062 = vrot.slane %v3057, 7
    %v3063 = vrot.slane %v3062, 2
    %3064 = vrot.lane.b32.xlu0 %v3063, 45
    %v3065 = vpop.permute.xlu0 %3064
    %3067 = vst.msk [vmem:[#allocation3 + $0x6] sm:$0x1] %vm2824, %v3065
    %v3068 = vcombine.high %v2792, %v2792
    %v3070 = vunpack.c.l.s4 1983009808
    %v3071 = vunpack.c.0.s8 %v3070
    %v3072 = vlaneseq
    %v3073 = vshrl.u32 %v3072, 7
    %v3074 = vsub.s32 %v3071, %v3073
    %v3075 = vrot.slane %v3068, %v3074
    %3076 = vrot.lane.b32.xlu0 %v3075, 61
    %v3077 = vpop.permute.xlu0 %3076
    %3079 = vst.msk [vmem:[#allocation3 + $0x6] sm:$0x1] %vm2837, %v3077
    %v3080 = vrot.slane %v3075, 7
    %v3081 = vrot.slane %v3080, 2
    %3082 = vrot.lane.b32.xlu0 %v3081, 77
    %v3083 = vpop.permute.xlu0 %3082
    %3085 = vst.msk [vmem:[#allocation3 + $0x6] sm:$0x1] %vm2844, %v3083
    %v3086 = vcombine.high %v3075, %v3075
    %3087 = vrot.lane.b32.xlu0 %v3086, 93
    %v3088 = vpop.permute.xlu0 %3087
    %3090 = vst.msk [vmem:[#allocation3 + $0x6] sm:$0x1] %vm2850, %v3088
    %v3091 = vrot.slane %v3086, 7
    %v3092 = vrot.slane %v3091, 2
    %3093 = vrot.lane.b32.xlu0 %v3092, 109
    %v3094 = vpop.permute.xlu0 %3093
    %3096 = vst.msk [vmem:[#allocation3 + $0x6] sm:$0x1] %vm2857, %v3094
    %3097 = vrot.lane.b32.xlu0 %v2988, 103
    %v3098 = vpop.permute.xlu0 %3097
    %3100 = vst.msk [vmem:[#allocation3 + $0x5] sm:$0x1] %vm2804, %v3098
    %3101 = vrot.lane.b32.xlu0 %v2994, 119
    %v3102 = vpop.permute.xlu0 %3101
    %3104 = vst.msk [vmem:[#allocation3 + $0x5] sm:$0x1] %vm2811, %v3102
    %3105 = vrot.lane.b32.xlu0 %v2999, 7
    %v3106 = vpop.permute.xlu0 %3105
    %3108 = vst.msk [vmem:[#allocation3 + $0x5] sm:$0x1] %vm2817, %v3106
    %3109 = vrot.lane.b32.xlu0 %v3005, 23
    %v3110 = vpop.permute.xlu0 %3109
    %3112 = vst.msk [vmem:[#allocation3 + $0x5] sm:$0x1] %vm2824, %v3110
    %3113 = vrot.lane.b32.xlu0 %v3017, 39
    %v3114 = vpop.permute.xlu0 %3113
    %3116 = vst.msk [vmem:[#allocation3 + $0x5] sm:$0x1] %vm2837, %v3114
    %3117 = vrot.lane.b32.xlu0 %v3023, 55
    %v3118 = vpop.permute.xlu0 %3117
    %3120 = vst.msk [vmem:[#allocation3 + $0x5] sm:$0x1] %vm2844, %v3118
    %3121 = vrot.lane.b32.xlu0 %v3028, 71
    %v3122 = vpop.permute.xlu0 %3121
    %3124 = vst.msk [vmem:[#allocation3 + $0x5] sm:$0x1] %vm2850, %v3122
    %3125 = vrot.lane.b32.xlu0 %v3034, 87
    %v3126 = vpop.permute.xlu0 %3125
    %3128 = vst.msk [vmem:[#allocation3 + $0x5] sm:$0x1] %vm2857, %v3126
    %3129 = vrot.lane.b32.xlu0 %v3046, 103
    %v3130 = vpop.permute.xlu0 %3129
    %3132 = vst.msk [vmem:[#allocation3 + $0x7] sm:$0x1] %vm2804, %v3130
    %3133 = vrot.lane.b32.xlu0 %v3052, 119
    %v3134 = vpop.permute.xlu0 %3133
    %3136 = vst.msk [vmem:[#allocation3 + $0x7] sm:$0x1] %vm2811, %v3134
    %3137 = vrot.lane.b32.xlu0 %v3057, 7
    %v3138 = vpop.permute.xlu0 %3137
    %3140 = vst.msk [vmem:[#allocation3 + $0x7] sm:$0x1] %vm2817, %v3138
    %3141 = vrot.lane.b32.xlu0 %v3063, 23
    %v3142 = vpop.permute.xlu0 %3141
    %3144 = vst.msk [vmem:[#allocation3 + $0x7] sm:$0x1] %vm2824, %v3142
    %3145 = vrot.lane.b32.xlu0 %v3075, 39
    %v3146 = vpop.permute.xlu0 %3145
    %3148 = vst.msk [vmem:[#allocation3 + $0x7] sm:$0x1] %vm2837, %v3146
    %3149 = vrot.lane.b32.xlu0 %v3081, 55
    %v3150 = vpop.permute.xlu0 %3149
    %3152 = vst.msk [vmem:[#allocation3 + $0x7] sm:$0x1] %vm2844, %v3150
    %3153 = vrot.lane.b32.xlu0 %v3086, 71
    %v3154 = vpop.permute.xlu0 %3153
    %3156 = vst.msk [vmem:[#allocation3 + $0x7] sm:$0x1] %vm2850, %v3154
    %3157 = vrot.lane.b32.xlu0 %v3092, 87
    %v3158 = vpop.permute.xlu0 %3157
    %3160 = vst.msk [vmem:[#allocation3 + $0x7] sm:$0x1] %vm2857, %v3158
    %s3161 = smul.u32 512, 1
    %s3162 = sshll.u32 %s3161, 4
    %3163 = dma.done [#allocation5], %s3162
    %v3164 = vld [vmem:[#allocation3] sm:$0xff]
    %v3165 = vld [vmem:[#allocation4] sm:$0xff]
    %v3166 = vld [vmem:[#allocation4 + $0x8] sm:$0xff]
    %v3167 = vld [vmem:[#allocation4 + $0x10] sm:$0xff]
    %v3168 = vld [vmem:[#allocation4 + $0x18] sm:$0xff]
    %v3169 = vld [vmem:[#allocation4 + $0x20] sm:$0xff]
    %v3170 = vld [vmem:[#allocation4 + $0x28] sm:$0xff]
    %v3171 = vld [vmem:[#allocation4 + $0x30] sm:$0xff]
    %v3172 = vld [vmem:[#allocation4 + $0x38] sm:$0xff]
    %v3173 = vld [vmem:[#allocation4 + $0x40] sm:$0xff]
    %v3174 = vld [vmem:[#allocation4 + $0x48] sm:$0xff]
    %v3175 = vld [vmem:[#allocation4 + $0x50] sm:$0xff]
    %v3176 = vld [vmem:[#allocation4 + $0x58] sm:$0xff]
    %v3177 = vld [vmem:[#allocation4 + $0x60] sm:$0xff]
    %v3178 = vld [vmem:[#allocation4 + $0x68] sm:$0xff]
    %v3179 = vld [vmem:[#allocation4 + $0x70] sm:$0xff]
    %v3180 = vld [vmem:[#allocation4 + $0x78] sm:$0xff]
    %v3181 = vld [vmem:[#allocation4 + $0x80] sm:$0xff]
    %v3182 = vld [vmem:[#allocation4 + $0x88] sm:$0xff]
    %v3183 = vld [vmem:[#allocation4 + $0x90] sm:$0xff]
    %v3184 = vld [vmem:[#allocation4 + $0x98] sm:$0xff]
    %v3185 = vld [vmem:[#allocation4 + $0xa0] sm:$0xff]
    %v3186 = vld [vmem:[#allocation4 + $0xa8] sm:$0xff]
    %v3187 = vld [vmem:[#allocation4 + $0xb0] sm:$0xff]
    %v3188 = vld [vmem:[#allocation4 + $0xb8] sm:$0xff]
    %v3189 = vld [vmem:[#allocation4 + $0xc0] sm:$0xff]
    %v3190 = vld [vmem:[#allocation4 + $0xc8] sm:$0xff]
    %v3191 = vld [vmem:[#allocation4 + $0xd0] sm:$0xff]
    %v3192 = vld [vmem:[#allocation4 + $0xd8] sm:$0xff]
    %v3193 = vld [vmem:[#allocation4 + $0xe0] sm:$0xff]
    %v3194 = vld [vmem:[#allocation4 + $0xe8] sm:$0xff]
    %v3195 = vld [vmem:[#allocation4 + $0xf0] sm:$0xff]
    %v3196 = vld [vmem:[#allocation4 + $0xf8] sm:$0xff]
    %v3197 = vld [vmem:[#allocation4 + $0x100] sm:$0xff]
    %v3198 = vld [vmem:[#allocation4 + $0x108] sm:$0xff]
    %v3199 = vld [vmem:[#allocation4 + $0x110] sm:$0xff]
    %v3200 = vld [vmem:[#allocation4 + $0x118] sm:$0xff]
    %v3201 = vld [vmem:[#allocation4 + $0x120] sm:$0xff]
    %v3202 = vld [vmem:[#allocation4 + $0x128] sm:$0xff]
    %v3203 = vld [vmem:[#allocation4 + $0x130] sm:$0xff]
    %v3204 = vld [vmem:[#allocation4 + $0x138] sm:$0xff]
    %v3205 = vld [vmem:[#allocation4 + $0x140] sm:$0xff]
    %v3206 = vld [vmem:[#allocation4 + $0x148] sm:$0xff]
    %v3207 = vld [vmem:[#allocation4 + $0x150] sm:$0xff]
    %v3208 = vld [vmem:[#allocation4 + $0x158] sm:$0xff]
    %v3209 = vld [vmem:[#allocation4 + $0x160] sm:$0xff]
    %v3210 = vld [vmem:[#allocation4 + $0x168] sm:$0xff]
    %v3211 = vld [vmem:[#allocation4 + $0x170] sm:$0xff]
    %v3212 = vld [vmem:[#allocation4 + $0x178] sm:$0xff]
    %v3213 = vld [vmem:[#allocation4 + $0x180] sm:$0xff]
    %v3214 = vld [vmem:[#allocation4 + $0x188] sm:$0xff]
    %v3215 = vld [vmem:[#allocation4 + $0x190] sm:$0xff]
    %v3216 = vld [vmem:[#allocation4 + $0x198] sm:$0xff]
    %v3217 = vld [vmem:[#allocation4 + $0x1a0] sm:$0xff]
    %v3218 = vld [vmem:[#allocation4 + $0x1a8] sm:$0xff]
    %v3219 = vld [vmem:[#allocation4 + $0x1b0] sm:$0xff]
    %v3220 = vld [vmem:[#allocation4 + $0x1b8] sm:$0xff]
    %v3221 = vld [vmem:[#allocation4 + $0x1c0] sm:$0xff]
    %v3222 = vld [vmem:[#allocation4 + $0x1c8] sm:$0xff]
    %v3223 = vld [vmem:[#allocation4 + $0x1d0] sm:$0xff]
    %v3224 = vld [vmem:[#allocation4 + $0x1d8] sm:$0xff]
    %v3225 = vld [vmem:[#allocation4 + $0x1e0] sm:$0xff]
    %v3226 = vld [vmem:[#allocation4 + $0x1e8] sm:$0xff]
    %v3227 = vld [vmem:[#allocation4 + $0x1f0] sm:$0xff]
    %v3228 = vld [vmem:[#allocation4 + $0x1f8] sm:$0xff]
    %v3229 = vld [vmem:[%s8] sm:$0x1]
    %v3231 = vlaneseq
    %v3232 = vshrl.u32 %v3231, 7
    %v3233 = vsub.s32 0, %v3232
    %v3234 = vrot.slane %v3229, %v3233
    %v3237 = vcombine.high %v3164, %v3164
    %v3239 = vunpack.c.l.s4 1983009808
    %v3240 = vunpack.c.0.s8 %v3239
    %v3241 = vlaneseq
    %v3242 = vshrl.u32 %v3241, 7
    %v3243 = vsub.s32 %v3240, %v3242
    %v3244 = vrot.slane %v3164, %v3243
    %v3246 = vunpack.c.l.s4 1983009808
    %v3247 = vunpack.c.0.s8 %v3246
    %v3248 = vlaneseq
    %v3249 = vshrl.u32 %v3248, 7
    %v3250 = vsub.s32 %v3247, %v3249
    %v3251 = vrot.slane %v3237, %v3250
    %v3252 = vcombine.high %v3244, %v3244
    %v3253 = vcombine.high %v3251, %v3251
    %3258 = vmatprep.subr.mxu0 0.0
    %3259 = vmatpush1.msra.mxu0 %v3165
    %3260 = vmatprep.subr.mxu0 0.0
    %3261 = vmatpush1.msra.mxu0 %v3166
    %3262 = vmatprep.subr.mxu0 0.0
    %3263 = vmatpush1.msra.mxu0 %v3167
    %3264 = vmatprep.subr.mxu0 0.0
    %3265 = vmatpush1.msra.mxu0 %v3168
    %3266 = vmatprep.subr.mxu0 0.0
    %3267 = vmatpush1.msra.mxu0 %v3169
    %3268 = vmatprep.subr.mxu0 0.0
    %3269 = vmatpush1.msra.mxu0 %v3170
    %3270 = vmatprep.subr.mxu0 0.0
    %3271 = vmatpush1.msra.mxu0 %v3171
    %3272 = vmatprep.subr.mxu0 0.0
    %3273 = vmatpush1.msra.mxu0 %v3172
    %3274 = vmatprep.subr.mxu0 0.0
    %3275 = vmatpush1.msra.mxu0 %v3173
    %3276 = vmatprep.subr.mxu0 0.0
    %3277 = vmatpush1.msra.mxu0 %v3174
    %3278 = vmatprep.subr.mxu0 0.0
    %3279 = vmatpush1.msra.mxu0 %v3175
    %3280 = vmatprep.subr.mxu0 0.0
    %3281 = vmatpush1.msra.mxu0 %v3176
    %3282 = vmatprep.subr.mxu0 0.0
    %3283 = vmatpush1.msra.mxu0 %v3177
    %3284 = vmatprep.subr.mxu0 0.0
    %3285 = vmatpush1.msra.mxu0 %v3178
    %3286 = vmatprep.subr.mxu0 0.0
    %3287 = vmatpush1.msra.mxu0 %v3179
    %3288 = vmatprep.subr.mxu0 0.0
    %3289 = vmatpush1.msra.mxu0 %v3180
    %3290 = vmatprep.subr.mxu0 0.0
    %3291 = vmatpush1.msra.mxu0 %v3181
    %3292 = vmatprep.subr.mxu0 0.0
    %3293 = vmatpush1.msra.mxu0 %v3182
    %3294 = vmatprep.subr.mxu0 0.0
    %3295 = vmatpush1.msra.mxu0 %v3183
    %3296 = vmatprep.subr.mxu0 0.0
    %3297 = vmatpush1.msra.mxu0 %v3184
    %3298 = vmatprep.subr.mxu0 0.0
    %3299 = vmatpush1.msra.mxu0 %v3185
    %3300 = vmatprep.subr.mxu0 0.0
    %3301 = vmatpush1.msra.mxu0 %v3186
    %3302 = vmatprep.subr.mxu0 0.0
    %3303 = vmatpush1.msra.mxu0 %v3187
    %3304 = vmatprep.subr.mxu0 0.0
    %3305 = vmatpush1.msra.mxu0 %v3188
    %3306 = vmatprep.subr.mxu0 0.0
    %3307 = vmatpush1.msra.mxu0 %v3189
    %3308 = vmatprep.subr.mxu0 0.0
    %3309 = vmatpush1.msra.mxu0 %v3190
    %3310 = vmatprep.subr.mxu0 0.0
    %3311 = vmatpush1.msra.mxu0 %v3191
    %3312 = vmatprep.subr.mxu0 0.0
    %3313 = vmatpush1.msra.mxu0 %v3192
    %3314 = vmatprep.subr.mxu0 0.0
    %3315 = vmatpush1.msra.mxu0 %v3193
    %3316 = vmatprep.subr.mxu0 0.0
    %3317 = vmatpush1.msra.mxu0 %v3194
    %3318 = vmatprep.subr.mxu0 0.0
    %3319 = vmatpush1.msra.mxu0 %v3195
    %3320 = vmatprep.subr.mxu0 0.0
    %3321 = vmatpush1.msra.mxu0 %v3196
    %3322 = vmatprep.mubr.f32.mxu0 %v3252
    %3323 = vmatmul.mubr.f32.gmra.mrb[0].mxu0 %v3244
    %v3324 = vpop.f32.mrb[0].mxu0
    %v3325 = vadd.f32 %v3234, %v3324
    %v3326 = vpop.f32.mrb[0].mxu0
    %3327 = vdwg.mxu0
    %3328 = vmatprep.subr.mxu0 0.0
    %3329 = vmatpush1.msra.mxu0 %v3197
    %3330 = vmatprep.subr.mxu0 0.0
    %3331 = vmatpush1.msra.mxu0 %v3198
    %3332 = vmatprep.subr.mxu0 0.0
    %3333 = vmatpush1.msra.mxu0 %v3199
    %3334 = vmatprep.subr.mxu0 0.0
    %3335 = vmatpush1.msra.mxu0 %v3200
    %3336 = vmatprep.subr.mxu0 0.0
    %3337 = vmatpush1.msra.mxu0 %v3201
    %3338 = vmatprep.subr.mxu0 0.0
    %3339 = vmatpush1.msra.mxu0 %v3202
    %3340 = vmatprep.subr.mxu0 0.0
    %3341 = vmatpush1.msra.mxu0 %v3203
    %3342 = vmatprep.subr.mxu0 0.0
    %3343 = vmatpush1.msra.mxu0 %v3204
    %3344 = vmatprep.subr.mxu0 0.0
    %3345 = vmatpush1.msra.mxu0 %v3205
    %3346 = vmatprep.subr.mxu0 0.0
    %3347 = vmatpush1.msra.mxu0 %v3206
    %3348 = vmatprep.subr.mxu0 0.0
    %3349 = vmatpush1.msra.mxu0 %v3207
    %3350 = vmatprep.subr.mxu0 0.0
    %3351 = vmatpush1.msra.mxu0 %v3208
    %3352 = vmatprep.subr.mxu0 0.0
    %3353 = vmatpush1.msra.mxu0 %v3209
    %3354 = vmatprep.subr.mxu0 0.0
    %3355 = vmatpush1.msra.mxu0 %v3210
    %3356 = vmatprep.subr.mxu0 0.0
    %3357 = vmatpush1.msra.mxu0 %v3211
    %3358 = vmatprep.subr.mxu0 0.0
    %3359 = vmatpush1.msra.mxu0 %v3212
    %3360 = vmatprep.subr.mxu0 0.0
    %3361 = vmatpush1.msra.mxu0 %v3213
    %3362 = vmatprep.subr.mxu0 0.0
    %3363 = vmatpush1.msra.mxu0 %v3214
    %3364 = vmatprep.subr.mxu0 0.0
    %3365 = vmatpush1.msra.mxu0 %v3215
    %3366 = vmatprep.subr.mxu0 0.0
    %3367 = vmatpush1.msra.mxu0 %v3216
    %3368 = vmatprep.subr.mxu0 0.0
    %3369 = vmatpush1.msra.mxu0 %v3217
    %3370 = vmatprep.subr.mxu0 0.0
    %3371 = vmatpush1.msra.mxu0 %v3218
    %3372 = vmatprep.subr.mxu0 0.0
    %3373 = vmatpush1.msra.mxu0 %v3219
    %3374 = vmatprep.subr.mxu0 0.0
    %3375 = vmatpush1.msra.mxu0 %v3220
    %3376 = vmatprep.subr.mxu0 0.0
    %3377 = vmatpush1.msra.mxu0 %v3221
    %3378 = vmatprep.subr.mxu0 0.0
    %3379 = vmatpush1.msra.mxu0 %v3222
    %3380 = vmatprep.subr.mxu0 0.0
    %3381 = vmatpush1.msra.mxu0 %v3223
    %3382 = vmatprep.subr.mxu0 0.0
    %3383 = vmatpush1.msra.mxu0 %v3224
    %3384 = vmatprep.subr.mxu0 0.0
    %3385 = vmatpush1.msra.mxu0 %v3225
    %3386 = vmatprep.subr.mxu0 0.0
    %3387 = vmatpush1.msra.mxu0 %v3226
    %3388 = vmatprep.subr.mxu0 0.0
    %3389 = vmatpush1.msra.mxu0 %v3227
    %3390 = vmatprep.subr.mxu0 0.0
    %3391 = vmatpush1.msra.mxu0 %v3228
    %3392 = vmatprep.mubr.f32.mxu0 %v3253
    %3393 = vmatmul.mubr.f32.gmra.mrb[0].mxu0 %v3251
    %v3394 = vpop.f32.mrb[0].mxu0
    %v3395 = vadd.f32 %v3325, %v3394
    %v3396 = vpop.f32.mrb[0].mxu0
    %3397 = vdwg.mxu0
    %v3398 = vsub.f32 0.0, %v3395
    %v3399 = vmul.f32 %v3398, 1.442695
    %v3400 = vpow.pop %v3399
    %v3401 = vadd.f32 %v3400, 1.0
    %v3402 = vrcp.pop %v3401
    %vm3403 = vcmask 254976
    %3404 = vst.msk [vmem:[#allocation14] sm:$0x3] %vm3403, %v3402
    // Predicated region
    $region88: #{task2_encoder_forward.1} parent=1 // pred_check
      _
    $region89: #{task2_encoder_forward.1} parent=1 // pred_check_branch
      %3406 = sbr.rel (0) target = $region91
    $region90: #{task2_encoder_forward.1} parent=1 // pred_region
      %s3408 = ssub.s32 32, 32
      %3409 = vsyncadd [#allocation7], %s3408
      %s3411 = sshll.u32 [#allocation14], 4
      %s3412 = int_to_ptr.vmem [resolvable:$true] %s3411
      %3414 = dma.vmem_to_hbm [thread:$0]  %s3412, 32, %s10, [#allocation7]
    $region91: #{task2_encoder_forward.1} parent=1 // pred_fallthru
      _
    // Predicated region
    $region92: #{task2_encoder_forward.1} parent=1 // pred_check
      _
    $region93: #{task2_encoder_forward.1} parent=1 // pred_check_branch
      %3416 = sbr.rel (0) target = $region95
    $region94: #{task2_encoder_forward.1} parent=1 // pred_region
      %3417 = dma.done [#allocation7], 32
    $region95: #{task2_encoder_forward.1} parent=1 // pred_fallthru
      _
    %3418 = vsyncpa [#allocation7], 1
    %3419 = vsyncpa [#allocation8], 1
    %3420 = vsyncpa [#allocation10], 1
    %3421 = vsyncpa [#allocation13], 1
  %3422 = vsyncmov [#allocation5]
  %s3423 = vpop.sfrf %3422
  %p3424 = scmp.eq.s32.totalorder %s3423, 0
  %p3425 = pneg %p3424
  %3427 = shalt.err (%p3425)

</llo_original>
